<compile_context>
chip_gen: v6e
topology: v6e:2x2x1
jax: 0.10.0
libtpu: 0.0.40
codegen_flags: <defaults>
</compile_context>

<pallas_src>
import numpy as np
import jax
import jax.numpy as jnp
from jax.experimental import pallas as pl
from jax.experimental.pallas import tpu as pltpu


# ---------------------------------------------------------------------------
# Fused kernel: normalize + stem 1x1 conv + four 2x2/stride-2 convs (one tile).
# ---------------------------------------------------------------------------
def _fused_fpn_kernel(x_ref, scale_ref, shift_ref, stem_w_ref, stem_b_ref,
                      dw0_ref, db0_ref, dw1_ref, db1_ref,
                      dw2_ref, db2_ref, dw3_ref, db3_ref,
                      norm_ref, f0_ref, f1_ref, f2_ref, f3_ref, f4_ref):
    x = x_ref[...]

    # img_list.tensors: per-channel normalize as a single f32 FMA (no divide).
    norm_ref[...] = (x * scale_ref[...] + shift_ref[...]).astype(norm_ref.dtype)

    # Stem 1x1 conv == matmul over pixels.  The normalize affine is folded into
    # (stem_w', stem_b') so the MXU dot consumes raw pixels directly (no serial
    # VPU-FMA -> MXU dependency).  bf16 operands, f32 accumulation.
    y = jnp.dot(x.astype(jnp.bfloat16), stem_w_ref[...],
                preferred_element_type=jnp.float32) + stem_b_ref[...]
    f0_ref[...] = y.astype(f0_ref.dtype)

    # 2x2 stride-2 convs.  The wrapper's pixel ordering puts the four taps of every
    # 2x2 window into four contiguous, sublane-aligned row blocks of this tile, so
    # each level is ONE (rows/4, 4*oc) @ (4*oc, oc) MXU dot after a lane-axis
    # concatenation of the four blocks (better MXU lane fill, 4x fewer vmatmul pushes).
    levels = ((dw0_ref, db0_ref, f1_ref), (dw1_ref, db1_ref, f2_ref),
              (dw2_ref, db2_ref, f3_ref), (dw3_ref, db3_ref, f4_ref))
    for w_ref, b_ref, out_ref in levels:
        r4 = y.shape[0] // 4
        yb = y.astype(jnp.bfloat16)
        y4 = jnp.concatenate(
            [yb[0:r4], yb[r4:2 * r4], yb[2 * r4:3 * r4], yb[3 * r4:4 * r4]], axis=1)
        y = jnp.dot(y4, w_ref[...], preferred_element_type=jnp.float32) + b_ref[...]
        out_ref[...] = y.astype(out_ref.dtype)
        # TODO(synk): repack to a lane-dense (rows/8, 128) layout before the store to
        # avoid masked vst on the 16-of-128-lane outputs at large scales.


# ---------------------------------------------------------------------------
# Tile-size selection (static, host-side).
# ---------------------------------------------------------------------------
def _choose_groups_per_tile(num_groups, n_digits, max_tile_rows=2048):
    """Largest multiple-of-8 divisor of num_groups whose level-0 tile fits the row
    budget; single tile for tiny inputs.  max_tile_rows is the VMEM knob: raise it on
    v5e/v6e (128 MiB VMEM), keep it modest on v7x (64 MiB per TensorCore)."""
    cap = max(8, max_tile_rows // (4 ** n_digits))
    for gt in range(min(cap, num_groups), 0, -1):
        if gt % 8 == 0 and num_groups % gt == 0:
            return gt
    return num_groups


# ---------------------------------------------------------------------------
# FeatureExtractor
# ---------------------------------------------------------------------------
class FeatureExtractor:
    NUM_LEVELS = 5

    def __init__(self, key, in_channels=3, out_channels=16):
        self.in_channels = in_channels
        self.out_channels = out_channels

        # transform parameters (ImageNet normalization, GeneralizedRCNNTransform style)
        self.image_mean = jnp.array([[0.485, 0.456, 0.406]], dtype=jnp.float32)
        self.image_std = jnp.array([[0.229, 0.224, 0.225]], dtype=jnp.float32)
        # affine form: x_norm = x * scale + shift (multiply, not divide)
        self.norm_scale = 1.0 / self.image_std
        self.norm_shift = -self.image_mean / self.image_std
        # TODO(synk): torchvision's transform also resizes/pads to a common dynamic
        # size; inputs here are assumed same-sized and divisible by 2**(NUM_LEVELS-1).

        keys = jax.random.split(key, 2 * self.NUM_LEVELS)
        # stem: 1x1 conv (in_channels -> out_channels); f32 master copies (reference).
        self.stem_w = jax.random.normal(
            keys[0], (in_channels, out_channels), jnp.float32) * 0.1
        self.stem_b = jax.random.normal(keys[1], (1, out_channels), jnp.float32) * 0.01
        # downsample convs: 2x2 stride-2 (out_channels -> out_channels); the 4*oc rows
        # are flattened in (kh, kw, c) order.  NOTE: torchvision Conv2d weights are
        # (O, C, kh, kw); loading real weights requires permuting into this layout.
        self.down_w, self.down_b = [], []
        for lvl in range(1, self.NUM_LEVELS):
            self.down_w.append(jax.random.normal(
                keys[2 * lvl], (4 * out_channels, out_channels), jnp.float32) * 0.05)
            self.down_b.append(jax.random.normal(
                keys[2 * lvl + 1], (1, out_channels), jnp.float32) * 0.01)

        # Kernel-side parameter copies: normalize folded into the stem, bf16 MXU
        # operands (biases stay f32, added to the f32 accumulator).
        self._k_stem_w = (self.norm_scale.reshape(-1, 1) * self.stem_w).astype(jnp.bfloat16)
        self._k_stem_b = self.norm_shift @ self.stem_w + self.stem_b
        self._k_down_w = [w.astype(jnp.bfloat16) for w in self.down_w]

        self._forward = jax.jit(self._forward_impl)

    # ---- packing: static space-to-depth (reshape/transpose only, no gathers) ------
    def _pack_input(self, x_nchw, groups_per_tile):
        N, C, H, W = x_nchw.shape
        d = self.NUM_LEVELS - 1
        ch, cw = H >> d, W >> d
        G = N * ch * cw
        x = jnp.transpose(x_nchw, (0, 2, 3, 1))                        # NHWC
        x = x.reshape((N, ch) + (2,) * d + (cw,) + (2,) * d + (C,))
        # axes: 0:N 1:ch  2..1+d: i-bits (msb..lsb)  2+d:cw  3+d..2+2d: j-bits  3+2d:C
        fine = []
        for m in range(d):                                  # m = 0 is the finest digit
            fine += [2 + (d - 1 - m), 3 + d + (d - 1 - m)]
        x = jnp.transpose(x, (0, 1, 2 + d) + tuple(fine) + (3 + 2 * d,))
        # rows ordered (coarse patch group | fine quad digits); regroup so each tile of
        # groups_per_tile coarse patches is contiguous with the fine digits outermost.
        x = x.reshape(G // groups_per_tile, groups_per_tile, 4 ** d, C)
        x = jnp.transpose(x, (0, 2, 1, 3))
        return x.reshape(G * 4 ** d, C)

    def _unpack_level(self, f, level, N, H, W, groups_per_tile):
        d = self.NUM_LEVELS - 1
        ch, cw = H >> d, W >> d
        G = N * ch * cw
        r = d - level                                       # remaining quad digits
        oc = f.shape[-1]
        f = f.reshape(G // groups_per_tile, 4 ** r, groups_per_tile, oc)
        f = jnp.transpose(f, (0, 2, 1, 3))
        f = f.reshape((N, ch, cw) + (2, 2) * r + (oc,))
        i_axes = [3 + 2 * m for m in range(r - 1, -1, -1)]
        j_axes = [4 + 2 * m for m in range(r - 1, -1, -1)]
        f = jnp.transpose(f, (0, 1, *i_axes, 2, *j_axes, 3 + 2 * r))
        f = f.reshape(N, H >> level, W >> level, oc)
        return jnp.transpose(f, (0, 3, 1, 2))               # NCHW

    # ---- single fused, M-tiled pallas_call ----------------------------------------
    def _fused_forward(self, x_perm, groups_per_tile):
        M0, C = x_perm.shape
        oc = self.out_channels
        d = self.NUM_LEVELS - 1
        tile_rows = groups_per_tile * 4 ** d
        n_tiles = M0 // tile_rows

        out_shape = [jax.ShapeDtypeStruct((M0, C), jnp.float32)]
        out_shape += [jax.ShapeDtypeStruct((M0 // 4 ** l, oc), jnp.float32)
                      for l in range(self.NUM_LEVELS)]

        def tiled(rows, cols):
            return pl.BlockSpec((rows, cols), lambda i: (i, 0))

        def resident(arr):                                  # stays VMEM-resident
            return pl.BlockSpec(arr.shape, lambda i: (0,) * arr.ndim)

        inputs = [x_perm, self.norm_scale, self.norm_shift,
                  self._k_stem_w, self._k_stem_b]
        for lvl in range(self.NUM_LEVELS - 1):
            inputs += [self._k_down_w[lvl], self.down_b[lvl]]
        in_specs = [tiled(tile_rows, C)] + [resident(a) for a in inputs[1:]]

        out_specs = [tiled(tile_rows, C)]
        out_specs += [tiled(tile_rows // 4 ** l, oc) for l in range(self.NUM_LEVELS)]

        # TODO(synk): if input DMA is exposed on v7x, raise x_perm pipelining depth
        # with pipeline_mode=pl.Buffered(3).
        return pl.pallas_call(
            _fused_fpn_kernel,
            out_shape=out_shape,
            grid=(n_tiles,),
            in_specs=in_specs,
            out_specs=out_specs,
            input_output_aliases={0: 0},   # x_perm buffer reused for img_list.tensors
            compiler_params=pltpu.CompilerParams(
                dimension_semantics=("parallel",),
                vmem_limit_bytes=32 * 1024 * 1024),
        )(*inputs)

    def _forward_impl(self, x):
        N, C, H, W = x.shape
        d = self.NUM_LEVELS - 1
        ch, cw = H >> d, W >> d
        G = N * ch * cw
        gpt = _choose_groups_per_tile(G, d)
        x_perm = self._pack_input(x, gpt)
        outs = self._fused_forward(x_perm, gpt)
        tensors = self._unpack_level(outs[0], 0, N, H, W, gpt)
        feats = [self._unpack_level(f, lvl, N, H, W, gpt)
                 for lvl, f in enumerate(outs[1:])]
        return tensors, feats

    # ---- forward --------------------------------------------------------------
    def __call__(self, images):
        # images: list of (C, H, W) arrays (PyTorch CHW convention), same size.
        # NOTE: PyTorch uses int64 for size tensors; int32 used here (TPU-friendly).
        original_image_sizes = jnp.array(
            [list(img.shape[-2:]) for img in images], dtype=jnp.int32)
        x = jnp.stack(images)                               # (N, C, H, W)
        N, C, H, W = x.shape
        div = 2 ** (self.NUM_LEVELS - 1)
        assert H % div == 0 and W % div == 0, "H, W must be divisible by 16"
        tensors, feats = self._forward(x)
        image_sizes = jnp.array([[H, W]] * N, dtype=jnp.int32)
        return (tensors, image_sizes, original_image_sizes,
                feats[0], feats[1], feats[2], feats[3], feats[4])


# ---------------------------------------------------------------------------
# Pure-JAX f32 reference (sequentially chained pyramid) for validation.
# ---------------------------------------------------------------------------
def _reference_forward(model, images):
    x = jnp.stack(images)                                   # (N, C, H, W)
    N, C, H, W = x.shape
    xn = (x - model.image_mean.reshape(1, C, 1, 1)) / model.image_std.reshape(1, C, 1, 1)
    cur = jnp.einsum("nhwc,co->nhwo", jnp.transpose(xn, (0, 2, 3, 1)), model.stem_w,
                     precision=jax.lax.Precision.HIGHEST) + model.stem_b[0]
    feats = [cur]
    for lvl in range(1, model.NUM_LEVELS):
        n, h, w, c = cur.shape
        p = cur.reshape(n, h // 2, 2, w // 2, 2, c)
        p = jnp.transpose(p, (0, 1, 3, 2, 4, 5)).reshape(n * (h // 2) * (w // 2), 4 * c)
        y = jnp.dot(p, model.down_w[lvl - 1],
                    precision=jax.lax.Precision.HIGHEST) + model.down_b[lvl - 1]
        cur = y.reshape(n, h // 2, w // 2, model.out_channels)
        feats.append(cur)
    return xn, [jnp.transpose(f, (0, 3, 1, 2)) for f in feats]


# ---------------------------------------------------------------------------
if __name__ == "__main__":
    key = jax.random.PRNGKey(0)
    k_model, k_img = jax.random.split(key)

    model = FeatureExtractor(k_model, in_channels=3, out_channels=16)

    # two images, CHW, 3 x 64 x 64 (5 pyramid levels: 64 -> 4; 4 row-tiles in the grid)
    imgs = jax.random.uniform(k_img, (2, 3, 64, 64), jnp.float32)
    images = [imgs[0], imgs[1]]

    outputs = model(images)
    outputs = jax.tree_util.tree_map(jax.block_until_ready, outputs)

    tensors, image_sizes, orig_sizes, f0, f1, f2, f3, f4 = outputs
    assert tensors.shape == (2, 3, 64, 64)
    assert image_sizes.shape == (2, 2) and orig_sizes.shape == (2, 2)
    assert f0.shape == (2, 16, 64, 64)
    assert f1.shape == (2, 16, 32, 32)
    assert f2.shape == (2, 16, 16, 16)
    assert f3.shape == (2, 16, 8, 8)
    assert f4.shape == (2, 16, 4, 4)

    # numerical check against the pure-JAX f32 reference
    ref_tensors, ref_feats = _reference_forward(model, images)
    np.testing.assert_allclose(np.asarray(tensors), np.asarray(ref_tensors),
                               rtol=1e-4, atol=1e-4)
    for got, want in zip((f0, f1, f2, f3, f4), ref_feats):
        np.testing.assert_allclose(np.asarray(got), np.asarray(want),
                                   rtol=2e-2, atol=2e-2)

    print("KERNEL_OK")
</pallas_src>

<mosaic_0001>
module attributes {stable_mosaic.version = 11 : i64} {
  func.func @_fused_fpn_kernel(%arg0: i32, %arg1: memref<2048x3xf32, #tpu.memory_space<vmem>>, %arg2: memref<1x3xf32, #tpu.memory_space<vmem>>, %arg3: memref<1x3xf32, #tpu.memory_space<vmem>>, %arg4: memref<3x16xbf16, #tpu.memory_space<vmem>>, %arg5: memref<1x16xf32, #tpu.memory_space<vmem>>, %arg6: memref<64x16xbf16, #tpu.memory_space<vmem>>, %arg7: memref<1x16xf32, #tpu.memory_space<vmem>>, %arg8: memref<64x16xbf16, #tpu.memory_space<vmem>>, %arg9: memref<1x16xf32, #tpu.memory_space<vmem>>, %arg10: memref<64x16xbf16, #tpu.memory_space<vmem>>, %arg11: memref<1x16xf32, #tpu.memory_space<vmem>>, %arg12: memref<64x16xbf16, #tpu.memory_space<vmem>>, %arg13: memref<1x16xf32, #tpu.memory_space<vmem>>, %arg14: memref<2048x3xf32, #tpu.memory_space<vmem>>, %arg15: memref<2048x16xf32, #tpu.memory_space<vmem>>, %arg16: memref<512x16xf32, #tpu.memory_space<vmem>>, %arg17: memref<128x16xf32, #tpu.memory_space<vmem>>, %arg18: memref<32x16xf32, #tpu.memory_space<vmem>>, %arg19: memref<8x16xf32, #tpu.memory_space<vmem>>) attributes {dimension_semantics = [#tpu.dimension_semantics<parallel>], iteration_bounds = array<i64: 4>, scalar_prefetch = 0 : i64, scratch_operands = 0 : i64, tpu.core_type = #tpu.core_type<tc>, window_params = [{transform_indices = @transform_0, window_bounds = array<i64: 2048, 3>}, {pipeline_mode = #tpu.pipeline_mode<synchronous>, transform_indices = @transform_1, window_bounds = array<i64: 1, 3>}, {pipeline_mode = #tpu.pipeline_mode<synchronous>, transform_indices = @transform_2, window_bounds = array<i64: 1, 3>}, {pipeline_mode = #tpu.pipeline_mode<synchronous>, transform_indices = @transform_3, window_bounds = array<i64: 3, 16>}, {pipeline_mode = #tpu.pipeline_mode<synchronous>, transform_indices = @transform_4, window_bounds = array<i64: 1, 16>}, {pipeline_mode = #tpu.pipeline_mode<synchronous>, transform_indices = @transform_5, window_bounds = array<i64: 64, 16>}, {pipeline_mode = #tpu.pipeline_mode<synchronous>, transform_indices = @transform_6, window_bounds = array<i64: 1, 16>}, {pipeline_mode = #tpu.pipeline_mode<synchronous>, transform_indices = @transform_7, window_bounds = array<i64: 64, 16>}, {pipeline_mode = #tpu.pipeline_mode<synchronous>, transform_indices = @transform_8, window_bounds = array<i64: 1, 16>}, {pipeline_mode = #tpu.pipeline_mode<synchronous>, transform_indices = @transform_9, window_bounds = array<i64: 64, 16>}, {pipeline_mode = #tpu.pipeline_mode<synchronous>, transform_indices = @transform_10, window_bounds = array<i64: 1, 16>}, {pipeline_mode = #tpu.pipeline_mode<synchronous>, transform_indices = @transform_11, window_bounds = array<i64: 64, 16>}, {pipeline_mode = #tpu.pipeline_mode<synchronous>, transform_indices = @transform_12, window_bounds = array<i64: 1, 16>}, {transform_indices = @transform_13, window_bounds = array<i64: 2048, 3>}, {transform_indices = @transform_14, window_bounds = array<i64: 2048, 16>}, {transform_indices = @transform_15, window_bounds = array<i64: 512, 16>}, {transform_indices = @transform_16, window_bounds = array<i64: 128, 16>}, {transform_indices = @transform_17, window_bounds = array<i64: 32, 16>}, {transform_indices = @transform_18, window_bounds = array<i64: 8, 16>}]} {
    %c0 = arith.constant 0 : index
    %c0_0 = arith.constant 0 : index
    %0 = vector.load %arg1[%c0, %c0_0] : memref<2048x3xf32, #tpu.memory_space<vmem>>, vector<2048x3xf32>
    %c0_1 = arith.constant 0 : index
    %c0_2 = arith.constant 0 : index
    %1 = vector.load %arg2[%c0_1, %c0_2] : memref<1x3xf32, #tpu.memory_space<vmem>>, vector<1x3xf32>
    %2 = vector.broadcast %1 : vector<1x3xf32> to vector<2048x3xf32>
    %3 = arith.mulf %0, %2 : vector<2048x3xf32>
    %c0_3 = arith.constant 0 : index
    %c0_4 = arith.constant 0 : index
    %4 = vector.load %arg3[%c0_3, %c0_4] : memref<1x3xf32, #tpu.memory_space<vmem>>, vector<1x3xf32>
    %5 = vector.broadcast %4 : vector<1x3xf32> to vector<2048x3xf32>
    %6 = arith.addf %3, %5 : vector<2048x3xf32>
    %c0_5 = arith.constant 0 : index
    %c0_6 = arith.constant 0 : index
    %7 = vector.load %arg14[%c0_5, %c0_6] : memref<2048x3xf32, #tpu.memory_space<vmem>>, vector<2048x3xf32>
    tpu.vector_store %arg14[%c0_5, %c0_6], %6 {strides = array<i32>} : memref<2048x3xf32, #tpu.memory_space<vmem>>, vector<2048x3xf32>,
    %8 = arith.truncf %0 : vector<2048x3xf32> to vector<2048x3xbf16>
    %c0_7 = arith.constant 0 : index
    %c0_8 = arith.constant 0 : index
    %9 = vector.load %arg4[%c0_7, %c0_8] : memref<3x16xbf16, #tpu.memory_space<vmem>>, vector<3x16xbf16>
    %cst = arith.constant dense<0.000000e+00> : vector<2048x16xf32>
    %10 = tpu.matmul %8, %9, %cst {dimension_numbers = #tpu.dot_dimension_numbers<[1], [0], [0], [1], [0, 0, 1, 1], [], []>} : vector<2048x3xbf16>, vector<3x16xbf16>, vector<2048x16xf32> -> vector<2048x16xf32>
    %c0_9 = arith.constant 0 : index
    %c0_10 = arith.constant 0 : index
    %11 = vector.load %arg5[%c0_9, %c0_10] : memref<1x16xf32, #tpu.memory_space<vmem>>, vector<1x16xf32>
    %12 = vector.broadcast %11 : vector<1x16xf32> to vector<2048x16xf32>
    %13 = arith.addf %10, %12 : vector<2048x16xf32>
    %c0_11 = arith.constant 0 : index
    %c0_12 = arith.constant 0 : index
    %14 = vector.load %arg15[%c0_11, %c0_12] : memref<2048x16xf32, #tpu.memory_space<vmem>>, vector<2048x16xf32>
    tpu.vector_store %arg15[%c0_11, %c0_12], %13 {strides = array<i32>} : memref<2048x16xf32, #tpu.memory_space<vmem>>, vector<2048x16xf32>,
    %15 = arith.truncf %13 : vector<2048x16xf32> to vector<2048x16xbf16>
    %16 = vector.extract_strided_slice %15 {offsets = [0, 0], sizes = [512, 16], strides = [1, 1]} : vector<2048x16xbf16> to vector<512x16xbf16>
    %17 = vector.extract_strided_slice %15 {offsets = [512, 0], sizes = [512, 16], strides = [1, 1]} : vector<2048x16xbf16> to vector<512x16xbf16>
    %18 = vector.extract_strided_slice %15 {offsets = [1024, 0], sizes = [512, 16], strides = [1, 1]} : vector<2048x16xbf16> to vector<512x16xbf16>
    %19 = vector.extract_strided_slice %15 {offsets = [1536, 0], sizes = [512, 16], strides = [1, 1]} : vector<2048x16xbf16> to vector<512x16xbf16>
    %20 = tpu.concatenate %16, %17, %18, %19 in 1 : vector<512x16xbf16>, vector<512x16xbf16>, vector<512x16xbf16>, vector<512x16xbf16> -> vector<512x64xbf16>
    %c0_13 = arith.constant 0 : index
    %c0_14 = arith.constant 0 : index
    %21 = vector.load %arg6[%c0_13, %c0_14] : memref<64x16xbf16, #tpu.memory_space<vmem>>, vector<64x16xbf16>
    %cst_15 = arith.constant dense<0.000000e+00> : vector<512x16xf32>
    %22 = tpu.matmul %20, %21, %cst_15 {dimension_numbers = #tpu.dot_dimension_numbers<[1], [0], [0], [1], [0, 0, 1, 1], [], []>} : vector<512x64xbf16>, vector<64x16xbf16>, vector<512x16xf32> -> vector<512x16xf32>
    %c0_16 = arith.constant 0 : index
    %c0_17 = arith.constant 0 : index
    %23 = vector.load %arg7[%c0_16, %c0_17] : memref<1x16xf32, #tpu.memory_space<vmem>>, vector<1x16xf32>
    %24 = vector.broadcast %23 : vector<1x16xf32> to vector<512x16xf32>
    %25 = arith.addf %22, %24 : vector<512x16xf32>
    %c0_18 = arith.constant 0 : index
    %c0_19 = arith.constant 0 : index
    %26 = vector.load %arg16[%c0_18, %c0_19] : memref<512x16xf32, #tpu.memory_space<vmem>>, vector<512x16xf32>
    tpu.vector_store %arg16[%c0_18, %c0_19], %25 {strides = array<i32>} : memref<512x16xf32, #tpu.memory_space<vmem>>, vector<512x16xf32>,
    %27 = arith.truncf %25 : vector<512x16xf32> to vector<512x16xbf16>
    %28 = vector.extract_strided_slice %27 {offsets = [0, 0], sizes = [128, 16], strides = [1, 1]} : vector<512x16xbf16> to vector<128x16xbf16>
    %29 = vector.extract_strided_slice %27 {offsets = [128, 0], sizes = [128, 16], strides = [1, 1]} : vector<512x16xbf16> to vector<128x16xbf16>
    %30 = vector.extract_strided_slice %27 {offsets = [256, 0], sizes = [128, 16], strides = [1, 1]} : vector<512x16xbf16> to vector<128x16xbf16>
    %31 = vector.extract_strided_slice %27 {offsets = [384, 0], sizes = [128, 16], strides = [1, 1]} : vector<512x16xbf16> to vector<128x16xbf16>
    %32 = tpu.concatenate %28, %29, %30, %31 in 1 : vector<128x16xbf16>, vector<128x16xbf16>, vector<128x16xbf16>, vector<128x16xbf16> -> vector<128x64xbf16>
    %c0_20 = arith.constant 0 : index
    %c0_21 = arith.constant 0 : index
    %33 = vector.load %arg8[%c0_20, %c0_21] : memref<64x16xbf16, #tpu.memory_space<vmem>>, vector<64x16xbf16>
    %cst_22 = arith.constant dense<0.000000e+00> : vector<128x16xf32>
    %34 = tpu.matmul %32, %33, %cst_22 {dimension_numbers = #tpu.dot_dimension_numbers<[1], [0], [0], [1], [0, 0, 1, 1], [], []>} : vector<128x64xbf16>, vector<64x16xbf16>, vector<128x16xf32> -> vector<128x16xf32>
    %c0_23 = arith.constant 0 : index
    %c0_24 = arith.constant 0 : index
    %35 = vector.load %arg9[%c0_23, %c0_24] : memref<1x16xf32, #tpu.memory_space<vmem>>, vector<1x16xf32>
    %36 = vector.broadcast %35 : vector<1x16xf32> to vector<128x16xf32>
    %37 = arith.addf %34, %36 : vector<128x16xf32>
    %c0_25 = arith.constant 0 : index
    %c0_26 = arith.constant 0 : index
    %38 = vector.load %arg17[%c0_25, %c0_26] : memref<128x16xf32, #tpu.memory_space<vmem>>, vector<128x16xf32>
    tpu.vector_store %arg17[%c0_25, %c0_26], %37 {strides = array<i32>} : memref<128x16xf32, #tpu.memory_space<vmem>>, vector<128x16xf32>,
    %39 = arith.truncf %37 : vector<128x16xf32> to vector<128x16xbf16>
    %40 = vector.extract_strided_slice %39 {offsets = [0, 0], sizes = [32, 16], strides = [1, 1]} : vector<128x16xbf16> to vector<32x16xbf16>
    %41 = vector.extract_strided_slice %39 {offsets = [32, 0], sizes = [32, 16], strides = [1, 1]} : vector<128x16xbf16> to vector<32x16xbf16>
    %42 = vector.extract_strided_slice %39 {offsets = [64, 0], sizes = [32, 16], strides = [1, 1]} : vector<128x16xbf16> to vector<32x16xbf16>
    %43 = vector.extract_strided_slice %39 {offsets = [96, 0], sizes = [32, 16], strides = [1, 1]} : vector<128x16xbf16> to vector<32x16xbf16>
    %44 = tpu.concatenate %40, %41, %42, %43 in 1 : vector<32x16xbf16>, vector<32x16xbf16>, vector<32x16xbf16>, vector<32x16xbf16> -> vector<32x64xbf16>
    %c0_27 = arith.constant 0 : index
    %c0_28 = arith.constant 0 : index
    %45 = vector.load %arg10[%c0_27, %c0_28] : memref<64x16xbf16, #tpu.memory_space<vmem>>, vector<64x16xbf16>
    %cst_29 = arith.constant dense<0.000000e+00> : vector<32x16xf32>
    %46 = tpu.matmul %44, %45, %cst_29 {dimension_numbers = #tpu.dot_dimension_numbers<[1], [0], [0], [1], [0, 0, 1, 1], [], []>} : vector<32x64xbf16>, vector<64x16xbf16>, vector<32x16xf32> -> vector<32x16xf32>
    %c0_30 = arith.constant 0 : index
    %c0_31 = arith.constant 0 : index
    %47 = vector.load %arg11[%c0_30, %c0_31] : memref<1x16xf32, #tpu.memory_space<vmem>>, vector<1x16xf32>
    %48 = vector.broadcast %47 : vector<1x16xf32> to vector<32x16xf32>
    %49 = arith.addf %46, %48 : vector<32x16xf32>
    %c0_32 = arith.constant 0 : index
    %c0_33 = arith.constant 0 : index
    %50 = vector.load %arg18[%c0_32, %c0_33] : memref<32x16xf32, #tpu.memory_space<vmem>>, vector<32x16xf32>
    tpu.vector_store %arg18[%c0_32, %c0_33], %49 {strides = array<i32>} : memref<32x16xf32, #tpu.memory_space<vmem>>, vector<32x16xf32>,
    %51 = arith.truncf %49 : vector<32x16xf32> to vector<32x16xbf16>
    %52 = vector.extract_strided_slice %51 {offsets = [0, 0], sizes = [8, 16], strides = [1, 1]} : vector<32x16xbf16> to vector<8x16xbf16>
    %53 = vector.extract_strided_slice %51 {offsets = [8, 0], sizes = [8, 16], strides = [1, 1]} : vector<32x16xbf16> to vector<8x16xbf16>
    %54 = vector.extract_strided_slice %51 {offsets = [16, 0], sizes = [8, 16], strides = [1, 1]} : vector<32x16xbf16> to vector<8x16xbf16>
    %55 = vector.extract_strided_slice %51 {offsets = [24, 0], sizes = [8, 16], strides = [1, 1]} : vector<32x16xbf16> to vector<8x16xbf16>
    %56 = tpu.concatenate %52, %53, %54, %55 in 1 : vector<8x16xbf16>, vector<8x16xbf16>, vector<8x16xbf16>, vector<8x16xbf16> -> vector<8x64xbf16>
    %c0_34 = arith.constant 0 : index
    %c0_35 = arith.constant 0 : index
    %57 = vector.load %arg12[%c0_34, %c0_35] : memref<64x16xbf16, #tpu.memory_space<vmem>>, vector<64x16xbf16>
    %cst_36 = arith.constant dense<0.000000e+00> : vector<8x16xf32>
    %58 = tpu.matmul %56, %57, %cst_36 {dimension_numbers = #tpu.dot_dimension_numbers<[1], [0], [0], [1], [0, 0, 1, 1], [], []>} : vector<8x64xbf16>, vector<64x16xbf16>, vector<8x16xf32> -> vector<8x16xf32>
    %c0_37 = arith.constant 0 : index
    %c0_38 = arith.constant 0 : index
    %59 = vector.load %arg13[%c0_37, %c0_38] : memref<1x16xf32, #tpu.memory_space<vmem>>, vector<1x16xf32>
    %60 = vector.broadcast %59 : vector<1x16xf32> to vector<8x16xf32>
    %61 = arith.addf %58, %60 : vector<8x16xf32>
    %c0_39 = arith.constant 0 : index
    %c0_40 = arith.constant 0 : index
    %62 = vector.load %arg19[%c0_39, %c0_40] : memref<8x16xf32, #tpu.memory_space<vmem>>, vector<8x16xf32>
    tpu.vector_store %arg19[%c0_39, %c0_40], %61 {strides = array<i32>} : memref<8x16xf32, #tpu.memory_space<vmem>>, vector<8x16xf32>,
    return
  }
  func.func @transform_0(%arg0: i32) -> (i32, i32) {
    %c0_i32 = arith.constant 0 : i32
    %c0_i32_0 = arith.constant 0 : i32
    return %arg0, %c0_i32 : i32, i32
  }
  func.func @transform_1(%arg0: i32) -> (i32, i32) {
    %c0_i32 = arith.constant 0 : i32
    %c0_i32_0 = arith.constant 0 : i32
    %c0_i32_1 = arith.constant 0 : i32
    return %c0_i32, %c0_i32_0 : i32, i32
  }
  func.func @transform_2(%arg0: i32) -> (i32, i32) {
    %c0_i32 = arith.constant 0 : i32
    %c0_i32_0 = arith.constant 0 : i32
    %c0_i32_1 = arith.constant 0 : i32
    return %c0_i32, %c0_i32_0 : i32, i32
  }
  func.func @transform_3(%arg0: i32) -> (i32, i32) {
    %c0_i32 = arith.constant 0 : i32
    %c0_i32_0 = arith.constant 0 : i32
    %c0_i32_1 = arith.constant 0 : i32
    return %c0_i32, %c0_i32_0 : i32, i32
  }
  func.func @transform_4(%arg0: i32) -> (i32, i32) {
    %c0_i32 = arith.constant 0 : i32
    %c0_i32_0 = arith.constant 0 : i32
    %c0_i32_1 = arith.constant 0 : i32
    return %c0_i32, %c0_i32_0 : i32, i32
  }
  func.func @transform_5(%arg0: i32) -> (i32, i32) {
    %c0_i32 = arith.constant 0 : i32
    %c0_i32_0 = arith.constant 0 : i32
    %c0_i32_1 = arith.constant 0 : i32
    return %c0_i32, %c0_i32_0 : i32, i32
  }
  func.func @transform_6(%arg0: i32) -> (i32, i32) {
    %c0_i32 = arith.constant 0 : i32
    %c0_i32_0 = arith.constant 0 : i32
    %c0_i32_1 = arith.constant 0 : i32
    return %c0_i32, %c0_i32_0 : i32, i32
  }
  func.func @transform_7(%arg0: i32) -> (i32, i32) {
    %c0_i32 = arith.constant 0 : i32
    %c0_i32_0 = arith.constant 0 : i32
    %c0_i32_1 = arith.constant 0 : i32
    return %c0_i32, %c0_i32_0 : i32, i32
  }
  func.func @transform_8(%arg0: i32) -> (i32, i32) {
    %c0_i32 = arith.constant 0 : i32
    %c0_i32_0 = arith.constant 0 : i32
    %c0_i32_1 = arith.constant 0 : i32
    return %c0_i32, %c0_i32_0 : i32, i32
  }
  func.func @transform_9(%arg0: i32) -> (i32, i32) {
    %c0_i32 = arith.constant 0 : i32
    %c0_i32_0 = arith.constant 0 : i32
    %c0_i32_1 = arith.constant 0 : i32
    return %c0_i32, %c0_i32_0 : i32, i32
  }
  func.func @transform_10(%arg0: i32) -> (i32, i32) {
    %c0_i32 = arith.constant 0 : i32
    %c0_i32_0 = arith.constant 0 : i32
    %c0_i32_1 = arith.constant 0 : i32
    return %c0_i32, %c0_i32_0 : i32, i32
  }
  func.func @transform_11(%arg0: i32) -> (i32, i32) {
    %c0_i32 = arith.constant 0 : i32
    %c0_i32_0 = arith.constant 0 : i32
    %c0_i32_1 = arith.constant 0 : i32
    return %c0_i32, %c0_i32_0 : i32, i32
  }
  func.func @transform_12(%arg0: i32) -> (i32, i32) {
    %c0_i32 = arith.constant 0 : i32
    %c0_i32_0 = arith.constant 0 : i32
    %c0_i32_1 = arith.constant 0 : i32
    return %c0_i32, %c0_i32_0 : i32, i32
  }
  func.func @transform_13(%arg0: i32) -> (i32, i32) {
    %c0_i32 = arith.constant 0 : i32
    %c0_i32_0 = arith.constant 0 : i32
    return %arg0, %c0_i32 : i32, i32
  }
  func.func @transform_14(%arg0: i32) -> (i32, i32) {
    %c0_i32 = arith.constant 0 : i32
    %c0_i32_0 = arith.constant 0 : i32
    return %arg0, %c0_i32 : i32, i32
  }
  func.func @transform_15(%arg0: i32) -> (i32, i32) {
    %c0_i32 = arith.constant 0 : i32
    %c0_i32_0 = arith.constant 0 : i32
    return %arg0, %c0_i32 : i32, i32
  }
  func.func @transform_16(%arg0: i32) -> (i32, i32) {
    %c0_i32 = arith.constant 0 : i32
    %c0_i32_0 = arith.constant 0 : i32
    return %arg0, %c0_i32 : i32, i32
  }
  func.func @transform_17(%arg0: i32) -> (i32, i32) {
    %c0_i32 = arith.constant 0 : i32
    %c0_i32_0 = arith.constant 0 : i32
    return %arg0, %c0_i32 : i32, i32
  }
  func.func @transform_18(%arg0: i32) -> (i32, i32) {
    %c0_i32 = arith.constant 0 : i32
    %c0_i32_0 = arith.constant 0 : i32
    return %arg0, %c0_i32 : i32, i32
  }
}

</mosaic_0001>

<llo_original>
// kernel: _forward_impl.1
$region0: #{_forward_impl.1}
  #allocation0 [shape = 'u32[]', space=smem, size = 0x4, offset = 0x4, fixed_abs, tag = 'smem constant byte address 0x4 - core index']
  #allocation1 [shape = 'u32[144,128]{1,0:T(1,128)}', space=vmem, size = 0x12000, scoped, tag = 'internal scratch']
  %s0 = inlined_call_operand.vmem [shape: f32[8192,3], index: 0, kind: input, shape index: {}, may-alias: {0,13}]
  %s1 = inlined_call_operand.vmem [shape: f32[1,3], index: 1, kind: input, shape index: {}]
  %s2 = inlined_call_operand.vmem [shape: f32[1,3], index: 2, kind: input, shape index: {}]
  %s3 = inlined_call_operand.vmem [shape: bf16[3,16], index: 3, kind: input, shape index: {}]
  %s4 = inlined_call_operand.vmem [shape: f32[1,16], index: 4, kind: input, shape index: {}]
  %s5 = inlined_call_operand.vmem [shape: bf16[64,16], index: 5, kind: input, shape index: {}]
  %s6 = inlined_call_operand.vmem [shape: f32[1,16], index: 6, kind: input, shape index: {}]
  %s7 = inlined_call_operand.vmem [shape: bf16[64,16], index: 7, kind: input, shape index: {}]
  %s8 = inlined_call_operand.vmem [shape: f32[1,16], index: 8, kind: input, shape index: {}]
  %s9 = inlined_call_operand.vmem [shape: bf16[64,16], index: 9, kind: input, shape index: {}]
  %s10 = inlined_call_operand.vmem [shape: f32[1,16], index: 10, kind: input, shape index: {}]
  %s11 = inlined_call_operand.vmem [shape: bf16[64,16], index: 11, kind: input, shape index: {}]
  %s12 = inlined_call_operand.vmem [shape: f32[1,16], index: 12, kind: input, shape index: {}]
  %s13 = inlined_call_operand.vmem [shape: f32[8192,3], index: 13, kind: output, shape index: {0}, may-alias: {0,13}]
  %s14 = inlined_call_operand.vmem [shape: f32[8192,16], index: 14, kind: output, shape index: {1}]
  %s15 = inlined_call_operand.vmem [shape: f32[2048,16], index: 15, kind: output, shape index: {2}]
  %s16 = inlined_call_operand.vmem [shape: f32[512,16], index: 16, kind: output, shape index: {3}]
  %s17 = inlined_call_operand.vmem [shape: f32[128,16], index: 17, kind: output, shape index: {4}]
  %s18 = inlined_call_operand.hbm [shape: f32[32,16], index: 18, kind: output, shape index: {5}]
  %19 = xla_tuple %s13, %s14, %s15, %s16, %s17, %s18
  %s20 = sld [smem:[#allocation0]]
  $region125: #{_forward_impl.1} parent=0
    _
  %s22 = ssub.s32 1, %s20
  %s23 = scalar_select 0, %s22, %s20
  $region1: #{_forward_impl.1} parent=0
    #allocation2 [shape = 'u8[8192]{0}', space=vmem, size = 0x2000, scoped, tag = 'output window, operand 5']
    #allocation3 [shape = 's32[2]{0}', space=sflag, size = 0x8, scoped, tag = 'scoped memory for _forward_impl.1']
    %24 = vsyncpa [#allocation3], 0
    %s25 = scalar_lea.sflag [#allocation3], 1
    %26 = vsyncpa %s25, 0
    loop: start=0, step=1, limit=6
    $region2: #{_forward_impl.1} parent=1 // loop_pre_header
      _
    $region3: #{_forward_impl.1} parent=1 // loop_header
      %s28 = sphi 0, %s32
      %p29 = scmp.ge.s32.totalorder %s28, 6
      %s38 = sphi 0, %s40
      %s41 = sphi 0, %s38
      %s42 = sphi 0, %s41
      %s58 = sphi 0, %s42
      %s62 = sphi 0, %s62
      %s64 = sphi 0, %s62
      %s65 = sphi 0, %s64
      %s79 = sphi 0, %s65
      %s83 = sphi 0, %s83
      %s85 = sphi 0, %s83
      %s86 = sphi 0, %s85
      %s100 = sphi 0, %s86
      %s104 = sphi 0, %s104
      %s106 = sphi 0, %s104
      %s107 = sphi 0, %s106
      %s121 = sphi 0, %s107
      %s125 = sphi 0, %s125
      %s127 = sphi 0, %s125
      %s128 = sphi 0, %s127
      %s142 = sphi 0, %s128
      %s146 = sphi 0, %s146
      %s148 = sphi 0, %s146
      %s149 = sphi 0, %s148
      %s163 = sphi 0, %s149
      %s167 = sphi 0, %s167
      %s169 = sphi 0, %s167
      %s170 = sphi 0, %s169
      %s184 = sphi 0, %s170
      %s188 = sphi 0, %s188
      %s190 = sphi 0, %s188
      %s191 = sphi 0, %s190
      %s205 = sphi 0, %s191
      %s209 = sphi 0, %s209
      %s211 = sphi 0, %s209
      %s212 = sphi 0, %s211
      %s226 = sphi 0, %s212
      %s230 = sphi 0, %s230
      %s232 = sphi 0, %s230
      %s233 = sphi 0, %s232
      %s247 = sphi 0, %s233
      %s251 = sphi 0, %s251
      %s253 = sphi 0, %s251
      %s254 = sphi 0, %s253
      %s268 = sphi 0, %s254
      %s272 = sphi 0, %s272
      %s274 = sphi 0, %s272
      %s275 = sphi 0, %s274
      %s289 = sphi 0, %s275
      %s293 = sphi 0, %s293
      %s295 = sphi 0, %s293
      %s296 = sphi 0, %s295
      %s310 = sphi 0, %s296
      %s316 = sphi 0, %s318
      %s319 = sphi 0, %s316
      %s320 = sphi 0, %s319
      %s336 = sphi 0, %s320
      %s342 = sphi 0, %s344
      %s345 = sphi 0, %s342
      %s346 = sphi 0, %s345
      %s362 = sphi 0, %s346
      %s368 = sphi 0, %s370
      %s371 = sphi 0, %s368
      %s372 = sphi 0, %s371
      %s388 = sphi 0, %s372
      %s394 = sphi 0, %s396
      %s397 = sphi 0, %s394
      %s398 = sphi 0, %s397
      %s414 = sphi 0, %s398
      %s420 = sphi 0, %s422
      %s423 = sphi 0, %s420
      %s424 = sphi 0, %s423
      %s440 = sphi 0, %s424
      %s446 = sphi 0, %s448
      %s449 = sphi 0, %s446
      %s450 = sphi 0, %s449
      %s466 = sphi 0, %s450
    $region4: #{_forward_impl.1} parent=1 // loop_header_branch
      %31 = sbr.rel (%p29) target = $region8
    $region5: #{_forward_impl.1} parent=1 // loop_body
      %s33 = ssub.s32 %s28, 1
      %s34 = ssub.s32 %s28, 2
      %s35 = sadd.s32 %s28, 1
      %s36 = ssub.s32 %s28, %s35
      %p37 = scmp.eq.s32.totalorder %s36, 0
      %s39 = sadd.s32 %s38, 1
      %s40 = scalar_select %p37, %s38, %s39
      %p43 = pneg %p37
      %p44 = scmp.eq.s32.totalorder %s28, 3
      %p45 = por %p43, %p44
      %p46 = scmp.ne.s32.totalorder %s38, %s41
      %p47 = scmp.eq.s32.totalorder %s28, 0
      %p48 = por %p46, %p47
      %p49 = scmp.ne.s32.totalorder %s38, %s41
      %p50 = scmp.eq.s32.totalorder %s33, 3
      %p51 = por %p49, %p50
      %p52 = scmp.ne.s32.totalorder %s41, %s42
      %p53 = scmp.eq.s32.totalorder %s33, 0
      %p54 = por %p52, %p53
      %p55 = scmp.ne.s32.totalorder %s41, %s42
      %p56 = scmp.eq.s32.totalorder %s34, 3
      %p57 = por %p55, %p56
      %p59 = scmp.ne.s32.totalorder %s42, %s58
      %p60 = scmp.eq.s32.totalorder %s34, 0
      %p61 = por %p59, %p60
      %s63 = sadd.s32 %s62, 1
      %p66 = scmp.eq.s32.totalorder %s28, 3
      %p67 = scmp.ne.s32.totalorder %s62, %s64
      %p68 = scmp.eq.s32.totalorder %s28, 0
      %p69 = por %p67, %p68
      %p70 = scmp.ne.s32.totalorder %s62, %s64
      %p71 = scmp.eq.s32.totalorder %s33, 3
      %p72 = por %p70, %p71
      %p73 = scmp.ne.s32.totalorder %s64, %s65
      %p74 = scmp.eq.s32.totalorder %s33, 0
      %p75 = por %p73, %p74
      %p76 = scmp.ne.s32.totalorder %s64, %s65
      %p77 = scmp.eq.s32.totalorder %s34, 3
      %p78 = por %p76, %p77
      %p80 = scmp.ne.s32.totalorder %s65, %s79
      %p81 = scmp.eq.s32.totalorder %s34, 0
      %p82 = por %p80, %p81
      %s84 = sadd.s32 %s83, 1
      %p87 = scmp.eq.s32.totalorder %s28, 3
      %p88 = scmp.ne.s32.totalorder %s83, %s85
      %p89 = scmp.eq.s32.totalorder %s28, 0
      %p90 = por %p88, %p89
      %p91 = scmp.ne.s32.totalorder %s83, %s85
      %p92 = scmp.eq.s32.totalorder %s33, 3
      %p93 = por %p91, %p92
      %p94 = scmp.ne.s32.totalorder %s85, %s86
      %p95 = scmp.eq.s32.totalorder %s33, 0
      %p96 = por %p94, %p95
      %p97 = scmp.ne.s32.totalorder %s85, %s86
      %p98 = scmp.eq.s32.totalorder %s34, 3
      %p99 = por %p97, %p98
      %p101 = scmp.ne.s32.totalorder %s86, %s100
      %p102 = scmp.eq.s32.totalorder %s34, 0
      %p103 = por %p101, %p102
      %s105 = sadd.s32 %s104, 1
      %p108 = scmp.eq.s32.totalorder %s28, 3
      %p109 = scmp.ne.s32.totalorder %s104, %s106
      %p110 = scmp.eq.s32.totalorder %s28, 0
      %p111 = por %p109, %p110
      %p112 = scmp.ne.s32.totalorder %s104, %s106
      %p113 = scmp.eq.s32.totalorder %s33, 3
      %p114 = por %p112, %p113
      %p115 = scmp.ne.s32.totalorder %s106, %s107
      %p116 = scmp.eq.s32.totalorder %s33, 0
      %p117 = por %p115, %p116
      %p118 = scmp.ne.s32.totalorder %s106, %s107
      %p119 = scmp.eq.s32.totalorder %s34, 3
      %p120 = por %p118, %p119
      %p122 = scmp.ne.s32.totalorder %s107, %s121
      %p123 = scmp.eq.s32.totalorder %s34, 0
      %p124 = por %p122, %p123
      %s126 = sadd.s32 %s125, 1
      %p129 = scmp.eq.s32.totalorder %s28, 3
      %p130 = scmp.ne.s32.totalorder %s125, %s127
      %p131 = scmp.eq.s32.totalorder %s28, 0
      %p132 = por %p130, %p131
      %p133 = scmp.ne.s32.totalorder %s125, %s127
      %p134 = scmp.eq.s32.totalorder %s33, 3
      %p135 = por %p133, %p134
      %p136 = scmp.ne.s32.totalorder %s127, %s128
      %p137 = scmp.eq.s32.totalorder %s33, 0
      %p138 = por %p136, %p137
      %p139 = scmp.ne.s32.totalorder %s127, %s128
      %p140 = scmp.eq.s32.totalorder %s34, 3
      %p141 = por %p139, %p140
      %p143 = scmp.ne.s32.totalorder %s128, %s142
      %p144 = scmp.eq.s32.totalorder %s34, 0
      %p145 = por %p143, %p144
      %s147 = sadd.s32 %s146, 1
      %p150 = scmp.eq.s32.totalorder %s28, 3
      %p151 = scmp.ne.s32.totalorder %s146, %s148
      %p152 = scmp.eq.s32.totalorder %s28, 0
      %p153 = por %p151, %p152
      %p154 = scmp.ne.s32.totalorder %s146, %s148
      %p155 = scmp.eq.s32.totalorder %s33, 3
      %p156 = por %p154, %p155
      %p157 = scmp.ne.s32.totalorder %s148, %s149
      %p158 = scmp.eq.s32.totalorder %s33, 0
      %p159 = por %p157, %p158
      %p160 = scmp.ne.s32.totalorder %s148, %s149
      %p161 = scmp.eq.s32.totalorder %s34, 3
      %p162 = por %p160, %p161
      %p164 = scmp.ne.s32.totalorder %s149, %s163
      %p165 = scmp.eq.s32.totalorder %s34, 0
      %p166 = por %p164, %p165
      %s168 = sadd.s32 %s167, 1
      %p171 = scmp.eq.s32.totalorder %s28, 3
      %p172 = scmp.ne.s32.totalorder %s167, %s169
      %p173 = scmp.eq.s32.totalorder %s28, 0
      %p174 = por %p172, %p173
      %p175 = scmp.ne.s32.totalorder %s167, %s169
      %p176 = scmp.eq.s32.totalorder %s33, 3
      %p177 = por %p175, %p176
      %p178 = scmp.ne.s32.totalorder %s169, %s170
      %p179 = scmp.eq.s32.totalorder %s33, 0
      %p180 = por %p178, %p179
      %p181 = scmp.ne.s32.totalorder %s169, %s170
      %p182 = scmp.eq.s32.totalorder %s34, 3
      %p183 = por %p181, %p182
      %p185 = scmp.ne.s32.totalorder %s170, %s184
      %p186 = scmp.eq.s32.totalorder %s34, 0
      %p187 = por %p185, %p186
      %s189 = sadd.s32 %s188, 1
      %p192 = scmp.eq.s32.totalorder %s28, 3
      %p193 = scmp.ne.s32.totalorder %s188, %s190
      %p194 = scmp.eq.s32.totalorder %s28, 0
      %p195 = por %p193, %p194
      %p196 = scmp.ne.s32.totalorder %s188, %s190
      %p197 = scmp.eq.s32.totalorder %s33, 3
      %p198 = por %p196, %p197
      %p199 = scmp.ne.s32.totalorder %s190, %s191
      %p200 = scmp.eq.s32.totalorder %s33, 0
      %p201 = por %p199, %p200
      %p202 = scmp.ne.s32.totalorder %s190, %s191
      %p203 = scmp.eq.s32.totalorder %s34, 3
      %p204 = por %p202, %p203
      %p206 = scmp.ne.s32.totalorder %s191, %s205
      %p207 = scmp.eq.s32.totalorder %s34, 0
      %p208 = por %p206, %p207
      %s210 = sadd.s32 %s209, 1
      %p213 = scmp.eq.s32.totalorder %s28, 3
      %p214 = scmp.ne.s32.totalorder %s209, %s211
      %p215 = scmp.eq.s32.totalorder %s28, 0
      %p216 = por %p214, %p215
      %p217 = scmp.ne.s32.totalorder %s209, %s211
      %p218 = scmp.eq.s32.totalorder %s33, 3
      %p219 = por %p217, %p218
      %p220 = scmp.ne.s32.totalorder %s211, %s212
      %p221 = scmp.eq.s32.totalorder %s33, 0
      %p222 = por %p220, %p221
      %p223 = scmp.ne.s32.totalorder %s211, %s212
      %p224 = scmp.eq.s32.totalorder %s34, 3
      %p225 = por %p223, %p224
      %p227 = scmp.ne.s32.totalorder %s212, %s226
      %p228 = scmp.eq.s32.totalorder %s34, 0
      %p229 = por %p227, %p228
      %s231 = sadd.s32 %s230, 1
      %p234 = scmp.eq.s32.totalorder %s28, 3
      %p235 = scmp.ne.s32.totalorder %s230, %s232
      %p236 = scmp.eq.s32.totalorder %s28, 0
      %p237 = por %p235, %p236
      %p238 = scmp.ne.s32.totalorder %s230, %s232
      %p239 = scmp.eq.s32.totalorder %s33, 3
      %p240 = por %p238, %p239
      %p241 = scmp.ne.s32.totalorder %s232, %s233
      %p242 = scmp.eq.s32.totalorder %s33, 0
      %p243 = por %p241, %p242
      %p244 = scmp.ne.s32.totalorder %s232, %s233
      %p245 = scmp.eq.s32.totalorder %s34, 3
      %p246 = por %p244, %p245
      %p248 = scmp.ne.s32.totalorder %s233, %s247
      %p249 = scmp.eq.s32.totalorder %s34, 0
      %p250 = por %p248, %p249
      %s252 = sadd.s32 %s251, 1
      %p255 = scmp.eq.s32.totalorder %s28, 3
      %p256 = scmp.ne.s32.totalorder %s251, %s253
      %p257 = scmp.eq.s32.totalorder %s28, 0
      %p258 = por %p256, %p257
      %p259 = scmp.ne.s32.totalorder %s251, %s253
      %p260 = scmp.eq.s32.totalorder %s33, 3
      %p261 = por %p259, %p260
      %p262 = scmp.ne.s32.totalorder %s253, %s254
      %p263 = scmp.eq.s32.totalorder %s33, 0
      %p264 = por %p262, %p263
      %p265 = scmp.ne.s32.totalorder %s253, %s254
      %p266 = scmp.eq.s32.totalorder %s34, 3
      %p267 = por %p265, %p266
      %p269 = scmp.ne.s32.totalorder %s254, %s268
      %p270 = scmp.eq.s32.totalorder %s34, 0
      %p271 = por %p269, %p270
      %s273 = sadd.s32 %s272, 1
      %p276 = scmp.eq.s32.totalorder %s28, 3
      %p277 = scmp.ne.s32.totalorder %s272, %s274
      %p278 = scmp.eq.s32.totalorder %s28, 0
      %p279 = por %p277, %p278
      %p280 = scmp.ne.s32.totalorder %s272, %s274
      %p281 = scmp.eq.s32.totalorder %s33, 3
      %p282 = por %p280, %p281
      %p283 = scmp.ne.s32.totalorder %s274, %s275
      %p284 = scmp.eq.s32.totalorder %s33, 0
      %p285 = por %p283, %p284
      %p286 = scmp.ne.s32.totalorder %s274, %s275
      %p287 = scmp.eq.s32.totalorder %s34, 3
      %p288 = por %p286, %p287
      %p290 = scmp.ne.s32.totalorder %s275, %s289
      %p291 = scmp.eq.s32.totalorder %s34, 0
      %p292 = por %p290, %p291
      %s294 = sadd.s32 %s293, 1
      %p297 = scmp.eq.s32.totalorder %s28, 3
      %p298 = scmp.ne.s32.totalorder %s293, %s295
      %p299 = scmp.eq.s32.totalorder %s28, 0
      %p300 = por %p298, %p299
      %p301 = scmp.ne.s32.totalorder %s293, %s295
      %p302 = scmp.eq.s32.totalorder %s33, 3
      %p303 = por %p301, %p302
      %p304 = scmp.ne.s32.totalorder %s295, %s296
      %p305 = scmp.eq.s32.totalorder %s33, 0
      %p306 = por %p304, %p305
      %p307 = scmp.ne.s32.totalorder %s295, %s296
      %p308 = scmp.eq.s32.totalorder %s34, 3
      %p309 = por %p307, %p308
      %p311 = scmp.ne.s32.totalorder %s296, %s310
      %p312 = scmp.eq.s32.totalorder %s34, 0
      %p313 = por %p311, %p312
      %s314 = ssub.s32 %s28, %s35
      %p315 = scmp.eq.s32.totalorder %s314, 0
      %s317 = sadd.s32 %s316, 1
      %s318 = scalar_select %p315, %s316, %s317
      %p321 = pneg %p315
      %p322 = scmp.eq.s32.totalorder %s28, 3
      %p323 = por %p321, %p322
      %p324 = scmp.ne.s32.totalorder %s316, %s319
      %p325 = scmp.eq.s32.totalorder %s28, 0
      %p326 = por %p324, %p325
      %p327 = scmp.ne.s32.totalorder %s316, %s319
      %p328 = scmp.eq.s32.totalorder %s33, 3
      %p329 = por %p327, %p328
      %p330 = scmp.ne.s32.totalorder %s319, %s320
      %p331 = scmp.eq.s32.totalorder %s33, 0
      %p332 = por %p330, %p331
      %p333 = scmp.ne.s32.totalorder %s319, %s320
      %p334 = scmp.eq.s32.totalorder %s34, 3
      %p335 = por %p333, %p334
      %p337 = scmp.ne.s32.totalorder %s320, %s336
      %p338 = scmp.eq.s32.totalorder %s34, 0
      %p339 = por %p337, %p338
      %s340 = ssub.s32 %s28, %s35
      %p341 = scmp.eq.s32.totalorder %s340, 0
      %s343 = sadd.s32 %s342, 1
      %s344 = scalar_select %p341, %s342, %s343
      %p347 = pneg %p341
      %p348 = scmp.eq.s32.totalorder %s28, 3
      %p349 = por %p347, %p348
      %p350 = scmp.ne.s32.totalorder %s342, %s345
      %p351 = scmp.eq.s32.totalorder %s28, 0
      %p352 = por %p350, %p351
      %p353 = scmp.ne.s32.totalorder %s342, %s345
      %p354 = scmp.eq.s32.totalorder %s33, 3
      %p355 = por %p353, %p354
      %p356 = scmp.ne.s32.totalorder %s345, %s346
      %p357 = scmp.eq.s32.totalorder %s33, 0
      %p358 = por %p356, %p357
      %p359 = scmp.ne.s32.totalorder %s345, %s346
      %p360 = scmp.eq.s32.totalorder %s34, 3
      %p361 = por %p359, %p360
      %p363 = scmp.ne.s32.totalorder %s346, %s362
      %p364 = scmp.eq.s32.totalorder %s34, 0
      %p365 = por %p363, %p364
      %s366 = ssub.s32 %s28, %s35
      %p367 = scmp.eq.s32.totalorder %s366, 0
      %s369 = sadd.s32 %s368, 1
      %s370 = scalar_select %p367, %s368, %s369
      %p373 = pneg %p367
      %p374 = scmp.eq.s32.totalorder %s28, 3
      %p375 = por %p373, %p374
      %p376 = scmp.ne.s32.totalorder %s368, %s371
      %p377 = scmp.eq.s32.totalorder %s28, 0
      %p378 = por %p376, %p377
      %p379 = scmp.ne.s32.totalorder %s368, %s371
      %p380 = scmp.eq.s32.totalorder %s33, 3
      %p381 = por %p379, %p380
      %p382 = scmp.ne.s32.totalorder %s371, %s372
      %p383 = scmp.eq.s32.totalorder %s33, 0
      %p384 = por %p382, %p383
      %p385 = scmp.ne.s32.totalorder %s371, %s372
      %p386 = scmp.eq.s32.totalorder %s34, 3
      %p387 = por %p385, %p386
      %p389 = scmp.ne.s32.totalorder %s372, %s388
      %p390 = scmp.eq.s32.totalorder %s34, 0
      %p391 = por %p389, %p390
      %s392 = ssub.s32 %s28, %s35
      %p393 = scmp.eq.s32.totalorder %s392, 0
      %s395 = sadd.s32 %s394, 1
      %s396 = scalar_select %p393, %s394, %s395
      %p399 = pneg %p393
      %p400 = scmp.eq.s32.totalorder %s28, 3
      %p401 = por %p399, %p400
      %p402 = scmp.ne.s32.totalorder %s394, %s397
      %p403 = scmp.eq.s32.totalorder %s28, 0
      %p404 = por %p402, %p403
      %p405 = scmp.ne.s32.totalorder %s394, %s397
      %p406 = scmp.eq.s32.totalorder %s33, 3
      %p407 = por %p405, %p406
      %p408 = scmp.ne.s32.totalorder %s397, %s398
      %p409 = scmp.eq.s32.totalorder %s33, 0
      %p410 = por %p408, %p409
      %p411 = scmp.ne.s32.totalorder %s397, %s398
      %p412 = scmp.eq.s32.totalorder %s34, 3
      %p413 = por %p411, %p412
      %p415 = scmp.ne.s32.totalorder %s398, %s414
      %p416 = scmp.eq.s32.totalorder %s34, 0
      %p417 = por %p415, %p416
      %s418 = ssub.s32 %s28, %s35
      %p419 = scmp.eq.s32.totalorder %s418, 0
      %s421 = sadd.s32 %s420, 1
      %s422 = scalar_select %p419, %s420, %s421
      %p425 = pneg %p419
      %p426 = scmp.eq.s32.totalorder %s28, 3
      %p427 = por %p425, %p426
      %p428 = scmp.ne.s32.totalorder %s420, %s423
      %p429 = scmp.eq.s32.totalorder %s28, 0
      %p430 = por %p428, %p429
      %p431 = scmp.ne.s32.totalorder %s420, %s423
      %p432 = scmp.eq.s32.totalorder %s33, 3
      %p433 = por %p431, %p432
      %p434 = scmp.ne.s32.totalorder %s423, %s424
      %p435 = scmp.eq.s32.totalorder %s33, 0
      %p436 = por %p434, %p435
      %p437 = scmp.ne.s32.totalorder %s423, %s424
      %p438 = scmp.eq.s32.totalorder %s34, 3
      %p439 = por %p437, %p438
      %p441 = scmp.ne.s32.totalorder %s424, %s440
      %p442 = scmp.eq.s32.totalorder %s34, 0
      %p443 = por %p441, %p442
      %s444 = ssub.s32 %s28, %s35
      %p445 = scmp.eq.s32.totalorder %s444, 0
      %s447 = sadd.s32 %s446, 1
      %s448 = scalar_select %p445, %s446, %s447
      %p451 = pneg %p445
      %p452 = scmp.eq.s32.totalorder %s28, 3
      %p453 = por %p451, %p452
      %p454 = scmp.ne.s32.totalorder %s446, %s449
      %p455 = scmp.eq.s32.totalorder %s28, 0
      %p456 = por %p454, %p455
      %p457 = scmp.ne.s32.totalorder %s446, %s449
      %p458 = scmp.eq.s32.totalorder %s33, 3
      %p459 = por %p457, %p458
      %p460 = scmp.ne.s32.totalorder %s449, %s450
      %p461 = scmp.eq.s32.totalorder %s33, 0
      %p462 = por %p460, %p461
      %p463 = scmp.ne.s32.totalorder %s449, %s450
      %p464 = scmp.eq.s32.totalorder %s34, 3
      %p465 = por %p463, %p464
      %p467 = scmp.ne.s32.totalorder %s450, %s466
      %p468 = scmp.eq.s32.totalorder %s34, 0
      %p469 = por %p467, %p468
      %p470 = scmp.le.s32.totalorder 1, %s28
      %p471 = scmp.lt.s32.totalorder %s28, 5
      %p472 = pnand %p470, %p471
      %p473 = pneg %p472
      // Predicated region
      $region9: #{_forward_impl.1} parent=5 // pred_check
        _
      $region10: #{_forward_impl.1} parent=5 // pred_check_branch
        %475 = sbr.rel (%p472) target = $region12
      $region11: #{_forward_impl.1} parent=5 // pred_region
        %s476 = ssub.s32 %s28, 1
        // Predicated region
        $region13: #{_forward_impl.1} parent=11 // pred_check
          %p477 = pneg %p75
        $region14: #{_forward_impl.1} parent=11 // pred_check_branch
          %479 = sbr.rel (%p477) target = $region16
        $region15: #{_forward_impl.1} parent=11 // pred_region
          _
        $region16: #{_forward_impl.1} parent=11 // pred_fallthru
          _
        // Predicated region
        $region17: #{_forward_impl.1} parent=11 // pred_check
          %p480 = pneg %p96
        $region18: #{_forward_impl.1} parent=11 // pred_check_branch
          %482 = sbr.rel (%p480) target = $region20
        $region19: #{_forward_impl.1} parent=11 // pred_region
          _
        $region20: #{_forward_impl.1} parent=11 // pred_fallthru
          _
        // Predicated region
        $region21: #{_forward_impl.1} parent=11 // pred_check
          %p483 = pneg %p117
        $region22: #{_forward_impl.1} parent=11 // pred_check_branch
          %485 = sbr.rel (%p483) target = $region24
        $region23: #{_forward_impl.1} parent=11 // pred_region
          _
        $region24: #{_forward_impl.1} parent=11 // pred_fallthru
          _
        // Predicated region
        $region25: #{_forward_impl.1} parent=11 // pred_check
          %p486 = pneg %p138
        $region26: #{_forward_impl.1} parent=11 // pred_check_branch
          %488 = sbr.rel (%p486) target = $region28
        $region27: #{_forward_impl.1} parent=11 // pred_region
          _
        $region28: #{_forward_impl.1} parent=11 // pred_fallthru
          _
        // Predicated region
        $region29: #{_forward_impl.1} parent=11 // pred_check
          %p489 = pneg %p159
        $region30: #{_forward_impl.1} parent=11 // pred_check_branch
          %491 = sbr.rel (%p489) target = $region32
        $region31: #{_forward_impl.1} parent=11 // pred_region
          _
        $region32: #{_forward_impl.1} parent=11 // pred_fallthru
          _
        // Predicated region
        $region33: #{_forward_impl.1} parent=11 // pred_check
          %p492 = pneg %p180
        $region34: #{_forward_impl.1} parent=11 // pred_check_branch
          %494 = sbr.rel (%p492) target = $region36
        $region35: #{_forward_impl.1} parent=11 // pred_region
          _
        $region36: #{_forward_impl.1} parent=11 // pred_fallthru
          _
        // Predicated region
        $region37: #{_forward_impl.1} parent=11 // pred_check
          %p495 = pneg %p201
        $region38: #{_forward_impl.1} parent=11 // pred_check_branch
          %497 = sbr.rel (%p495) target = $region40
        $region39: #{_forward_impl.1} parent=11 // pred_region
          _
        $region40: #{_forward_impl.1} parent=11 // pred_fallthru
          _
        // Predicated region
        $region41: #{_forward_impl.1} parent=11 // pred_check
          %p498 = pneg %p222
        $region42: #{_forward_impl.1} parent=11 // pred_check_branch
          %500 = sbr.rel (%p498) target = $region44
        $region43: #{_forward_impl.1} parent=11 // pred_region
          _
        $region44: #{_forward_impl.1} parent=11 // pred_fallthru
          _
        // Predicated region
        $region45: #{_forward_impl.1} parent=11 // pred_check
          %p501 = pneg %p243
        $region46: #{_forward_impl.1} parent=11 // pred_check_branch
          %503 = sbr.rel (%p501) target = $region48
        $region47: #{_forward_impl.1} parent=11 // pred_region
          _
        $region48: #{_forward_impl.1} parent=11 // pred_fallthru
          _
        // Predicated region
        $region49: #{_forward_impl.1} parent=11 // pred_check
          %p504 = pneg %p264
        $region50: #{_forward_impl.1} parent=11 // pred_check_branch
          %506 = sbr.rel (%p504) target = $region52
        $region51: #{_forward_impl.1} parent=11 // pred_region
          _
        $region52: #{_forward_impl.1} parent=11 // pred_fallthru
          _
        // Predicated region
        $region53: #{_forward_impl.1} parent=11 // pred_check
          %p507 = pneg %p285
        $region54: #{_forward_impl.1} parent=11 // pred_check_branch
          %509 = sbr.rel (%p507) target = $region56
        $region55: #{_forward_impl.1} parent=11 // pred_region
          _
        $region56: #{_forward_impl.1} parent=11 // pred_fallthru
          _
        // Predicated region
        $region57: #{_forward_impl.1} parent=11 // pred_check
          %p510 = pneg %p306
        $region58: #{_forward_impl.1} parent=11 // pred_check_branch
          %512 = sbr.rel (%p510) target = $region60
        $region59: #{_forward_impl.1} parent=11 // pred_region
          _
        $region60: #{_forward_impl.1} parent=11 // pred_fallthru
          _
      $region12: #{_forward_impl.1} parent=5 // pred_fallthru
        _
      %p513 = scmp.lt.s32.totalorder %s28, 4
      // Predicated region
      $region61: #{_forward_impl.1} parent=5 // pred_check
        %p514 = pneg %p513
      $region62: #{_forward_impl.1} parent=5 // pred_check_branch
        %516 = sbr.rel (%p514) target = $region64
      $region63: #{_forward_impl.1} parent=5 // pred_region
        // Predicated region
        $region65: #{_forward_impl.1} parent=63 // pred_check
          %p517 = pneg %p48
        $region66: #{_forward_impl.1} parent=63 // pred_check_branch
          %519 = sbr.rel (%p517) target = $region68
        $region67: #{_forward_impl.1} parent=63 // pred_region
          %s520 = smul.u32 256, %s28
          %p521 = scmp.lt.s32.totalorder %s520, 1023
          %s522 = scalar_select %p521, %s520, 1023
          %s523 = smul.addr %s522, 8
          %s524 = scalar_lea.vmem %s0, %s523
          %s525 = smul.u32 256, %s28
        $region68: #{_forward_impl.1} parent=63 // pred_fallthru
          _
      $region64: #{_forward_impl.1} parent=5 // pred_fallthru
        _
      %p526 = scmp.le.s32.totalorder 1, %s28
      %p527 = scmp.lt.s32.totalorder %s28, 5
      %p528 = pnand %p526, %p527
      %p529 = pneg %p528
      // Predicated region
      $region69: #{_forward_impl.1} parent=5 // pred_check
        _
      $region70: #{_forward_impl.1} parent=5 // pred_check_branch
        %531 = sbr.rel (%p528) target = $region72
      $region71: #{_forward_impl.1} parent=5 // pred_region
        %s532 = ssub.s32 %s28, 1
        %s533 = smul.u32 256, %s33
        %p534 = scmp.lt.s32.totalorder %s533, 1023
        %s535 = scalar_select %p534, %s533, 1023
        %s536 = smul.addr %s535, 8
        %s537 = scalar_lea.vmem %s0, %s536
        %p538 = pneg %p54
        %p539 = pneg %p51
        %p540 = pneg %p75
        %p541 = pneg %p72
        %p542 = pneg %p96
        %p543 = pneg %p93
        %p544 = pneg %p117
        %p545 = pneg %p114
        %p546 = pneg %p138
        %p547 = pneg %p135
        %p548 = pneg %p159
        %p549 = pneg %p156
        %p550 = pneg %p180
        %p551 = pneg %p177
        %p552 = pneg %p201
        %p553 = pneg %p198
        %p554 = pneg %p222
        %p555 = pneg %p219
        %p556 = pneg %p243
        %p557 = pneg %p240
        %p558 = pneg %p264
        %p559 = pneg %p261
        %p560 = pneg %p285
        %p561 = pneg %p282
        %p562 = pneg %p306
        %p563 = pneg %p303
        %p564 = pneg %p332
        %p565 = pneg %p329
        %s566 = smul.u32 256, %s33
        %p567 = scmp.lt.s32.totalorder %s566, 1023
        %s568 = scalar_select %p567, %s566, 1023
        %s569 = smul.addr %s568, 8
        %s570 = scalar_lea.vmem %s13, %s569
        %p571 = pneg %p358
        %p572 = pneg %p355
        %s573 = smul.u32 256, %s33
        %p574 = scmp.lt.s32.totalorder %s573, 1023
        %s575 = scalar_select %p574, %s573, 1023
        %s576 = smul.addr %s575, 8
        %s577 = scalar_lea.vmem %s14, %s576
        %p578 = pneg %p384
        %p579 = pneg %p381
        %s580 = smul.u32 64, %s33
        %p581 = scmp.lt.s32.totalorder %s580, 255
        %s582 = scalar_select %p581, %s580, 255
        %s583 = smul.addr %s582, 8
        %s584 = scalar_lea.vmem %s15, %s583
        %p585 = pneg %p410
        %p586 = pneg %p407
        %s587 = smul.u32 16, %s33
        %p588 = scmp.lt.s32.totalorder %s587, 63
        %s589 = scalar_select %p588, %s587, 63
        %s590 = smul.addr %s589, 8
        %s591 = scalar_lea.vmem %s16, %s590
        %p592 = pneg %p436
        %p593 = pneg %p433
        %s594 = smul.u32 4, %s33
        %p595 = scmp.lt.s32.totalorder %s594, 15
        %s596 = scalar_select %p595, %s594, 15
        %s597 = smul.addr %s596, 8
        %s598 = scalar_lea.vmem %s17, %s597
        %p599 = pneg %p462
        %p600 = pneg %p459
        %s601 = sand.u32 %s449, 1
        %s602 = scalar_lea.sflag [#allocation3], %s601
        %s603 = sand.u32 %s449, 1
        %s604 = smul.addr %s603, 8
        %s605 = scalar_lea.vmem [#allocation2], %s604
        %s606 = smul.u32 256, %s33
        %p607 = scmp.lt.s32.totalorder %s606, 1023
        %s608 = scalar_select %p607, %s606, 1023
        %s609 = smul.addr %s608, 8
        %s610 = scalar_lea.vmem %s0, %s609
        %s611 = smul.u32 256, %s33
        %s612 = smul.u32 256, %s33
        %p613 = scmp.lt.s32.totalorder %s612, 1023
        %s614 = scalar_select %p613, %s612, 1023
        %s615 = smul.addr %s614, 8
        %s616 = scalar_lea.vmem %s13, %s615
        %s617 = smul.u32 256, %s33
        %s618 = smul.u32 256, %s33
        %p619 = scmp.lt.s32.totalorder %s618, 1023
        %s620 = scalar_select %p619, %s618, 1023
        %s621 = smul.addr %s620, 8
        %s622 = scalar_lea.vmem %s14, %s621
        %s623 = smul.u32 256, %s33
        %s624 = smul.u32 64, %s33
        %p625 = scmp.lt.s32.totalorder %s624, 255
        %s626 = scalar_select %p625, %s624, 255
        %s627 = smul.addr %s626, 8
        %s628 = scalar_lea.vmem %s15, %s627
        %s629 = smul.u32 64, %s33
        %s630 = smul.u32 16, %s33
        %p631 = scmp.lt.s32.totalorder %s630, 63
        %s632 = scalar_select %p631, %s630, 63
        %s633 = smul.addr %s632, 8
        %s634 = scalar_lea.vmem %s16, %s633
        %s635 = smul.u32 16, %s33
        %s636 = smul.u32 4, %s33
        %p637 = scmp.lt.s32.totalorder %s636, 15
        %s638 = scalar_select %p637, %s636, 15
        %s639 = smul.addr %s638, 8
        %s640 = scalar_lea.vmem %s17, %s639
        %s641 = smul.u32 4, %s33
        %v643 = vld [vmem:[%s610] sm:$0xff]
        %v644 = vld [vmem:[%s610 + $0x8] sm:$0xff]
        %v645 = vld [vmem:[%s610 + $0x10] sm:$0xff]
        %v646 = vld [vmem:[%s610 + $0x18] sm:$0xff]
        %v647 = vld [vmem:[%s610 + $0x20] sm:$0xff]
        %v648 = vld [vmem:[%s610 + $0x28] sm:$0xff]
        %v649 = vld [vmem:[%s610 + $0x30] sm:$0xff]
        %v650 = vld [vmem:[%s610 + $0x38] sm:$0xff]
        %v651 = vld [vmem:[%s610 + $0x40] sm:$0xff]
        %v652 = vld [vmem:[%s610 + $0x48] sm:$0xff]
        %v653 = vld [vmem:[%s610 + $0x50] sm:$0xff]
        %v654 = vld [vmem:[%s610 + $0x58] sm:$0xff]
        %v655 = vld [vmem:[%s610 + $0x60] sm:$0xff]
        %v656 = vld [vmem:[%s610 + $0x68] sm:$0xff]
        %v657 = vld [vmem:[%s610 + $0x70] sm:$0xff]
        %v658 = vld [vmem:[%s610 + $0x78] sm:$0xff]
        %v659 = vld [vmem:[%s610 + $0x80] sm:$0xff]
        %v660 = vld [vmem:[%s610 + $0x88] sm:$0xff]
        %v661 = vld [vmem:[%s610 + $0x90] sm:$0xff]
        %v662 = vld [vmem:[%s610 + $0x98] sm:$0xff]
        %v663 = vld [vmem:[%s610 + $0xa0] sm:$0xff]
        %v664 = vld [vmem:[%s610 + $0xa8] sm:$0xff]
        %v665 = vld [vmem:[%s610 + $0xb0] sm:$0xff]
        %v666 = vld [vmem:[%s610 + $0xb8] sm:$0xff]
        %v667 = vld [vmem:[%s610 + $0xc0] sm:$0xff]
        %v668 = vld [vmem:[%s610 + $0xc8] sm:$0xff]
        %v669 = vld [vmem:[%s610 + $0xd0] sm:$0xff]
        %v670 = vld [vmem:[%s610 + $0xd8] sm:$0xff]
        %v671 = vld [vmem:[%s610 + $0xe0] sm:$0xff]
        %v672 = vld [vmem:[%s610 + $0xe8] sm:$0xff]
        %v673 = vld [vmem:[%s610 + $0xf0] sm:$0xff]
        %v674 = vld [vmem:[%s610 + $0xf8] sm:$0xff]
        %v675 = vld [vmem:[%s610 + $0x100] sm:$0xff]
        %v676 = vld [vmem:[%s610 + $0x108] sm:$0xff]
        %v677 = vld [vmem:[%s610 + $0x110] sm:$0xff]
        %v678 = vld [vmem:[%s610 + $0x118] sm:$0xff]
        %v679 = vld [vmem:[%s610 + $0x120] sm:$0xff]
        %v680 = vld [vmem:[%s610 + $0x128] sm:$0xff]
        %v681 = vld [vmem:[%s610 + $0x130] sm:$0xff]
        %v682 = vld [vmem:[%s610 + $0x138] sm:$0xff]
        %v683 = vld [vmem:[%s610 + $0x140] sm:$0xff]
        %v684 = vld [vmem:[%s610 + $0x148] sm:$0xff]
        %v685 = vld [vmem:[%s610 + $0x150] sm:$0xff]
        %v686 = vld [vmem:[%s610 + $0x158] sm:$0xff]
        %v687 = vld [vmem:[%s610 + $0x160] sm:$0xff]
        %v688 = vld [vmem:[%s610 + $0x168] sm:$0xff]
        %v689 = vld [vmem:[%s610 + $0x170] sm:$0xff]
        %v690 = vld [vmem:[%s610 + $0x178] sm:$0xff]
        %v691 = vld [vmem:[%s610 + $0x180] sm:$0xff]
        %v692 = vld [vmem:[%s610 + $0x188] sm:$0xff]
        %v693 = vld [vmem:[%s610 + $0x190] sm:$0xff]
        %v694 = vld [vmem:[%s610 + $0x198] sm:$0xff]
        %v695 = vld [vmem:[%s610 + $0x1a0] sm:$0xff]
        %v696 = vld [vmem:[%s610 + $0x1a8] sm:$0xff]
        %v697 = vld [vmem:[%s610 + $0x1b0] sm:$0xff]
        %v698 = vld [vmem:[%s610 + $0x1b8] sm:$0xff]
        %v699 = vld [vmem:[%s610 + $0x1c0] sm:$0xff]
        %v700 = vld [vmem:[%s610 + $0x1c8] sm:$0xff]
        %v701 = vld [vmem:[%s610 + $0x1d0] sm:$0xff]
        %v702 = vld [vmem:[%s610 + $0x1d8] sm:$0xff]
        %v703 = vld [vmem:[%s610 + $0x1e0] sm:$0xff]
        %v704 = vld [vmem:[%s610 + $0x1e8] sm:$0xff]
        %v705 = vld [vmem:[%s610 + $0x1f0] sm:$0xff]
        %v706 = vld [vmem:[%s610 + $0x1f8] sm:$0xff]
        %v707 = vld [vmem:[%s610 + $0x200] sm:$0xff]
        %v708 = vld [vmem:[%s610 + $0x208] sm:$0xff]
        %v709 = vld [vmem:[%s610 + $0x210] sm:$0xff]
        %v710 = vld [vmem:[%s610 + $0x218] sm:$0xff]
        %v711 = vld [vmem:[%s610 + $0x220] sm:$0xff]
        %v712 = vld [vmem:[%s610 + $0x228] sm:$0xff]
        %v713 = vld [vmem:[%s610 + $0x230] sm:$0xff]
        %v714 = vld [vmem:[%s610 + $0x238] sm:$0xff]
        %v715 = vld [vmem:[%s610 + $0x240] sm:$0xff]
        %v716 = vld [vmem:[%s610 + $0x248] sm:$0xff]
        %v717 = vld [vmem:[%s610 + $0x250] sm:$0xff]
        %v718 = vld [vmem:[%s610 + $0x258] sm:$0xff]
        %v719 = vld [vmem:[%s610 + $0x260] sm:$0xff]
        %v720 = vld [vmem:[%s610 + $0x268] sm:$0xff]
        %v721 = vld [vmem:[%s610 + $0x270] sm:$0xff]
        %v722 = vld [vmem:[%s610 + $0x278] sm:$0xff]
        %v723 = vld [vmem:[%s610 + $0x280] sm:$0xff]
        %v724 = vld [vmem:[%s610 + $0x288] sm:$0xff]
        %v725 = vld [vmem:[%s610 + $0x290] sm:$0xff]
        %v726 = vld [vmem:[%s610 + $0x298] sm:$0xff]
        %v727 = vld [vmem:[%s610 + $0x2a0] sm:$0xff]
        %v728 = vld [vmem:[%s610 + $0x2a8] sm:$0xff]
        %v729 = vld [vmem:[%s610 + $0x2b0] sm:$0xff]
        %v730 = vld [vmem:[%s610 + $0x2b8] sm:$0xff]
        %v731 = vld [vmem:[%s610 + $0x2c0] sm:$0xff]
        %v732 = vld [vmem:[%s610 + $0x2c8] sm:$0xff]
        %v733 = vld [vmem:[%s610 + $0x2d0] sm:$0xff]
        %v734 = vld [vmem:[%s610 + $0x2d8] sm:$0xff]
        %v735 = vld [vmem:[%s610 + $0x2e0] sm:$0xff]
        %v736 = vld [vmem:[%s610 + $0x2e8] sm:$0xff]
        %v737 = vld [vmem:[%s610 + $0x2f0] sm:$0xff]
        %v738 = vld [vmem:[%s610 + $0x2f8] sm:$0xff]
        %v739 = vld [vmem:[%s610 + $0x300] sm:$0xff]
        %v740 = vld [vmem:[%s610 + $0x308] sm:$0xff]
        %v741 = vld [vmem:[%s610 + $0x310] sm:$0xff]
        %v742 = vld [vmem:[%s610 + $0x318] sm:$0xff]
        %v743 = vld [vmem:[%s610 + $0x320] sm:$0xff]
        %v744 = vld [vmem:[%s610 + $0x328] sm:$0xff]
        %v745 = vld [vmem:[%s610 + $0x330] sm:$0xff]
        %v746 = vld [vmem:[%s610 + $0x338] sm:$0xff]
        %v747 = vld [vmem:[%s610 + $0x340] sm:$0xff]
        %v748 = vld [vmem:[%s610 + $0x348] sm:$0xff]
        %v749 = vld [vmem:[%s610 + $0x350] sm:$0xff]
        %v750 = vld [vmem:[%s610 + $0x358] sm:$0xff]
        %v751 = vld [vmem:[%s610 + $0x360] sm:$0xff]
        %v752 = vld [vmem:[%s610 + $0x368] sm:$0xff]
        %v753 = vld [vmem:[%s610 + $0x370] sm:$0xff]
        %v754 = vld [vmem:[%s610 + $0x378] sm:$0xff]
        %v755 = vld [vmem:[%s610 + $0x380] sm:$0xff]
        %v756 = vld [vmem:[%s610 + $0x388] sm:$0xff]
        %v757 = vld [vmem:[%s610 + $0x390] sm:$0xff]
        %v758 = vld [vmem:[%s610 + $0x398] sm:$0xff]
        %v759 = vld [vmem:[%s610 + $0x3a0] sm:$0xff]
        %v760 = vld [vmem:[%s610 + $0x3a8] sm:$0xff]
        %v761 = vld [vmem:[%s610 + $0x3b0] sm:$0xff]
        %v762 = vld [vmem:[%s610 + $0x3b8] sm:$0xff]
        %v763 = vld [vmem:[%s610 + $0x3c0] sm:$0xff]
        %v764 = vld [vmem:[%s610 + $0x3c8] sm:$0xff]
        %v765 = vld [vmem:[%s610 + $0x3d0] sm:$0xff]
        %v766 = vld [vmem:[%s610 + $0x3d8] sm:$0xff]
        %v767 = vld [vmem:[%s610 + $0x3e0] sm:$0xff]
        %v768 = vld [vmem:[%s610 + $0x3e8] sm:$0xff]
        %v769 = vld [vmem:[%s610 + $0x3f0] sm:$0xff]
        %v770 = vld [vmem:[%s610 + $0x3f8] sm:$0xff]
        %v771 = vld [vmem:[%s610 + $0x400] sm:$0xff]
        %v772 = vld [vmem:[%s610 + $0x408] sm:$0xff]
        %v773 = vld [vmem:[%s610 + $0x410] sm:$0xff]
        %v774 = vld [vmem:[%s610 + $0x418] sm:$0xff]
        %v775 = vld [vmem:[%s610 + $0x420] sm:$0xff]
        %v776 = vld [vmem:[%s610 + $0x428] sm:$0xff]
        %v777 = vld [vmem:[%s610 + $0x430] sm:$0xff]
        %v778 = vld [vmem:[%s610 + $0x438] sm:$0xff]
        %v779 = vld [vmem:[%s610 + $0x440] sm:$0xff]
        %v780 = vld [vmem:[%s610 + $0x448] sm:$0xff]
        %v781 = vld [vmem:[%s610 + $0x450] sm:$0xff]
        %v782 = vld [vmem:[%s610 + $0x458] sm:$0xff]
        %v783 = vld [vmem:[%s610 + $0x460] sm:$0xff]
        %v784 = vld [vmem:[%s610 + $0x468] sm:$0xff]
        %v785 = vld [vmem:[%s610 + $0x470] sm:$0xff]
        %v786 = vld [vmem:[%s610 + $0x478] sm:$0xff]
        %v787 = vld [vmem:[%s610 + $0x480] sm:$0xff]
        %v788 = vld [vmem:[%s610 + $0x488] sm:$0xff]
        %v789 = vld [vmem:[%s610 + $0x490] sm:$0xff]
        %v790 = vld [vmem:[%s610 + $0x498] sm:$0xff]
        %v791 = vld [vmem:[%s610 + $0x4a0] sm:$0xff]
        %v792 = vld [vmem:[%s610 + $0x4a8] sm:$0xff]
        %v793 = vld [vmem:[%s610 + $0x4b0] sm:$0xff]
        %v794 = vld [vmem:[%s610 + $0x4b8] sm:$0xff]
        %v795 = vld [vmem:[%s610 + $0x4c0] sm:$0xff]
        %v796 = vld [vmem:[%s610 + $0x4c8] sm:$0xff]
        %v797 = vld [vmem:[%s610 + $0x4d0] sm:$0xff]
        %v798 = vld [vmem:[%s610 + $0x4d8] sm:$0xff]
        %v799 = vld [vmem:[%s610 + $0x4e0] sm:$0xff]
        %v800 = vld [vmem:[%s610 + $0x4e8] sm:$0xff]
        %v801 = vld [vmem:[%s610 + $0x4f0] sm:$0xff]
        %v802 = vld [vmem:[%s610 + $0x4f8] sm:$0xff]
        %v803 = vld [vmem:[%s610 + $0x500] sm:$0xff]
        %v804 = vld [vmem:[%s610 + $0x508] sm:$0xff]
        %v805 = vld [vmem:[%s610 + $0x510] sm:$0xff]
        %v806 = vld [vmem:[%s610 + $0x518] sm:$0xff]
        %v807 = vld [vmem:[%s610 + $0x520] sm:$0xff]
        %v808 = vld [vmem:[%s610 + $0x528] sm:$0xff]
        %v809 = vld [vmem:[%s610 + $0x530] sm:$0xff]
        %v810 = vld [vmem:[%s610 + $0x538] sm:$0xff]
        %v811 = vld [vmem:[%s610 + $0x540] sm:$0xff]
        %v812 = vld [vmem:[%s610 + $0x548] sm:$0xff]
        %v813 = vld [vmem:[%s610 + $0x550] sm:$0xff]
        %v814 = vld [vmem:[%s610 + $0x558] sm:$0xff]
        %v815 = vld [vmem:[%s610 + $0x560] sm:$0xff]
        %v816 = vld [vmem:[%s610 + $0x568] sm:$0xff]
        %v817 = vld [vmem:[%s610 + $0x570] sm:$0xff]
        %v818 = vld [vmem:[%s610 + $0x578] sm:$0xff]
        %v819 = vld [vmem:[%s610 + $0x580] sm:$0xff]
        %v820 = vld [vmem:[%s610 + $0x588] sm:$0xff]
        %v821 = vld [vmem:[%s610 + $0x590] sm:$0xff]
        %v822 = vld [vmem:[%s610 + $0x598] sm:$0xff]
        %v823 = vld [vmem:[%s610 + $0x5a0] sm:$0xff]
        %v824 = vld [vmem:[%s610 + $0x5a8] sm:$0xff]
        %v825 = vld [vmem:[%s610 + $0x5b0] sm:$0xff]
        %v826 = vld [vmem:[%s610 + $0x5b8] sm:$0xff]
        %v827 = vld [vmem:[%s610 + $0x5c0] sm:$0xff]
        %v828 = vld [vmem:[%s610 + $0x5c8] sm:$0xff]
        %v829 = vld [vmem:[%s610 + $0x5d0] sm:$0xff]
        %v830 = vld [vmem:[%s610 + $0x5d8] sm:$0xff]
        %v831 = vld [vmem:[%s610 + $0x5e0] sm:$0xff]
        %v832 = vld [vmem:[%s610 + $0x5e8] sm:$0xff]
        %v833 = vld [vmem:[%s610 + $0x5f0] sm:$0xff]
        %v834 = vld [vmem:[%s610 + $0x5f8] sm:$0xff]
        %v835 = vld [vmem:[%s610 + $0x600] sm:$0xff]
        %v836 = vld [vmem:[%s610 + $0x608] sm:$0xff]
        %v837 = vld [vmem:[%s610 + $0x610] sm:$0xff]
        %v838 = vld [vmem:[%s610 + $0x618] sm:$0xff]
        %v839 = vld [vmem:[%s610 + $0x620] sm:$0xff]
        %v840 = vld [vmem:[%s610 + $0x628] sm:$0xff]
        %v841 = vld [vmem:[%s610 + $0x630] sm:$0xff]
        %v842 = vld [vmem:[%s610 + $0x638] sm:$0xff]
        %v843 = vld [vmem:[%s610 + $0x640] sm:$0xff]
        %v844 = vld [vmem:[%s610 + $0x648] sm:$0xff]
        %v845 = vld [vmem:[%s610 + $0x650] sm:$0xff]
        %v846 = vld [vmem:[%s610 + $0x658] sm:$0xff]
        %v847 = vld [vmem:[%s610 + $0x660] sm:$0xff]
        %v848 = vld [vmem:[%s610 + $0x668] sm:$0xff]
        %v849 = vld [vmem:[%s610 + $0x670] sm:$0xff]
        %v850 = vld [vmem:[%s610 + $0x678] sm:$0xff]
        %v851 = vld [vmem:[%s610 + $0x680] sm:$0xff]
        %v852 = vld [vmem:[%s610 + $0x688] sm:$0xff]
        %v853 = vld [vmem:[%s610 + $0x690] sm:$0xff]
        %v854 = vld [vmem:[%s610 + $0x698] sm:$0xff]
        %v855 = vld [vmem:[%s610 + $0x6a0] sm:$0xff]
        %v856 = vld [vmem:[%s610 + $0x6a8] sm:$0xff]
        %v857 = vld [vmem:[%s610 + $0x6b0] sm:$0xff]
        %v858 = vld [vmem:[%s610 + $0x6b8] sm:$0xff]
        %v859 = vld [vmem:[%s610 + $0x6c0] sm:$0xff]
        %v860 = vld [vmem:[%s610 + $0x6c8] sm:$0xff]
        %v861 = vld [vmem:[%s610 + $0x6d0] sm:$0xff]
        %v862 = vld [vmem:[%s610 + $0x6d8] sm:$0xff]
        %v863 = vld [vmem:[%s610 + $0x6e0] sm:$0xff]
        %v864 = vld [vmem:[%s610 + $0x6e8] sm:$0xff]
        %v865 = vld [vmem:[%s610 + $0x6f0] sm:$0xff]
        %v866 = vld [vmem:[%s610 + $0x6f8] sm:$0xff]
        %v867 = vld [vmem:[%s610 + $0x700] sm:$0xff]
        %v868 = vld [vmem:[%s610 + $0x708] sm:$0xff]
        %v869 = vld [vmem:[%s610 + $0x710] sm:$0xff]
        %v870 = vld [vmem:[%s610 + $0x718] sm:$0xff]
        %v871 = vld [vmem:[%s610 + $0x720] sm:$0xff]
        %v872 = vld [vmem:[%s610 + $0x728] sm:$0xff]
        %v873 = vld [vmem:[%s610 + $0x730] sm:$0xff]
        %v874 = vld [vmem:[%s610 + $0x738] sm:$0xff]
        %v875 = vld [vmem:[%s610 + $0x740] sm:$0xff]
        %v876 = vld [vmem:[%s610 + $0x748] sm:$0xff]
        %v877 = vld [vmem:[%s610 + $0x750] sm:$0xff]
        %v878 = vld [vmem:[%s610 + $0x758] sm:$0xff]
        %v879 = vld [vmem:[%s610 + $0x760] sm:$0xff]
        %v880 = vld [vmem:[%s610 + $0x768] sm:$0xff]
        %v881 = vld [vmem:[%s610 + $0x770] sm:$0xff]
        %v882 = vld [vmem:[%s610 + $0x778] sm:$0xff]
        %v883 = vld [vmem:[%s610 + $0x780] sm:$0xff]
        %v884 = vld [vmem:[%s610 + $0x788] sm:$0xff]
        %v885 = vld [vmem:[%s610 + $0x790] sm:$0xff]
        %v886 = vld [vmem:[%s610 + $0x798] sm:$0xff]
        %v887 = vld [vmem:[%s610 + $0x7a0] sm:$0xff]
        %v888 = vld [vmem:[%s610 + $0x7a8] sm:$0xff]
        %v889 = vld [vmem:[%s610 + $0x7b0] sm:$0xff]
        %v890 = vld [vmem:[%s610 + $0x7b8] sm:$0xff]
        %v891 = vld [vmem:[%s610 + $0x7c0] sm:$0xff]
        %v892 = vld [vmem:[%s610 + $0x7c8] sm:$0xff]
        %v893 = vld [vmem:[%s610 + $0x7d0] sm:$0xff]
        %v894 = vld [vmem:[%s610 + $0x7d8] sm:$0xff]
        %v895 = vld [vmem:[%s610 + $0x7e0] sm:$0xff]
        %v896 = vld [vmem:[%s610 + $0x7e8] sm:$0xff]
        %v897 = vld [vmem:[%s610 + $0x7f0] sm:$0xff]
        %v898 = vld [vmem:[%s610 + $0x7f8] sm:$0xff]
        %v899 = vld [vmem:[%s1] sm:$0x1]
        %v901 = vlaneseq
        %v902 = vshrl.u32 %v901, 7
        %v903 = vsub.s32 0, %v902
        %v904 = vrot.slane %v899, %v903
        %v906 = vmul.f32 %v643, %v904
        %v907 = vmul.f32 %v644, %v904
        %v908 = vmul.f32 %v645, %v904
        %v909 = vmul.f32 %v646, %v904
        %v910 = vmul.f32 %v647, %v904
        %v911 = vmul.f32 %v648, %v904
        %v912 = vmul.f32 %v649, %v904
        %v913 = vmul.f32 %v650, %v904
        %v914 = vmul.f32 %v651, %v904
        %v915 = vmul.f32 %v652, %v904
        %v916 = vmul.f32 %v653, %v904
        %v917 = vmul.f32 %v654, %v904
        %v918 = vmul.f32 %v655, %v904
        %v919 = vmul.f32 %v656, %v904
        %v920 = vmul.f32 %v657, %v904
        %v921 = vmul.f32 %v658, %v904
        %v922 = vmul.f32 %v659, %v904
        %v923 = vmul.f32 %v660, %v904
        %v924 = vmul.f32 %v661, %v904
        %v925 = vmul.f32 %v662, %v904
        %v926 = vmul.f32 %v663, %v904
        %v927 = vmul.f32 %v664, %v904
        %v928 = vmul.f32 %v665, %v904
        %v929 = vmul.f32 %v666, %v904
        %v930 = vmul.f32 %v667, %v904
        %v931 = vmul.f32 %v668, %v904
        %v932 = vmul.f32 %v669, %v904
        %v933 = vmul.f32 %v670, %v904
        %v934 = vmul.f32 %v671, %v904
        %v935 = vmul.f32 %v672, %v904
        %v936 = vmul.f32 %v673, %v904
        %v937 = vmul.f32 %v674, %v904
        %v938 = vmul.f32 %v675, %v904
        %v939 = vmul.f32 %v676, %v904
        %v940 = vmul.f32 %v677, %v904
        %v941 = vmul.f32 %v678, %v904
        %v942 = vmul.f32 %v679, %v904
        %v943 = vmul.f32 %v680, %v904
        %v944 = vmul.f32 %v681, %v904
        %v945 = vmul.f32 %v682, %v904
        %v946 = vmul.f32 %v683, %v904
        %v947 = vmul.f32 %v684, %v904
        %v948 = vmul.f32 %v685, %v904
        %v949 = vmul.f32 %v686, %v904
        %v950 = vmul.f32 %v687, %v904
        %v951 = vmul.f32 %v688, %v904
        %v952 = vmul.f32 %v689, %v904
        %v953 = vmul.f32 %v690, %v904
        %v954 = vmul.f32 %v691, %v904
        %v955 = vmul.f32 %v692, %v904
        %v956 = vmul.f32 %v693, %v904
        %v957 = vmul.f32 %v694, %v904
        %v958 = vmul.f32 %v695, %v904
        %v959 = vmul.f32 %v696, %v904
        %v960 = vmul.f32 %v697, %v904
        %v961 = vmul.f32 %v698, %v904
        %v962 = vmul.f32 %v699, %v904
        %v963 = vmul.f32 %v700, %v904
        %v964 = vmul.f32 %v701, %v904
        %v965 = vmul.f32 %v702, %v904
        %v966 = vmul.f32 %v703, %v904
        %v967 = vmul.f32 %v704, %v904
        %v968 = vmul.f32 %v705, %v904
        %v969 = vmul.f32 %v706, %v904
        %v970 = vmul.f32 %v707, %v904
        %v971 = vmul.f32 %v708, %v904
        %v972 = vmul.f32 %v709, %v904
        %v973 = vmul.f32 %v710, %v904
        %v974 = vmul.f32 %v711, %v904
        %v975 = vmul.f32 %v712, %v904
        %v976 = vmul.f32 %v713, %v904
        %v977 = vmul.f32 %v714, %v904
        %v978 = vmul.f32 %v715, %v904
        %v979 = vmul.f32 %v716, %v904
        %v980 = vmul.f32 %v717, %v904
        %v981 = vmul.f32 %v718, %v904
        %v982 = vmul.f32 %v719, %v904
        %v983 = vmul.f32 %v720, %v904
        %v984 = vmul.f32 %v721, %v904
        %v985 = vmul.f32 %v722, %v904
        %v986 = vmul.f32 %v723, %v904
        %v987 = vmul.f32 %v724, %v904
        %v988 = vmul.f32 %v725, %v904
        %v989 = vmul.f32 %v726, %v904
        %v990 = vmul.f32 %v727, %v904
        %v991 = vmul.f32 %v728, %v904
        %v992 = vmul.f32 %v729, %v904
        %v993 = vmul.f32 %v730, %v904
        %v994 = vmul.f32 %v731, %v904
        %v995 = vmul.f32 %v732, %v904
        %v996 = vmul.f32 %v733, %v904
        %v997 = vmul.f32 %v734, %v904
        %v998 = vmul.f32 %v735, %v904
        %v999 = vmul.f32 %v736, %v904
        %v1000 = vmul.f32 %v737, %v904
        %v1001 = vmul.f32 %v738, %v904
        %v1002 = vmul.f32 %v739, %v904
        %v1003 = vmul.f32 %v740, %v904
        %v1004 = vmul.f32 %v741, %v904
        %v1005 = vmul.f32 %v742, %v904
        %v1006 = vmul.f32 %v743, %v904
        %v1007 = vmul.f32 %v744, %v904
        %v1008 = vmul.f32 %v745, %v904
        %v1009 = vmul.f32 %v746, %v904
        %v1010 = vmul.f32 %v747, %v904
        %v1011 = vmul.f32 %v748, %v904
        %v1012 = vmul.f32 %v749, %v904
        %v1013 = vmul.f32 %v750, %v904
        %v1014 = vmul.f32 %v751, %v904
        %v1015 = vmul.f32 %v752, %v904
        %v1016 = vmul.f32 %v753, %v904
        %v1017 = vmul.f32 %v754, %v904
        %v1018 = vmul.f32 %v755, %v904
        %v1019 = vmul.f32 %v756, %v904
        %v1020 = vmul.f32 %v757, %v904
        %v1021 = vmul.f32 %v758, %v904
        %v1022 = vmul.f32 %v759, %v904
        %v1023 = vmul.f32 %v760, %v904
        %v1024 = vmul.f32 %v761, %v904
        %v1025 = vmul.f32 %v762, %v904
        %v1026 = vmul.f32 %v763, %v904
        %v1027 = vmul.f32 %v764, %v904
        %v1028 = vmul.f32 %v765, %v904
        %v1029 = vmul.f32 %v766, %v904
        %v1030 = vmul.f32 %v767, %v904
        %v1031 = vmul.f32 %v768, %v904
        %v1032 = vmul.f32 %v769, %v904
        %v1033 = vmul.f32 %v770, %v904
        %v1034 = vmul.f32 %v771, %v904
        %v1035 = vmul.f32 %v772, %v904
        %v1036 = vmul.f32 %v773, %v904
        %v1037 = vmul.f32 %v774, %v904
        %v1038 = vmul.f32 %v775, %v904
        %v1039 = vmul.f32 %v776, %v904
        %v1040 = vmul.f32 %v777, %v904
        %v1041 = vmul.f32 %v778, %v904
        %v1042 = vmul.f32 %v779, %v904
        %v1043 = vmul.f32 %v780, %v904
        %v1044 = vmul.f32 %v781, %v904
        %v1045 = vmul.f32 %v782, %v904
        %v1046 = vmul.f32 %v783, %v904
        %v1047 = vmul.f32 %v784, %v904
        %v1048 = vmul.f32 %v785, %v904
        %v1049 = vmul.f32 %v786, %v904
        %v1050 = vmul.f32 %v787, %v904
        %v1051 = vmul.f32 %v788, %v904
        %v1052 = vmul.f32 %v789, %v904
        %v1053 = vmul.f32 %v790, %v904
        %v1054 = vmul.f32 %v791, %v904
        %v1055 = vmul.f32 %v792, %v904
        %v1056 = vmul.f32 %v793, %v904
        %v1057 = vmul.f32 %v794, %v904
        %v1058 = vmul.f32 %v795, %v904
        %v1059 = vmul.f32 %v796, %v904
        %v1060 = vmul.f32 %v797, %v904
        %v1061 = vmul.f32 %v798, %v904
        %v1062 = vmul.f32 %v799, %v904
        %v1063 = vmul.f32 %v800, %v904
        %v1064 = vmul.f32 %v801, %v904
        %v1065 = vmul.f32 %v802, %v904
        %v1066 = vmul.f32 %v803, %v904
        %v1067 = vmul.f32 %v804, %v904
        %v1068 = vmul.f32 %v805, %v904
        %v1069 = vmul.f32 %v806, %v904
        %v1070 = vmul.f32 %v807, %v904
        %v1071 = vmul.f32 %v808, %v904
        %v1072 = vmul.f32 %v809, %v904
        %v1073 = vmul.f32 %v810, %v904
        %v1074 = vmul.f32 %v811, %v904
        %v1075 = vmul.f32 %v812, %v904
        %v1076 = vmul.f32 %v813, %v904
        %v1077 = vmul.f32 %v814, %v904
        %v1078 = vmul.f32 %v815, %v904
        %v1079 = vmul.f32 %v816, %v904
        %v1080 = vmul.f32 %v817, %v904
        %v1081 = vmul.f32 %v818, %v904
        %v1082 = vmul.f32 %v819, %v904
        %v1083 = vmul.f32 %v820, %v904
        %v1084 = vmul.f32 %v821, %v904
        %v1085 = vmul.f32 %v822, %v904
        %v1086 = vmul.f32 %v823, %v904
        %v1087 = vmul.f32 %v824, %v904
        %v1088 = vmul.f32 %v825, %v904
        %v1089 = vmul.f32 %v826, %v904
        %v1090 = vmul.f32 %v827, %v904
        %v1091 = vmul.f32 %v828, %v904
        %v1092 = vmul.f32 %v829, %v904
        %v1093 = vmul.f32 %v830, %v904
        %v1094 = vmul.f32 %v831, %v904
        %v1095 = vmul.f32 %v832, %v904
        %v1096 = vmul.f32 %v833, %v904
        %v1097 = vmul.f32 %v834, %v904
        %v1098 = vmul.f32 %v835, %v904
        %v1099 = vmul.f32 %v836, %v904
        %v1100 = vmul.f32 %v837, %v904
        %v1101 = vmul.f32 %v838, %v904
        %v1102 = vmul.f32 %v839, %v904
        %v1103 = vmul.f32 %v840, %v904
        %v1104 = vmul.f32 %v841, %v904
        %v1105 = vmul.f32 %v842, %v904
        %v1106 = vmul.f32 %v843, %v904
        %v1107 = vmul.f32 %v844, %v904
        %v1108 = vmul.f32 %v845, %v904
        %v1109 = vmul.f32 %v846, %v904
        %v1110 = vmul.f32 %v847, %v904
        %v1111 = vmul.f32 %v848, %v904
        %v1112 = vmul.f32 %v849, %v904
        %v1113 = vmul.f32 %v850, %v904
        %v1114 = vmul.f32 %v851, %v904
        %v1115 = vmul.f32 %v852, %v904
        %v1116 = vmul.f32 %v853, %v904
        %v1117 = vmul.f32 %v854, %v904
        %v1118 = vmul.f32 %v855, %v904
        %v1119 = vmul.f32 %v856, %v904
        %v1120 = vmul.f32 %v857, %v904
        %v1121 = vmul.f32 %v858, %v904
        %v1122 = vmul.f32 %v859, %v904
        %v1123 = vmul.f32 %v860, %v904
        %v1124 = vmul.f32 %v861, %v904
        %v1125 = vmul.f32 %v862, %v904
        %v1126 = vmul.f32 %v863, %v904
        %v1127 = vmul.f32 %v864, %v904
        %v1128 = vmul.f32 %v865, %v904
        %v1129 = vmul.f32 %v866, %v904
        %v1130 = vmul.f32 %v867, %v904
        %v1131 = vmul.f32 %v868, %v904
        %v1132 = vmul.f32 %v869, %v904
        %v1133 = vmul.f32 %v870, %v904
        %v1134 = vmul.f32 %v871, %v904
        %v1135 = vmul.f32 %v872, %v904
        %v1136 = vmul.f32 %v873, %v904
        %v1137 = vmul.f32 %v874, %v904
        %v1138 = vmul.f32 %v875, %v904
        %v1139 = vmul.f32 %v876, %v904
        %v1140 = vmul.f32 %v877, %v904
        %v1141 = vmul.f32 %v878, %v904
        %v1142 = vmul.f32 %v879, %v904
        %v1143 = vmul.f32 %v880, %v904
        %v1144 = vmul.f32 %v881, %v904
        %v1145 = vmul.f32 %v882, %v904
        %v1146 = vmul.f32 %v883, %v904
        %v1147 = vmul.f32 %v884, %v904
        %v1148 = vmul.f32 %v885, %v904
        %v1149 = vmul.f32 %v886, %v904
        %v1150 = vmul.f32 %v887, %v904
        %v1151 = vmul.f32 %v888, %v904
        %v1152 = vmul.f32 %v889, %v904
        %v1153 = vmul.f32 %v890, %v904
        %v1154 = vmul.f32 %v891, %v904
        %v1155 = vmul.f32 %v892, %v904
        %v1156 = vmul.f32 %v893, %v904
        %v1157 = vmul.f32 %v894, %v904
        %v1158 = vmul.f32 %v895, %v904
        %v1159 = vmul.f32 %v896, %v904
        %v1160 = vmul.f32 %v897, %v904
        %v1161 = vmul.f32 %v898, %v904
        %v1162 = vld [vmem:[%s2] sm:$0x1]
        %v1164 = vlaneseq
        %v1165 = vshrl.u32 %v1164, 7
        %v1166 = vsub.s32 0, %v1165
        %v1167 = vrot.slane %v1162, %v1166
        %v1169 = vadd.f32 %v906, %v1167
        %v1170 = vadd.f32 %v907, %v1167
        %v1171 = vadd.f32 %v908, %v1167
        %v1172 = vadd.f32 %v909, %v1167
        %v1173 = vadd.f32 %v910, %v1167
        %v1174 = vadd.f32 %v911, %v1167
        %v1175 = vadd.f32 %v912, %v1167
        %v1176 = vadd.f32 %v913, %v1167
        %v1177 = vadd.f32 %v914, %v1167
        %v1178 = vadd.f32 %v915, %v1167
        %v1179 = vadd.f32 %v916, %v1167
        %v1180 = vadd.f32 %v917, %v1167
        %v1181 = vadd.f32 %v918, %v1167
        %v1182 = vadd.f32 %v919, %v1167
        %v1183 = vadd.f32 %v920, %v1167
        %v1184 = vadd.f32 %v921, %v1167
        %v1185 = vadd.f32 %v922, %v1167
        %v1186 = vadd.f32 %v923, %v1167
        %v1187 = vadd.f32 %v924, %v1167
        %v1188 = vadd.f32 %v925, %v1167
        %v1189 = vadd.f32 %v926, %v1167
        %v1190 = vadd.f32 %v927, %v1167
        %v1191 = vadd.f32 %v928, %v1167
        %v1192 = vadd.f32 %v929, %v1167
        %v1193 = vadd.f32 %v930, %v1167
        %v1194 = vadd.f32 %v931, %v1167
        %v1195 = vadd.f32 %v932, %v1167
        %v1196 = vadd.f32 %v933, %v1167
        %v1197 = vadd.f32 %v934, %v1167
        %v1198 = vadd.f32 %v935, %v1167
        %v1199 = vadd.f32 %v936, %v1167
        %v1200 = vadd.f32 %v937, %v1167
        %v1201 = vadd.f32 %v938, %v1167
        %v1202 = vadd.f32 %v939, %v1167
        %v1203 = vadd.f32 %v940, %v1167
        %v1204 = vadd.f32 %v941, %v1167
        %v1205 = vadd.f32 %v942, %v1167
        %v1206 = vadd.f32 %v943, %v1167
        %v1207 = vadd.f32 %v944, %v1167
        %v1208 = vadd.f32 %v945, %v1167
        %v1209 = vadd.f32 %v946, %v1167
        %v1210 = vadd.f32 %v947, %v1167
        %v1211 = vadd.f32 %v948, %v1167
        %v1212 = vadd.f32 %v949, %v1167
        %v1213 = vadd.f32 %v950, %v1167
        %v1214 = vadd.f32 %v951, %v1167
        %v1215 = vadd.f32 %v952, %v1167
        %v1216 = vadd.f32 %v953, %v1167
        %v1217 = vadd.f32 %v954, %v1167
        %v1218 = vadd.f32 %v955, %v1167
        %v1219 = vadd.f32 %v956, %v1167
        %v1220 = vadd.f32 %v957, %v1167
        %v1221 = vadd.f32 %v958, %v1167
        %v1222 = vadd.f32 %v959, %v1167
        %v1223 = vadd.f32 %v960, %v1167
        %v1224 = vadd.f32 %v961, %v1167
        %v1225 = vadd.f32 %v962, %v1167
        %v1226 = vadd.f32 %v963, %v1167
        %v1227 = vadd.f32 %v964, %v1167
        %v1228 = vadd.f32 %v965, %v1167
        %v1229 = vadd.f32 %v966, %v1167
        %v1230 = vadd.f32 %v967, %v1167
        %v1231 = vadd.f32 %v968, %v1167
        %v1232 = vadd.f32 %v969, %v1167
        %v1233 = vadd.f32 %v970, %v1167
        %v1234 = vadd.f32 %v971, %v1167
        %v1235 = vadd.f32 %v972, %v1167
        %v1236 = vadd.f32 %v973, %v1167
        %v1237 = vadd.f32 %v974, %v1167
        %v1238 = vadd.f32 %v975, %v1167
        %v1239 = vadd.f32 %v976, %v1167
        %v1240 = vadd.f32 %v977, %v1167
        %v1241 = vadd.f32 %v978, %v1167
        %v1242 = vadd.f32 %v979, %v1167
        %v1243 = vadd.f32 %v980, %v1167
        %v1244 = vadd.f32 %v981, %v1167
        %v1245 = vadd.f32 %v982, %v1167
        %v1246 = vadd.f32 %v983, %v1167
        %v1247 = vadd.f32 %v984, %v1167
        %v1248 = vadd.f32 %v985, %v1167
        %v1249 = vadd.f32 %v986, %v1167
        %v1250 = vadd.f32 %v987, %v1167
        %v1251 = vadd.f32 %v988, %v1167
        %v1252 = vadd.f32 %v989, %v1167
        %v1253 = vadd.f32 %v990, %v1167
        %v1254 = vadd.f32 %v991, %v1167
        %v1255 = vadd.f32 %v992, %v1167
        %v1256 = vadd.f32 %v993, %v1167
        %v1257 = vadd.f32 %v994, %v1167
        %v1258 = vadd.f32 %v995, %v1167
        %v1259 = vadd.f32 %v996, %v1167
        %v1260 = vadd.f32 %v997, %v1167
        %v1261 = vadd.f32 %v998, %v1167
        %v1262 = vadd.f32 %v999, %v1167
        %v1263 = vadd.f32 %v1000, %v1167
        %v1264 = vadd.f32 %v1001, %v1167
        %v1265 = vadd.f32 %v1002, %v1167
        %v1266 = vadd.f32 %v1003, %v1167
        %v1267 = vadd.f32 %v1004, %v1167
        %v1268 = vadd.f32 %v1005, %v1167
        %v1269 = vadd.f32 %v1006, %v1167
        %v1270 = vadd.f32 %v1007, %v1167
        %v1271 = vadd.f32 %v1008, %v1167
        %v1272 = vadd.f32 %v1009, %v1167
        %v1273 = vadd.f32 %v1010, %v1167
        %v1274 = vadd.f32 %v1011, %v1167
        %v1275 = vadd.f32 %v1012, %v1167
        %v1276 = vadd.f32 %v1013, %v1167
        %v1277 = vadd.f32 %v1014, %v1167
        %v1278 = vadd.f32 %v1015, %v1167
        %v1279 = vadd.f32 %v1016, %v1167
        %v1280 = vadd.f32 %v1017, %v1167
        %v1281 = vadd.f32 %v1018, %v1167
        %v1282 = vadd.f32 %v1019, %v1167
        %v1283 = vadd.f32 %v1020, %v1167
        %v1284 = vadd.f32 %v1021, %v1167
        %v1285 = vadd.f32 %v1022, %v1167
        %v1286 = vadd.f32 %v1023, %v1167
        %v1287 = vadd.f32 %v1024, %v1167
        %v1288 = vadd.f32 %v1025, %v1167
        %v1289 = vadd.f32 %v1026, %v1167
        %v1290 = vadd.f32 %v1027, %v1167
        %v1291 = vadd.f32 %v1028, %v1167
        %v1292 = vadd.f32 %v1029, %v1167
        %v1293 = vadd.f32 %v1030, %v1167
        %v1294 = vadd.f32 %v1031, %v1167
        %v1295 = vadd.f32 %v1032, %v1167
        %v1296 = vadd.f32 %v1033, %v1167
        %v1297 = vadd.f32 %v1034, %v1167
        %v1298 = vadd.f32 %v1035, %v1167
        %v1299 = vadd.f32 %v1036, %v1167
        %v1300 = vadd.f32 %v1037, %v1167
        %v1301 = vadd.f32 %v1038, %v1167
        %v1302 = vadd.f32 %v1039, %v1167
        %v1303 = vadd.f32 %v1040, %v1167
        %v1304 = vadd.f32 %v1041, %v1167
        %v1305 = vadd.f32 %v1042, %v1167
        %v1306 = vadd.f32 %v1043, %v1167
        %v1307 = vadd.f32 %v1044, %v1167
        %v1308 = vadd.f32 %v1045, %v1167
        %v1309 = vadd.f32 %v1046, %v1167
        %v1310 = vadd.f32 %v1047, %v1167
        %v1311 = vadd.f32 %v1048, %v1167
        %v1312 = vadd.f32 %v1049, %v1167
        %v1313 = vadd.f32 %v1050, %v1167
        %v1314 = vadd.f32 %v1051, %v1167
        %v1315 = vadd.f32 %v1052, %v1167
        %v1316 = vadd.f32 %v1053, %v1167
        %v1317 = vadd.f32 %v1054, %v1167
        %v1318 = vadd.f32 %v1055, %v1167
        %v1319 = vadd.f32 %v1056, %v1167
        %v1320 = vadd.f32 %v1057, %v1167
        %v1321 = vadd.f32 %v1058, %v1167
        %v1322 = vadd.f32 %v1059, %v1167
        %v1323 = vadd.f32 %v1060, %v1167
        %v1324 = vadd.f32 %v1061, %v1167
        %v1325 = vadd.f32 %v1062, %v1167
        %v1326 = vadd.f32 %v1063, %v1167
        %v1327 = vadd.f32 %v1064, %v1167
        %v1328 = vadd.f32 %v1065, %v1167
        %v1329 = vadd.f32 %v1066, %v1167
        %v1330 = vadd.f32 %v1067, %v1167
        %v1331 = vadd.f32 %v1068, %v1167
        %v1332 = vadd.f32 %v1069, %v1167
        %v1333 = vadd.f32 %v1070, %v1167
        %v1334 = vadd.f32 %v1071, %v1167
        %v1335 = vadd.f32 %v1072, %v1167
        %v1336 = vadd.f32 %v1073, %v1167
        %v1337 = vadd.f32 %v1074, %v1167
        %v1338 = vadd.f32 %v1075, %v1167
        %v1339 = vadd.f32 %v1076, %v1167
        %v1340 = vadd.f32 %v1077, %v1167
        %v1341 = vadd.f32 %v1078, %v1167
        %v1342 = vadd.f32 %v1079, %v1167
        %v1343 = vadd.f32 %v1080, %v1167
        %v1344 = vadd.f32 %v1081, %v1167
        %v1345 = vadd.f32 %v1082, %v1167
        %v1346 = vadd.f32 %v1083, %v1167
        %v1347 = vadd.f32 %v1084, %v1167
        %v1348 = vadd.f32 %v1085, %v1167
        %v1349 = vadd.f32 %v1086, %v1167
        %v1350 = vadd.f32 %v1087, %v1167
        %v1351 = vadd.f32 %v1088, %v1167
        %v1352 = vadd.f32 %v1089, %v1167
        %v1353 = vadd.f32 %v1090, %v1167
        %v1354 = vadd.f32 %v1091, %v1167
        %v1355 = vadd.f32 %v1092, %v1167
        %v1356 = vadd.f32 %v1093, %v1167
        %v1357 = vadd.f32 %v1094, %v1167
        %v1358 = vadd.f32 %v1095, %v1167
        %v1359 = vadd.f32 %v1096, %v1167
        %v1360 = vadd.f32 %v1097, %v1167
        %v1361 = vadd.f32 %v1098, %v1167
        %v1362 = vadd.f32 %v1099, %v1167
        %v1363 = vadd.f32 %v1100, %v1167
        %v1364 = vadd.f32 %v1101, %v1167
        %v1365 = vadd.f32 %v1102, %v1167
        %v1366 = vadd.f32 %v1103, %v1167
        %v1367 = vadd.f32 %v1104, %v1167
        %v1368 = vadd.f32 %v1105, %v1167
        %v1369 = vadd.f32 %v1106, %v1167
        %v1370 = vadd.f32 %v1107, %v1167
        %v1371 = vadd.f32 %v1108, %v1167
        %v1372 = vadd.f32 %v1109, %v1167
        %v1373 = vadd.f32 %v1110, %v1167
        %v1374 = vadd.f32 %v1111, %v1167
        %v1375 = vadd.f32 %v1112, %v1167
        %v1376 = vadd.f32 %v1113, %v1167
        %v1377 = vadd.f32 %v1114, %v1167
        %v1378 = vadd.f32 %v1115, %v1167
        %v1379 = vadd.f32 %v1116, %v1167
        %v1380 = vadd.f32 %v1117, %v1167
        %v1381 = vadd.f32 %v1118, %v1167
        %v1382 = vadd.f32 %v1119, %v1167
        %v1383 = vadd.f32 %v1120, %v1167
        %v1384 = vadd.f32 %v1121, %v1167
        %v1385 = vadd.f32 %v1122, %v1167
        %v1386 = vadd.f32 %v1123, %v1167
        %v1387 = vadd.f32 %v1124, %v1167
        %v1388 = vadd.f32 %v1125, %v1167
        %v1389 = vadd.f32 %v1126, %v1167
        %v1390 = vadd.f32 %v1127, %v1167
        %v1391 = vadd.f32 %v1128, %v1167
        %v1392 = vadd.f32 %v1129, %v1167
        %v1393 = vadd.f32 %v1130, %v1167
        %v1394 = vadd.f32 %v1131, %v1167
        %v1395 = vadd.f32 %v1132, %v1167
        %v1396 = vadd.f32 %v1133, %v1167
        %v1397 = vadd.f32 %v1134, %v1167
        %v1398 = vadd.f32 %v1135, %v1167
        %v1399 = vadd.f32 %v1136, %v1167
        %v1400 = vadd.f32 %v1137, %v1167
        %v1401 = vadd.f32 %v1138, %v1167
        %v1402 = vadd.f32 %v1139, %v1167
        %v1403 = vadd.f32 %v1140, %v1167
        %v1404 = vadd.f32 %v1141, %v1167
        %v1405 = vadd.f32 %v1142, %v1167
        %v1406 = vadd.f32 %v1143, %v1167
        %v1407 = vadd.f32 %v1144, %v1167
        %v1408 = vadd.f32 %v1145, %v1167
        %v1409 = vadd.f32 %v1146, %v1167
        %v1410 = vadd.f32 %v1147, %v1167
        %v1411 = vadd.f32 %v1148, %v1167
        %v1412 = vadd.f32 %v1149, %v1167
        %v1413 = vadd.f32 %v1150, %v1167
        %v1414 = vadd.f32 %v1151, %v1167
        %v1415 = vadd.f32 %v1152, %v1167
        %v1416 = vadd.f32 %v1153, %v1167
        %v1417 = vadd.f32 %v1154, %v1167
        %v1418 = vadd.f32 %v1155, %v1167
        %v1419 = vadd.f32 %v1156, %v1167
        %v1420 = vadd.f32 %v1157, %v1167
        %v1421 = vadd.f32 %v1158, %v1167
        %v1422 = vadd.f32 %v1159, %v1167
        %v1423 = vadd.f32 %v1160, %v1167
        %v1424 = vadd.f32 %v1161, %v1167
        %vm1425 = vcmask 23552
        %1426 = vst.msk [vmem:[%s616] sm:$0xff] %vm1425, %v1169
        %1427 = vst.msk [vmem:[%s616 + $0x8] sm:$0xff] %vm1425, %v1170
        %1428 = vst.msk [vmem:[%s616 + $0x10] sm:$0xff] %vm1425, %v1171
        %1429 = vst.msk [vmem:[%s616 + $0x18] sm:$0xff] %vm1425, %v1172
        %1430 = vst.msk [vmem:[%s616 + $0x20] sm:$0xff] %vm1425, %v1173
        %1431 = vst.msk [vmem:[%s616 + $0x28] sm:$0xff] %vm1425, %v1174
        %1432 = vst.msk [vmem:[%s616 + $0x30] sm:$0xff] %vm1425, %v1175
        %1433 = vst.msk [vmem:[%s616 + $0x38] sm:$0xff] %vm1425, %v1176
        %1434 = vst.msk [vmem:[%s616 + $0x40] sm:$0xff] %vm1425, %v1177
        %1435 = vst.msk [vmem:[%s616 + $0x48] sm:$0xff] %vm1425, %v1178
        %1436 = vst.msk [vmem:[%s616 + $0x50] sm:$0xff] %vm1425, %v1179
        %1437 = vst.msk [vmem:[%s616 + $0x58] sm:$0xff] %vm1425, %v1180
        %1438 = vst.msk [vmem:[%s616 + $0x60] sm:$0xff] %vm1425, %v1181
        %1439 = vst.msk [vmem:[%s616 + $0x68] sm:$0xff] %vm1425, %v1182
        %1440 = vst.msk [vmem:[%s616 + $0x70] sm:$0xff] %vm1425, %v1183
        %1441 = vst.msk [vmem:[%s616 + $0x78] sm:$0xff] %vm1425, %v1184
        %1442 = vst.msk [vmem:[%s616 + $0x80] sm:$0xff] %vm1425, %v1185
        %1443 = vst.msk [vmem:[%s616 + $0x88] sm:$0xff] %vm1425, %v1186
        %1444 = vst.msk [vmem:[%s616 + $0x90] sm:$0xff] %vm1425, %v1187
        %1445 = vst.msk [vmem:[%s616 + $0x98] sm:$0xff] %vm1425, %v1188
        %1446 = vst.msk [vmem:[%s616 + $0xa0] sm:$0xff] %vm1425, %v1189
        %1447 = vst.msk [vmem:[%s616 + $0xa8] sm:$0xff] %vm1425, %v1190
        %1448 = vst.msk [vmem:[%s616 + $0xb0] sm:$0xff] %vm1425, %v1191
        %1449 = vst.msk [vmem:[%s616 + $0xb8] sm:$0xff] %vm1425, %v1192
        %1450 = vst.msk [vmem:[%s616 + $0xc0] sm:$0xff] %vm1425, %v1193
        %1451 = vst.msk [vmem:[%s616 + $0xc8] sm:$0xff] %vm1425, %v1194
        %1452 = vst.msk [vmem:[%s616 + $0xd0] sm:$0xff] %vm1425, %v1195
        %1453 = vst.msk [vmem:[%s616 + $0xd8] sm:$0xff] %vm1425, %v1196
        %1454 = vst.msk [vmem:[%s616 + $0xe0] sm:$0xff] %vm1425, %v1197
        %1455 = vst.msk [vmem:[%s616 + $0xe8] sm:$0xff] %vm1425, %v1198
        %1456 = vst.msk [vmem:[%s616 + $0xf0] sm:$0xff] %vm1425, %v1199
        %1457 = vst.msk [vmem:[%s616 + $0xf8] sm:$0xff] %vm1425, %v1200
        %1458 = vst.msk [vmem:[%s616 + $0x100] sm:$0xff] %vm1425, %v1201
        %1459 = vst.msk [vmem:[%s616 + $0x108] sm:$0xff] %vm1425, %v1202
        %1460 = vst.msk [vmem:[%s616 + $0x110] sm:$0xff] %vm1425, %v1203
        %1461 = vst.msk [vmem:[%s616 + $0x118] sm:$0xff] %vm1425, %v1204
        %1462 = vst.msk [vmem:[%s616 + $0x120] sm:$0xff] %vm1425, %v1205
        %1463 = vst.msk [vmem:[%s616 + $0x128] sm:$0xff] %vm1425, %v1206
        %1464 = vst.msk [vmem:[%s616 + $0x130] sm:$0xff] %vm1425, %v1207
        %1465 = vst.msk [vmem:[%s616 + $0x138] sm:$0xff] %vm1425, %v1208
        %1466 = vst.msk [vmem:[%s616 + $0x140] sm:$0xff] %vm1425, %v1209
        %1467 = vst.msk [vmem:[%s616 + $0x148] sm:$0xff] %vm1425, %v1210
        %1468 = vst.msk [vmem:[%s616 + $0x150] sm:$0xff] %vm1425, %v1211
        %1469 = vst.msk [vmem:[%s616 + $0x158] sm:$0xff] %vm1425, %v1212
        %1470 = vst.msk [vmem:[%s616 + $0x160] sm:$0xff] %vm1425, %v1213
        %1471 = vst.msk [vmem:[%s616 + $0x168] sm:$0xff] %vm1425, %v1214
        %1472 = vst.msk [vmem:[%s616 + $0x170] sm:$0xff] %vm1425, %v1215
        %1473 = vst.msk [vmem:[%s616 + $0x178] sm:$0xff] %vm1425, %v1216
        %1474 = vst.msk [vmem:[%s616 + $0x180] sm:$0xff] %vm1425, %v1217
        %1475 = vst.msk [vmem:[%s616 + $0x188] sm:$0xff] %vm1425, %v1218
        %1476 = vst.msk [vmem:[%s616 + $0x190] sm:$0xff] %vm1425, %v1219
        %1477 = vst.msk [vmem:[%s616 + $0x198] sm:$0xff] %vm1425, %v1220
        %1478 = vst.msk [vmem:[%s616 + $0x1a0] sm:$0xff] %vm1425, %v1221
        %1479 = vst.msk [vmem:[%s616 + $0x1a8] sm:$0xff] %vm1425, %v1222
        %1480 = vst.msk [vmem:[%s616 + $0x1b0] sm:$0xff] %vm1425, %v1223
        %1481 = vst.msk [vmem:[%s616 + $0x1b8] sm:$0xff] %vm1425, %v1224
        %1482 = vst.msk [vmem:[%s616 + $0x1c0] sm:$0xff] %vm1425, %v1225
        %1483 = vst.msk [vmem:[%s616 + $0x1c8] sm:$0xff] %vm1425, %v1226
        %1484 = vst.msk [vmem:[%s616 + $0x1d0] sm:$0xff] %vm1425, %v1227
        %1485 = vst.msk [vmem:[%s616 + $0x1d8] sm:$0xff] %vm1425, %v1228
        %1486 = vst.msk [vmem:[%s616 + $0x1e0] sm:$0xff] %vm1425, %v1229
        %1487 = vst.msk [vmem:[%s616 + $0x1e8] sm:$0xff] %vm1425, %v1230
        %1488 = vst.msk [vmem:[%s616 + $0x1f0] sm:$0xff] %vm1425, %v1231
        %1489 = vst.msk [vmem:[%s616 + $0x1f8] sm:$0xff] %vm1425, %v1232
        %1490 = vst.msk [vmem:[%s616 + $0x200] sm:$0xff] %vm1425, %v1233
        %1491 = vst.msk [vmem:[%s616 + $0x208] sm:$0xff] %vm1425, %v1234
        %1492 = vst.msk [vmem:[%s616 + $0x210] sm:$0xff] %vm1425, %v1235
        %1493 = vst.msk [vmem:[%s616 + $0x218] sm:$0xff] %vm1425, %v1236
        %1494 = vst.msk [vmem:[%s616 + $0x220] sm:$0xff] %vm1425, %v1237
        %1495 = vst.msk [vmem:[%s616 + $0x228] sm:$0xff] %vm1425, %v1238
        %1496 = vst.msk [vmem:[%s616 + $0x230] sm:$0xff] %vm1425, %v1239
        %1497 = vst.msk [vmem:[%s616 + $0x238] sm:$0xff] %vm1425, %v1240
        %1498 = vst.msk [vmem:[%s616 + $0x240] sm:$0xff] %vm1425, %v1241
        %1499 = vst.msk [vmem:[%s616 + $0x248] sm:$0xff] %vm1425, %v1242
        %1500 = vst.msk [vmem:[%s616 + $0x250] sm:$0xff] %vm1425, %v1243
        %1501 = vst.msk [vmem:[%s616 + $0x258] sm:$0xff] %vm1425, %v1244
        %1502 = vst.msk [vmem:[%s616 + $0x260] sm:$0xff] %vm1425, %v1245
        %1503 = vst.msk [vmem:[%s616 + $0x268] sm:$0xff] %vm1425, %v1246
        %1504 = vst.msk [vmem:[%s616 + $0x270] sm:$0xff] %vm1425, %v1247
        %1505 = vst.msk [vmem:[%s616 + $0x278] sm:$0xff] %vm1425, %v1248
        %1506 = vst.msk [vmem:[%s616 + $0x280] sm:$0xff] %vm1425, %v1249
        %1507 = vst.msk [vmem:[%s616 + $0x288] sm:$0xff] %vm1425, %v1250
        %1508 = vst.msk [vmem:[%s616 + $0x290] sm:$0xff] %vm1425, %v1251
        %1509 = vst.msk [vmem:[%s616 + $0x298] sm:$0xff] %vm1425, %v1252
        %1510 = vst.msk [vmem:[%s616 + $0x2a0] sm:$0xff] %vm1425, %v1253
        %1511 = vst.msk [vmem:[%s616 + $0x2a8] sm:$0xff] %vm1425, %v1254
        %1512 = vst.msk [vmem:[%s616 + $0x2b0] sm:$0xff] %vm1425, %v1255
        %1513 = vst.msk [vmem:[%s616 + $0x2b8] sm:$0xff] %vm1425, %v1256
        %1514 = vst.msk [vmem:[%s616 + $0x2c0] sm:$0xff] %vm1425, %v1257
        %1515 = vst.msk [vmem:[%s616 + $0x2c8] sm:$0xff] %vm1425, %v1258
        %1516 = vst.msk [vmem:[%s616 + $0x2d0] sm:$0xff] %vm1425, %v1259
        %1517 = vst.msk [vmem:[%s616 + $0x2d8] sm:$0xff] %vm1425, %v1260
        %1518 = vst.msk [vmem:[%s616 + $0x2e0] sm:$0xff] %vm1425, %v1261
        %1519 = vst.msk [vmem:[%s616 + $0x2e8] sm:$0xff] %vm1425, %v1262
        %1520 = vst.msk [vmem:[%s616 + $0x2f0] sm:$0xff] %vm1425, %v1263
        %1521 = vst.msk [vmem:[%s616 + $0x2f8] sm:$0xff] %vm1425, %v1264
        %1522 = vst.msk [vmem:[%s616 + $0x300] sm:$0xff] %vm1425, %v1265
        %1523 = vst.msk [vmem:[%s616 + $0x308] sm:$0xff] %vm1425, %v1266
        %1524 = vst.msk [vmem:[%s616 + $0x310] sm:$0xff] %vm1425, %v1267
        %1525 = vst.msk [vmem:[%s616 + $0x318] sm:$0xff] %vm1425, %v1268
        %1526 = vst.msk [vmem:[%s616 + $0x320] sm:$0xff] %vm1425, %v1269
        %1527 = vst.msk [vmem:[%s616 + $0x328] sm:$0xff] %vm1425, %v1270
        %1528 = vst.msk [vmem:[%s616 + $0x330] sm:$0xff] %vm1425, %v1271
        %1529 = vst.msk [vmem:[%s616 + $0x338] sm:$0xff] %vm1425, %v1272
        %1530 = vst.msk [vmem:[%s616 + $0x340] sm:$0xff] %vm1425, %v1273
        %1531 = vst.msk [vmem:[%s616 + $0x348] sm:$0xff] %vm1425, %v1274
        %1532 = vst.msk [vmem:[%s616 + $0x350] sm:$0xff] %vm1425, %v1275
        %1533 = vst.msk [vmem:[%s616 + $0x358] sm:$0xff] %vm1425, %v1276
        %1534 = vst.msk [vmem:[%s616 + $0x360] sm:$0xff] %vm1425, %v1277
        %1535 = vst.msk [vmem:[%s616 + $0x368] sm:$0xff] %vm1425, %v1278
        %1536 = vst.msk [vmem:[%s616 + $0x370] sm:$0xff] %vm1425, %v1279
        %1537 = vst.msk [vmem:[%s616 + $0x378] sm:$0xff] %vm1425, %v1280
        %1538 = vst.msk [vmem:[%s616 + $0x380] sm:$0xff] %vm1425, %v1281
        %1539 = vst.msk [vmem:[%s616 + $0x388] sm:$0xff] %vm1425, %v1282
        %1540 = vst.msk [vmem:[%s616 + $0x390] sm:$0xff] %vm1425, %v1283
        %1541 = vst.msk [vmem:[%s616 + $0x398] sm:$0xff] %vm1425, %v1284
        %1542 = vst.msk [vmem:[%s616 + $0x3a0] sm:$0xff] %vm1425, %v1285
        %1543 = vst.msk [vmem:[%s616 + $0x3a8] sm:$0xff] %vm1425, %v1286
        %1544 = vst.msk [vmem:[%s616 + $0x3b0] sm:$0xff] %vm1425, %v1287
        %1545 = vst.msk [vmem:[%s616 + $0x3b8] sm:$0xff] %vm1425, %v1288
        %1546 = vst.msk [vmem:[%s616 + $0x3c0] sm:$0xff] %vm1425, %v1289
        %1547 = vst.msk [vmem:[%s616 + $0x3c8] sm:$0xff] %vm1425, %v1290
        %1548 = vst.msk [vmem:[%s616 + $0x3d0] sm:$0xff] %vm1425, %v1291
        %1549 = vst.msk [vmem:[%s616 + $0x3d8] sm:$0xff] %vm1425, %v1292
        %1550 = vst.msk [vmem:[%s616 + $0x3e0] sm:$0xff] %vm1425, %v1293
        %1551 = vst.msk [vmem:[%s616 + $0x3e8] sm:$0xff] %vm1425, %v1294
        %1552 = vst.msk [vmem:[%s616 + $0x3f0] sm:$0xff] %vm1425, %v1295
        %1553 = vst.msk [vmem:[%s616 + $0x3f8] sm:$0xff] %vm1425, %v1296
        %1554 = vst.msk [vmem:[%s616 + $0x400] sm:$0xff] %vm1425, %v1297
        %1555 = vst.msk [vmem:[%s616 + $0x408] sm:$0xff] %vm1425, %v1298
        %1556 = vst.msk [vmem:[%s616 + $0x410] sm:$0xff] %vm1425, %v1299
        %1557 = vst.msk [vmem:[%s616 + $0x418] sm:$0xff] %vm1425, %v1300
        %1558 = vst.msk [vmem:[%s616 + $0x420] sm:$0xff] %vm1425, %v1301
        %1559 = vst.msk [vmem:[%s616 + $0x428] sm:$0xff] %vm1425, %v1302
        %1560 = vst.msk [vmem:[%s616 + $0x430] sm:$0xff] %vm1425, %v1303
        %1561 = vst.msk [vmem:[%s616 + $0x438] sm:$0xff] %vm1425, %v1304
        %1562 = vst.msk [vmem:[%s616 + $0x440] sm:$0xff] %vm1425, %v1305
        %1563 = vst.msk [vmem:[%s616 + $0x448] sm:$0xff] %vm1425, %v1306
        %1564 = vst.msk [vmem:[%s616 + $0x450] sm:$0xff] %vm1425, %v1307
        %1565 = vst.msk [vmem:[%s616 + $0x458] sm:$0xff] %vm1425, %v1308
        %1566 = vst.msk [vmem:[%s616 + $0x460] sm:$0xff] %vm1425, %v1309
        %1567 = vst.msk [vmem:[%s616 + $0x468] sm:$0xff] %vm1425, %v1310
        %1568 = vst.msk [vmem:[%s616 + $0x470] sm:$0xff] %vm1425, %v1311
        %1569 = vst.msk [vmem:[%s616 + $0x478] sm:$0xff] %vm1425, %v1312
        %1570 = vst.msk [vmem:[%s616 + $0x480] sm:$0xff] %vm1425, %v1313
        %1571 = vst.msk [vmem:[%s616 + $0x488] sm:$0xff] %vm1425, %v1314
        %1572 = vst.msk [vmem:[%s616 + $0x490] sm:$0xff] %vm1425, %v1315
        %1573 = vst.msk [vmem:[%s616 + $0x498] sm:$0xff] %vm1425, %v1316
        %1574 = vst.msk [vmem:[%s616 + $0x4a0] sm:$0xff] %vm1425, %v1317
        %1575 = vst.msk [vmem:[%s616 + $0x4a8] sm:$0xff] %vm1425, %v1318
        %1576 = vst.msk [vmem:[%s616 + $0x4b0] sm:$0xff] %vm1425, %v1319
        %1577 = vst.msk [vmem:[%s616 + $0x4b8] sm:$0xff] %vm1425, %v1320
        %1578 = vst.msk [vmem:[%s616 + $0x4c0] sm:$0xff] %vm1425, %v1321
        %1579 = vst.msk [vmem:[%s616 + $0x4c8] sm:$0xff] %vm1425, %v1322
        %1580 = vst.msk [vmem:[%s616 + $0x4d0] sm:$0xff] %vm1425, %v1323
        %1581 = vst.msk [vmem:[%s616 + $0x4d8] sm:$0xff] %vm1425, %v1324
        %1582 = vst.msk [vmem:[%s616 + $0x4e0] sm:$0xff] %vm1425, %v1325
        %1583 = vst.msk [vmem:[%s616 + $0x4e8] sm:$0xff] %vm1425, %v1326
        %1584 = vst.msk [vmem:[%s616 + $0x4f0] sm:$0xff] %vm1425, %v1327
        %1585 = vst.msk [vmem:[%s616 + $0x4f8] sm:$0xff] %vm1425, %v1328
        %1586 = vst.msk [vmem:[%s616 + $0x500] sm:$0xff] %vm1425, %v1329
        %1587 = vst.msk [vmem:[%s616 + $0x508] sm:$0xff] %vm1425, %v1330
        %1588 = vst.msk [vmem:[%s616 + $0x510] sm:$0xff] %vm1425, %v1331
        %1589 = vst.msk [vmem:[%s616 + $0x518] sm:$0xff] %vm1425, %v1332
        %1590 = vst.msk [vmem:[%s616 + $0x520] sm:$0xff] %vm1425, %v1333
        %1591 = vst.msk [vmem:[%s616 + $0x528] sm:$0xff] %vm1425, %v1334
        %1592 = vst.msk [vmem:[%s616 + $0x530] sm:$0xff] %vm1425, %v1335
        %1593 = vst.msk [vmem:[%s616 + $0x538] sm:$0xff] %vm1425, %v1336
        %1594 = vst.msk [vmem:[%s616 + $0x540] sm:$0xff] %vm1425, %v1337
        %1595 = vst.msk [vmem:[%s616 + $0x548] sm:$0xff] %vm1425, %v1338
        %1596 = vst.msk [vmem:[%s616 + $0x550] sm:$0xff] %vm1425, %v1339
        %1597 = vst.msk [vmem:[%s616 + $0x558] sm:$0xff] %vm1425, %v1340
        %1598 = vst.msk [vmem:[%s616 + $0x560] sm:$0xff] %vm1425, %v1341
        %1599 = vst.msk [vmem:[%s616 + $0x568] sm:$0xff] %vm1425, %v1342
        %1600 = vst.msk [vmem:[%s616 + $0x570] sm:$0xff] %vm1425, %v1343
        %1601 = vst.msk [vmem:[%s616 + $0x578] sm:$0xff] %vm1425, %v1344
        %1602 = vst.msk [vmem:[%s616 + $0x580] sm:$0xff] %vm1425, %v1345
        %1603 = vst.msk [vmem:[%s616 + $0x588] sm:$0xff] %vm1425, %v1346
        %1604 = vst.msk [vmem:[%s616 + $0x590] sm:$0xff] %vm1425, %v1347
        %1605 = vst.msk [vmem:[%s616 + $0x598] sm:$0xff] %vm1425, %v1348
        %1606 = vst.msk [vmem:[%s616 + $0x5a0] sm:$0xff] %vm1425, %v1349
        %1607 = vst.msk [vmem:[%s616 + $0x5a8] sm:$0xff] %vm1425, %v1350
        %1608 = vst.msk [vmem:[%s616 + $0x5b0] sm:$0xff] %vm1425, %v1351
        %1609 = vst.msk [vmem:[%s616 + $0x5b8] sm:$0xff] %vm1425, %v1352
        %1610 = vst.msk [vmem:[%s616 + $0x5c0] sm:$0xff] %vm1425, %v1353
        %1611 = vst.msk [vmem:[%s616 + $0x5c8] sm:$0xff] %vm1425, %v1354
        %1612 = vst.msk [vmem:[%s616 + $0x5d0] sm:$0xff] %vm1425, %v1355
        %1613 = vst.msk [vmem:[%s616 + $0x5d8] sm:$0xff] %vm1425, %v1356
        %1614 = vst.msk [vmem:[%s616 + $0x5e0] sm:$0xff] %vm1425, %v1357
        %1615 = vst.msk [vmem:[%s616 + $0x5e8] sm:$0xff] %vm1425, %v1358
        %1616 = vst.msk [vmem:[%s616 + $0x5f0] sm:$0xff] %vm1425, %v1359
        %1617 = vst.msk [vmem:[%s616 + $0x5f8] sm:$0xff] %vm1425, %v1360
        %1618 = vst.msk [vmem:[%s616 + $0x600] sm:$0xff] %vm1425, %v1361
        %1619 = vst.msk [vmem:[%s616 + $0x608] sm:$0xff] %vm1425, %v1362
        %1620 = vst.msk [vmem:[%s616 + $0x610] sm:$0xff] %vm1425, %v1363
        %1621 = vst.msk [vmem:[%s616 + $0x618] sm:$0xff] %vm1425, %v1364
        %1622 = vst.msk [vmem:[%s616 + $0x620] sm:$0xff] %vm1425, %v1365
        %1623 = vst.msk [vmem:[%s616 + $0x628] sm:$0xff] %vm1425, %v1366
        %1624 = vst.msk [vmem:[%s616 + $0x630] sm:$0xff] %vm1425, %v1367
        %1625 = vst.msk [vmem:[%s616 + $0x638] sm:$0xff] %vm1425, %v1368
        %1626 = vst.msk [vmem:[%s616 + $0x640] sm:$0xff] %vm1425, %v1369
        %1627 = vst.msk [vmem:[%s616 + $0x648] sm:$0xff] %vm1425, %v1370
        %1628 = vst.msk [vmem:[%s616 + $0x650] sm:$0xff] %vm1425, %v1371
        %1629 = vst.msk [vmem:[%s616 + $0x658] sm:$0xff] %vm1425, %v1372
        %1630 = vst.msk [vmem:[%s616 + $0x660] sm:$0xff] %vm1425, %v1373
        %1631 = vst.msk [vmem:[%s616 + $0x668] sm:$0xff] %vm1425, %v1374
        %1632 = vst.msk [vmem:[%s616 + $0x670] sm:$0xff] %vm1425, %v1375
        %1633 = vst.msk [vmem:[%s616 + $0x678] sm:$0xff] %vm1425, %v1376
        %1634 = vst.msk [vmem:[%s616 + $0x680] sm:$0xff] %vm1425, %v1377
        %1635 = vst.msk [vmem:[%s616 + $0x688] sm:$0xff] %vm1425, %v1378
        %1636 = vst.msk [vmem:[%s616 + $0x690] sm:$0xff] %vm1425, %v1379
        %1637 = vst.msk [vmem:[%s616 + $0x698] sm:$0xff] %vm1425, %v1380
        %1638 = vst.msk [vmem:[%s616 + $0x6a0] sm:$0xff] %vm1425, %v1381
        %1639 = vst.msk [vmem:[%s616 + $0x6a8] sm:$0xff] %vm1425, %v1382
        %1640 = vst.msk [vmem:[%s616 + $0x6b0] sm:$0xff] %vm1425, %v1383
        %1641 = vst.msk [vmem:[%s616 + $0x6b8] sm:$0xff] %vm1425, %v1384
        %1642 = vst.msk [vmem:[%s616 + $0x6c0] sm:$0xff] %vm1425, %v1385
        %1643 = vst.msk [vmem:[%s616 + $0x6c8] sm:$0xff] %vm1425, %v1386
        %1644 = vst.msk [vmem:[%s616 + $0x6d0] sm:$0xff] %vm1425, %v1387
        %1645 = vst.msk [vmem:[%s616 + $0x6d8] sm:$0xff] %vm1425, %v1388
        %1646 = vst.msk [vmem:[%s616 + $0x6e0] sm:$0xff] %vm1425, %v1389
        %1647 = vst.msk [vmem:[%s616 + $0x6e8] sm:$0xff] %vm1425, %v1390
        %1648 = vst.msk [vmem:[%s616 + $0x6f0] sm:$0xff] %vm1425, %v1391
        %1649 = vst.msk [vmem:[%s616 + $0x6f8] sm:$0xff] %vm1425, %v1392
        %1650 = vst.msk [vmem:[%s616 + $0x700] sm:$0xff] %vm1425, %v1393
        %1651 = vst.msk [vmem:[%s616 + $0x708] sm:$0xff] %vm1425, %v1394
        %1652 = vst.msk [vmem:[%s616 + $0x710] sm:$0xff] %vm1425, %v1395
        %1653 = vst.msk [vmem:[%s616 + $0x718] sm:$0xff] %vm1425, %v1396
        %1654 = vst.msk [vmem:[%s616 + $0x720] sm:$0xff] %vm1425, %v1397
        %1655 = vst.msk [vmem:[%s616 + $0x728] sm:$0xff] %vm1425, %v1398
        %1656 = vst.msk [vmem:[%s616 + $0x730] sm:$0xff] %vm1425, %v1399
        %1657 = vst.msk [vmem:[%s616 + $0x738] sm:$0xff] %vm1425, %v1400
        %1658 = vst.msk [vmem:[%s616 + $0x740] sm:$0xff] %vm1425, %v1401
        %1659 = vst.msk [vmem:[%s616 + $0x748] sm:$0xff] %vm1425, %v1402
        %1660 = vst.msk [vmem:[%s616 + $0x750] sm:$0xff] %vm1425, %v1403
        %1661 = vst.msk [vmem:[%s616 + $0x758] sm:$0xff] %vm1425, %v1404
        %1662 = vst.msk [vmem:[%s616 + $0x760] sm:$0xff] %vm1425, %v1405
        %1663 = vst.msk [vmem:[%s616 + $0x768] sm:$0xff] %vm1425, %v1406
        %1664 = vst.msk [vmem:[%s616 + $0x770] sm:$0xff] %vm1425, %v1407
        %1665 = vst.msk [vmem:[%s616 + $0x778] sm:$0xff] %vm1425, %v1408
        %1666 = vst.msk [vmem:[%s616 + $0x780] sm:$0xff] %vm1425, %v1409
        %1667 = vst.msk [vmem:[%s616 + $0x788] sm:$0xff] %vm1425, %v1410
        %1668 = vst.msk [vmem:[%s616 + $0x790] sm:$0xff] %vm1425, %v1411
        %1669 = vst.msk [vmem:[%s616 + $0x798] sm:$0xff] %vm1425, %v1412
        %1670 = vst.msk [vmem:[%s616 + $0x7a0] sm:$0xff] %vm1425, %v1413
        %1671 = vst.msk [vmem:[%s616 + $0x7a8] sm:$0xff] %vm1425, %v1414
        %1672 = vst.msk [vmem:[%s616 + $0x7b0] sm:$0xff] %vm1425, %v1415
        %1673 = vst.msk [vmem:[%s616 + $0x7b8] sm:$0xff] %vm1425, %v1416
        %1674 = vst.msk [vmem:[%s616 + $0x7c0] sm:$0xff] %vm1425, %v1417
        %1675 = vst.msk [vmem:[%s616 + $0x7c8] sm:$0xff] %vm1425, %v1418
        %1676 = vst.msk [vmem:[%s616 + $0x7d0] sm:$0xff] %vm1425, %v1419
        %1677 = vst.msk [vmem:[%s616 + $0x7d8] sm:$0xff] %vm1425, %v1420
        %1678 = vst.msk [vmem:[%s616 + $0x7e0] sm:$0xff] %vm1425, %v1421
        %1679 = vst.msk [vmem:[%s616 + $0x7e8] sm:$0xff] %vm1425, %v1422
        %1680 = vst.msk [vmem:[%s616 + $0x7f0] sm:$0xff] %vm1425, %v1423
        %1681 = vst.msk [vmem:[%s616 + $0x7f8] sm:$0xff] %vm1425, %v1424
        %v1682 = vpack.c.bf16 %v644, %v643
        %v1683 = vpack.c.bf16 %v646, %v645
        %v1684 = vpack.c.bf16 %v648, %v647
        %v1685 = vpack.c.bf16 %v650, %v649
        %v1686 = vpack.c.bf16 %v652, %v651
        %v1687 = vpack.c.bf16 %v654, %v653
        %v1688 = vpack.c.bf16 %v656, %v655
        %v1689 = vpack.c.bf16 %v658, %v657
        %v1690 = vpack.c.bf16 %v660, %v659
        %v1691 = vpack.c.bf16 %v662, %v661
        %v1692 = vpack.c.bf16 %v664, %v663
        %v1693 = vpack.c.bf16 %v666, %v665
        %v1694 = vpack.c.bf16 %v668, %v667
        %v1695 = vpack.c.bf16 %v670, %v669
        %v1696 = vpack.c.bf16 %v672, %v671
        %v1697 = vpack.c.bf16 %v674, %v673
        %v1698 = vpack.c.bf16 %v676, %v675
        %v1699 = vpack.c.bf16 %v678, %v677
        %v1700 = vpack.c.bf16 %v680, %v679
        %v1701 = vpack.c.bf16 %v682, %v681
        %v1702 = vpack.c.bf16 %v684, %v683
        %v1703 = vpack.c.bf16 %v686, %v685
        %v1704 = vpack.c.bf16 %v688, %v687
        %v1705 = vpack.c.bf16 %v690, %v689
        %v1706 = vpack.c.bf16 %v692, %v691
        %v1707 = vpack.c.bf16 %v694, %v693
        %v1708 = vpack.c.bf16 %v696, %v695
        %v1709 = vpack.c.bf16 %v698, %v697
        %v1710 = vpack.c.bf16 %v700, %v699
        %v1711 = vpack.c.bf16 %v702, %v701
        %v1712 = vpack.c.bf16 %v704, %v703
        %v1713 = vpack.c.bf16 %v706, %v705
        %v1714 = vpack.c.bf16 %v708, %v707
        %v1715 = vpack.c.bf16 %v710, %v709
        %v1716 = vpack.c.bf16 %v712, %v711
        %v1717 = vpack.c.bf16 %v714, %v713
        %v1718 = vpack.c.bf16 %v716, %v715
        %v1719 = vpack.c.bf16 %v718, %v717
        %v1720 = vpack.c.bf16 %v720, %v719
        %v1721 = vpack.c.bf16 %v722, %v721
        %v1722 = vpack.c.bf16 %v724, %v723
        %v1723 = vpack.c.bf16 %v726, %v725
        %v1724 = vpack.c.bf16 %v728, %v727
        %v1725 = vpack.c.bf16 %v730, %v729
        %v1726 = vpack.c.bf16 %v732, %v731
        %v1727 = vpack.c.bf16 %v734, %v733
        %v1728 = vpack.c.bf16 %v736, %v735
        %v1729 = vpack.c.bf16 %v738, %v737
        %v1730 = vpack.c.bf16 %v740, %v739
        %v1731 = vpack.c.bf16 %v742, %v741
        %v1732 = vpack.c.bf16 %v744, %v743
        %v1733 = vpack.c.bf16 %v746, %v745
        %v1734 = vpack.c.bf16 %v748, %v747
        %v1735 = vpack.c.bf16 %v750, %v749
        %v1736 = vpack.c.bf16 %v752, %v751
        %v1737 = vpack.c.bf16 %v754, %v753
        %v1738 = vpack.c.bf16 %v756, %v755
        %v1739 = vpack.c.bf16 %v758, %v757
        %v1740 = vpack.c.bf16 %v760, %v759
        %v1741 = vpack.c.bf16 %v762, %v761
        %v1742 = vpack.c.bf16 %v764, %v763
        %v1743 = vpack.c.bf16 %v766, %v765
        %v1744 = vpack.c.bf16 %v768, %v767
        %v1745 = vpack.c.bf16 %v770, %v769
        %v1746 = vpack.c.bf16 %v772, %v771
        %v1747 = vpack.c.bf16 %v774, %v773
        %v1748 = vpack.c.bf16 %v776, %v775
        %v1749 = vpack.c.bf16 %v778, %v777
        %v1750 = vpack.c.bf16 %v780, %v779
        %v1751 = vpack.c.bf16 %v782, %v781
        %v1752 = vpack.c.bf16 %v784, %v783
        %v1753 = vpack.c.bf16 %v786, %v785
        %v1754 = vpack.c.bf16 %v788, %v787
        %v1755 = vpack.c.bf16 %v790, %v789
        %v1756 = vpack.c.bf16 %v792, %v791
        %v1757 = vpack.c.bf16 %v794, %v793
        %v1758 = vpack.c.bf16 %v796, %v795
        %v1759 = vpack.c.bf16 %v798, %v797
        %v1760 = vpack.c.bf16 %v800, %v799
        %v1761 = vpack.c.bf16 %v802, %v801
        %v1762 = vpack.c.bf16 %v804, %v803
        %v1763 = vpack.c.bf16 %v806, %v805
        %v1764 = vpack.c.bf16 %v808, %v807
        %v1765 = vpack.c.bf16 %v810, %v809
        %v1766 = vpack.c.bf16 %v812, %v811
        %v1767 = vpack.c.bf16 %v814, %v813
        %v1768 = vpack.c.bf16 %v816, %v815
        %v1769 = vpack.c.bf16 %v818, %v817
        %v1770 = vpack.c.bf16 %v820, %v819
        %v1771 = vpack.c.bf16 %v822, %v821
        %v1772 = vpack.c.bf16 %v824, %v823
        %v1773 = vpack.c.bf16 %v826, %v825
        %v1774 = vpack.c.bf16 %v828, %v827
        %v1775 = vpack.c.bf16 %v830, %v829
        %v1776 = vpack.c.bf16 %v832, %v831
        %v1777 = vpack.c.bf16 %v834, %v833
        %v1778 = vpack.c.bf16 %v836, %v835
        %v1779 = vpack.c.bf16 %v838, %v837
        %v1780 = vpack.c.bf16 %v840, %v839
        %v1781 = vpack.c.bf16 %v842, %v841
        %v1782 = vpack.c.bf16 %v844, %v843
        %v1783 = vpack.c.bf16 %v846, %v845
        %v1784 = vpack.c.bf16 %v848, %v847
        %v1785 = vpack.c.bf16 %v850, %v849
        %v1786 = vpack.c.bf16 %v852, %v851
        %v1787 = vpack.c.bf16 %v854, %v853
        %v1788 = vpack.c.bf16 %v856, %v855
        %v1789 = vpack.c.bf16 %v858, %v857
        %v1790 = vpack.c.bf16 %v860, %v859
        %v1791 = vpack.c.bf16 %v862, %v861
        %v1792 = vpack.c.bf16 %v864, %v863
        %v1793 = vpack.c.bf16 %v866, %v865
        %v1794 = vpack.c.bf16 %v868, %v867
        %v1795 = vpack.c.bf16 %v870, %v869
        %v1796 = vpack.c.bf16 %v872, %v871
        %v1797 = vpack.c.bf16 %v874, %v873
        %v1798 = vpack.c.bf16 %v876, %v875
        %v1799 = vpack.c.bf16 %v878, %v877
        %v1800 = vpack.c.bf16 %v880, %v879
        %v1801 = vpack.c.bf16 %v882, %v881
        %v1802 = vpack.c.bf16 %v884, %v883
        %v1803 = vpack.c.bf16 %v886, %v885
        %v1804 = vpack.c.bf16 %v888, %v887
        %v1805 = vpack.c.bf16 %v890, %v889
        %v1806 = vpack.c.bf16 %v892, %v891
        %v1807 = vpack.c.bf16 %v894, %v893
        %v1808 = vpack.c.bf16 %v896, %v895
        %v1809 = vpack.c.bf16 %v898, %v897
        %v1810 = vld [vmem:[%s3] sm:$0x3]
        %v1811 = vld [vmem:[%s4] sm:$0x1]
        %v1813 = vlaneseq
        %v1814 = vshrl.u32 %v1813, 7
        %v1815 = vsub.s32 0, %v1814
        %v1816 = vrot.slane %v1811, %v1815
        %v1819 = vsel %vm1425, %v1682, 0
        %v1822 = vsel %vm1425, %v1683, 0
        %v1825 = vsel %vm1425, %v1684, 0
        %v1828 = vsel %vm1425, %v1685, 0
        %v1831 = vsel %vm1425, %v1686, 0
        %v1834 = vsel %vm1425, %v1687, 0
        %v1837 = vsel %vm1425, %v1688, 0
        %v1840 = vsel %vm1425, %v1689, 0
        %v1843 = vsel %vm1425, %v1690, 0
        %v1846 = vsel %vm1425, %v1691, 0
        %v1849 = vsel %vm1425, %v1692, 0
        %v1852 = vsel %vm1425, %v1693, 0
        %v1855 = vsel %vm1425, %v1694, 0
        %v1858 = vsel %vm1425, %v1695, 0
        %v1861 = vsel %vm1425, %v1696, 0
        %v1864 = vsel %vm1425, %v1697, 0
        %v1867 = vsel %vm1425, %v1698, 0
        %v1870 = vsel %vm1425, %v1699, 0
        %v1873 = vsel %vm1425, %v1700, 0
        %v1876 = vsel %vm1425, %v1701, 0
        %v1879 = vsel %vm1425, %v1702, 0
        %v1882 = vsel %vm1425, %v1703, 0
        %v1885 = vsel %vm1425, %v1704, 0
        %v1888 = vsel %vm1425, %v1705, 0
        %v1891 = vsel %vm1425, %v1706, 0
        %v1894 = vsel %vm1425, %v1707, 0
        %v1897 = vsel %vm1425, %v1708, 0
        %v1900 = vsel %vm1425, %v1709, 0
        %v1903 = vsel %vm1425, %v1710, 0
        %v1906 = vsel %vm1425, %v1711, 0
        %v1909 = vsel %vm1425, %v1712, 0
        %v1912 = vsel %vm1425, %v1713, 0
        %v1915 = vsel %vm1425, %v1714, 0
        %v1918 = vsel %vm1425, %v1715, 0
        %v1921 = vsel %vm1425, %v1716, 0
        %v1924 = vsel %vm1425, %v1717, 0
        %v1927 = vsel %vm1425, %v1718, 0
        %v1930 = vsel %vm1425, %v1719, 0
        %v1933 = vsel %vm1425, %v1720, 0
        %v1936 = vsel %vm1425, %v1721, 0
        %v1939 = vsel %vm1425, %v1722, 0
        %v1942 = vsel %vm1425, %v1723, 0
        %v1945 = vsel %vm1425, %v1724, 0
        %v1948 = vsel %vm1425, %v1725, 0
        %v1951 = vsel %vm1425, %v1726, 0
        %v1954 = vsel %vm1425, %v1727, 0
        %v1957 = vsel %vm1425, %v1728, 0
        %v1960 = vsel %vm1425, %v1729, 0
        %v1963 = vsel %vm1425, %v1730, 0
        %v1966 = vsel %vm1425, %v1731, 0
        %v1969 = vsel %vm1425, %v1732, 0
        %v1972 = vsel %vm1425, %v1733, 0
        %v1975 = vsel %vm1425, %v1734, 0
        %v1978 = vsel %vm1425, %v1735, 0
        %v1981 = vsel %vm1425, %v1736, 0
        %v1984 = vsel %vm1425, %v1737, 0
        %v1987 = vsel %vm1425, %v1738, 0
        %v1990 = vsel %vm1425, %v1739, 0
        %v1993 = vsel %vm1425, %v1740, 0
        %v1996 = vsel %vm1425, %v1741, 0
        %v1999 = vsel %vm1425, %v1742, 0
        %v2002 = vsel %vm1425, %v1743, 0
        %v2005 = vsel %vm1425, %v1744, 0
        %v2008 = vsel %vm1425, %v1745, 0
        %v2011 = vsel %vm1425, %v1746, 0
        %v2014 = vsel %vm1425, %v1747, 0
        %v2017 = vsel %vm1425, %v1748, 0
        %v2020 = vsel %vm1425, %v1749, 0
        %v2023 = vsel %vm1425, %v1750, 0
        %v2026 = vsel %vm1425, %v1751, 0
        %v2029 = vsel %vm1425, %v1752, 0
        %v2032 = vsel %vm1425, %v1753, 0
        %v2035 = vsel %vm1425, %v1754, 0
        %v2038 = vsel %vm1425, %v1755, 0
        %v2041 = vsel %vm1425, %v1756, 0
        %v2044 = vsel %vm1425, %v1757, 0
        %v2047 = vsel %vm1425, %v1758, 0
        %v2050 = vsel %vm1425, %v1759, 0
        %v2053 = vsel %vm1425, %v1760, 0
        %v2056 = vsel %vm1425, %v1761, 0
        %v2059 = vsel %vm1425, %v1762, 0
        %v2062 = vsel %vm1425, %v1763, 0
        %v2065 = vsel %vm1425, %v1764, 0
        %v2068 = vsel %vm1425, %v1765, 0
        %v2071 = vsel %vm1425, %v1766, 0
        %v2074 = vsel %vm1425, %v1767, 0
        %v2077 = vsel %vm1425, %v1768, 0
        %v2080 = vsel %vm1425, %v1769, 0
        %v2083 = vsel %vm1425, %v1770, 0
        %v2086 = vsel %vm1425, %v1771, 0
        %v2089 = vsel %vm1425, %v1772, 0
        %v2092 = vsel %vm1425, %v1773, 0
        %v2095 = vsel %vm1425, %v1774, 0
        %v2098 = vsel %vm1425, %v1775, 0
        %v2101 = vsel %vm1425, %v1776, 0
        %v2104 = vsel %vm1425, %v1777, 0
        %v2107 = vsel %vm1425, %v1778, 0
        %v2110 = vsel %vm1425, %v1779, 0
        %v2113 = vsel %vm1425, %v1780, 0
        %v2116 = vsel %vm1425, %v1781, 0
        %v2119 = vsel %vm1425, %v1782, 0
        %v2122 = vsel %vm1425, %v1783, 0
        %v2125 = vsel %vm1425, %v1784, 0
        %v2128 = vsel %vm1425, %v1785, 0
        %v2131 = vsel %vm1425, %v1786, 0
        %v2134 = vsel %vm1425, %v1787, 0
        %v2137 = vsel %vm1425, %v1788, 0
        %v2140 = vsel %vm1425, %v1789, 0
        %v2143 = vsel %vm1425, %v1790, 0
        %v2146 = vsel %vm1425, %v1791, 0
        %v2149 = vsel %vm1425, %v1792, 0
        %v2152 = vsel %vm1425, %v1793, 0
        %v2155 = vsel %vm1425, %v1794, 0
        %v2158 = vsel %vm1425, %v1795, 0
        %v2161 = vsel %vm1425, %v1796, 0
        %v2164 = vsel %vm1425, %v1797, 0
        %v2167 = vsel %vm1425, %v1798, 0
        %v2170 = vsel %vm1425, %v1799, 0
        %v2173 = vsel %vm1425, %v1800, 0
        %v2176 = vsel %vm1425, %v1801, 0
        %v2179 = vsel %vm1425, %v1802, 0
        %v2182 = vsel %vm1425, %v1803, 0
        %v2185 = vsel %vm1425, %v1804, 0
        %v2188 = vsel %vm1425, %v1805, 0
        %v2191 = vsel %vm1425, %v1806, 0
        %v2194 = vsel %vm1425, %v1807, 0
        %v2197 = vsel %vm1425, %v1808, 0
        %v2200 = vsel %vm1425, %v1809, 0
        %vm2202 = vcmask 1040384
        %vm2203 = vcmask 1041408
        %v2204 = vsel %vm2202, 4294967295, 65535
        %v2205 = vsel %vm2203, %v2204, 0
        %v2207 = vand.u32 %v1810, %v2205
        %2209 = vmatprep.subr.bf16.mxu0 0
        %2210 = vmatpush1.bf16.msra.mxu0 0
        %2211 = vmatprep.subr.bf16.mxu0 0
        %2212 = vmatpush1.bf16.msra.mxu0 0
        %2213 = vmatprep.subr.bf16.mxu0 0
        %2214 = vmatpush1.bf16.msra.mxu0 0
        %2215 = vmatprep.subr.bf16.mxu0 0
        %2216 = vmatpush1.bf16.msra.mxu0 0
        %2217 = vmatprep.subr.bf16.mxu0 0
        %2218 = vmatpush1.bf16.msra.mxu0 0
        %2219 = vmatprep.subr.bf16.mxu0 0
        %2220 = vmatpush1.bf16.msra.mxu0 0
        %2221 = vmatprep.subr.bf16.mxu0 0
        %2222 = vmatpush1.bf16.msra.mxu0 0
        %2223 = vmatprep.subr.bf16.mxu0 0
        %2224 = vmatpush1.bf16.msra.mxu0 %v2207
        %2225 = vmatprep.subr.bf16.mxu0 0
        %2226 = vmatpush2.bf16.msra.mxu0 0
        %2227 = vmatprep.subr.bf16.mxu0 0
        %2228 = vmatpush2.bf16.msra.mxu0 0
        %2229 = vmatprep.subr.bf16.mxu0 0
        %2230 = vmatpush2.bf16.msra.mxu0 0
        %2231 = vmatprep.subr.bf16.mxu0 0
        %2232 = vmatpush2.bf16.msra.mxu0 0
        %2233 = vmatprep.subr.bf16.mxu0 0
        %2234 = vmatpush2.bf16.msra.mxu0 0
        %2235 = vmatprep.subr.bf16.mxu0 0
        %2236 = vmatpush2.bf16.msra.mxu0 0
        %2237 = vmatprep.subr.bf16.mxu0 0
        %2238 = vmatpush2.bf16.msra.mxu0 0
        %2239 = vmatprep.subr.bf16.mxu0 0
        %2240 = vmatpush2.bf16.msra.mxu0 0
        %2241 = vmatprep.mubr.bf16.mxu0 0
        %2242 = vmatmul.mubr.bf16.gmra.mxu0 %v1819
        %v2243 = vpop.f32.mrf.mxu0
        %v2244 = vadd.f32 %v1816, %v2243
        %v2245 = vpop.f32.mrf.mxu0
        %v2246 = vpop.f32.mrf.mxu0
        %v2247 = vadd.f32 %v1816, %v2246
        %v2248 = vpop.f32.mrf.mxu0
        %2249 = vmatprep.mubr.bf16.mxu0 0
        %2250 = vmatmul.mubr.bf16.gmra.mxu0 %v1822
        %v2251 = vpop.f32.mrf.mxu0
        %v2252 = vadd.f32 %v1816, %v2251
        %v2253 = vpop.f32.mrf.mxu0
        %v2254 = vpop.f32.mrf.mxu0
        %v2255 = vadd.f32 %v1816, %v2254
        %v2256 = vpop.f32.mrf.mxu0
        %2257 = vmatprep.mubr.bf16.mxu0 0
        %2258 = vmatmul.mubr.bf16.gmra.mxu0 %v1825
        %v2259 = vpop.f32.mrf.mxu0
        %v2260 = vadd.f32 %v1816, %v2259
        %v2261 = vpop.f32.mrf.mxu0
        %v2262 = vpop.f32.mrf.mxu0
        %v2263 = vadd.f32 %v1816, %v2262
        %v2264 = vpop.f32.mrf.mxu0
        %2265 = vmatprep.mubr.bf16.mxu0 0
        %2266 = vmatmul.mubr.bf16.gmra.mxu0 %v1828
        %v2267 = vpop.f32.mrf.mxu0
        %v2268 = vadd.f32 %v1816, %v2267
        %v2269 = vpop.f32.mrf.mxu0
        %v2270 = vpop.f32.mrf.mxu0
        %v2271 = vadd.f32 %v1816, %v2270
        %v2272 = vpop.f32.mrf.mxu0
        %2273 = vmatprep.mubr.bf16.mxu0 0
        %2274 = vmatmul.mubr.bf16.gmra.mxu0 %v1831
        %v2275 = vpop.f32.mrf.mxu0
        %v2276 = vadd.f32 %v1816, %v2275
        %v2277 = vpop.f32.mrf.mxu0
        %v2278 = vpop.f32.mrf.mxu0
        %v2279 = vadd.f32 %v1816, %v2278
        %v2280 = vpop.f32.mrf.mxu0
        %2281 = vmatprep.mubr.bf16.mxu0 0
        %2282 = vmatmul.mubr.bf16.gmra.mxu0 %v1834
        %v2283 = vpop.f32.mrf.mxu0
        %v2284 = vadd.f32 %v1816, %v2283
        %v2285 = vpop.f32.mrf.mxu0
        %v2286 = vpop.f32.mrf.mxu0
        %v2287 = vadd.f32 %v1816, %v2286
        %v2288 = vpop.f32.mrf.mxu0
        %2289 = vmatprep.mubr.bf16.mxu0 0
        %2290 = vmatmul.mubr.bf16.gmra.mxu0 %v1837
        %v2291 = vpop.f32.mrf.mxu0
        %v2292 = vadd.f32 %v1816, %v2291
        %v2293 = vpop.f32.mrf.mxu0
        %v2294 = vpop.f32.mrf.mxu0
        %v2295 = vadd.f32 %v1816, %v2294
        %v2296 = vpop.f32.mrf.mxu0
        %2297 = vmatprep.mubr.bf16.mxu0 0
        %2298 = vmatmul.mubr.bf16.gmra.mxu0 %v1840
        %v2299 = vpop.f32.mrf.mxu0
        %v2300 = vadd.f32 %v1816, %v2299
        %v2301 = vpop.f32.mrf.mxu0
        %v2302 = vpop.f32.mrf.mxu0
        %v2303 = vadd.f32 %v1816, %v2302
        %v2304 = vpop.f32.mrf.mxu0
        %2305 = vmatprep.mubr.bf16.mxu0 0
        %2306 = vmatmul.mubr.bf16.gmra.mxu0 %v1843
        %v2307 = vpop.f32.mrf.mxu0
        %v2308 = vadd.f32 %v1816, %v2307
        %v2309 = vpop.f32.mrf.mxu0
        %v2310 = vpop.f32.mrf.mxu0
        %v2311 = vadd.f32 %v1816, %v2310
        %v2312 = vpop.f32.mrf.mxu0
        %2313 = vmatprep.mubr.bf16.mxu0 0
        %2314 = vmatmul.mubr.bf16.gmra.mxu0 %v1846
        %v2315 = vpop.f32.mrf.mxu0
        %v2316 = vadd.f32 %v1816, %v2315
        %v2317 = vpop.f32.mrf.mxu0
        %v2318 = vpop.f32.mrf.mxu0
        %v2319 = vadd.f32 %v1816, %v2318
        %v2320 = vpop.f32.mrf.mxu0
        %2321 = vmatprep.mubr.bf16.mxu0 0
        %2322 = vmatmul.mubr.bf16.gmra.mxu0 %v1849
        %v2323 = vpop.f32.mrf.mxu0
        %v2324 = vadd.f32 %v1816, %v2323
        %v2325 = vpop.f32.mrf.mxu0
        %v2326 = vpop.f32.mrf.mxu0
        %v2327 = vadd.f32 %v1816, %v2326
        %v2328 = vpop.f32.mrf.mxu0
        %2329 = vmatprep.mubr.bf16.mxu0 0
        %2330 = vmatmul.mubr.bf16.gmra.mxu0 %v1852
        %v2331 = vpop.f32.mrf.mxu0
        %v2332 = vadd.f32 %v1816, %v2331
        %v2333 = vpop.f32.mrf.mxu0
        %v2334 = vpop.f32.mrf.mxu0
        %v2335 = vadd.f32 %v1816, %v2334
        %v2336 = vpop.f32.mrf.mxu0
        %2337 = vmatprep.mubr.bf16.mxu0 0
        %2338 = vmatmul.mubr.bf16.gmra.mxu0 %v1855
        %v2339 = vpop.f32.mrf.mxu0
        %v2340 = vadd.f32 %v1816, %v2339
        %v2341 = vpop.f32.mrf.mxu0
        %v2342 = vpop.f32.mrf.mxu0
        %v2343 = vadd.f32 %v1816, %v2342
        %v2344 = vpop.f32.mrf.mxu0
        %2345 = vmatprep.mubr.bf16.mxu0 0
        %2346 = vmatmul.mubr.bf16.gmra.mxu0 %v1858
        %v2347 = vpop.f32.mrf.mxu0
        %v2348 = vadd.f32 %v1816, %v2347
        %v2349 = vpop.f32.mrf.mxu0
        %v2350 = vpop.f32.mrf.mxu0
        %v2351 = vadd.f32 %v1816, %v2350
        %v2352 = vpop.f32.mrf.mxu0
        %2353 = vmatprep.mubr.bf16.mxu0 0
        %2354 = vmatmul.mubr.bf16.gmra.mxu0 %v1861
        %v2355 = vpop.f32.mrf.mxu0
        %v2356 = vadd.f32 %v1816, %v2355
        %v2357 = vpop.f32.mrf.mxu0
        %v2358 = vpop.f32.mrf.mxu0
        %v2359 = vadd.f32 %v1816, %v2358
        %v2360 = vpop.f32.mrf.mxu0
        %2361 = vmatprep.mubr.bf16.mxu0 0
        %2362 = vmatmul.mubr.bf16.gmra.mxu0 %v1864
        %v2363 = vpop.f32.mrf.mxu0
        %v2364 = vadd.f32 %v1816, %v2363
        %v2365 = vpop.f32.mrf.mxu0
        %v2366 = vpop.f32.mrf.mxu0
        %v2367 = vadd.f32 %v1816, %v2366
        %v2368 = vpop.f32.mrf.mxu0
        %2369 = vmatprep.mubr.bf16.mxu0 0
        %2370 = vmatmul.mubr.bf16.gmra.mxu0 %v1867
        %v2371 = vpop.f32.mrf.mxu0
        %v2372 = vadd.f32 %v1816, %v2371
        %v2373 = vpop.f32.mrf.mxu0
        %v2374 = vpop.f32.mrf.mxu0
        %v2375 = vadd.f32 %v1816, %v2374
        %v2376 = vpop.f32.mrf.mxu0
        %2377 = vmatprep.mubr.bf16.mxu0 0
        %2378 = vmatmul.mubr.bf16.gmra.mxu0 %v1870
        %v2379 = vpop.f32.mrf.mxu0
        %v2380 = vadd.f32 %v1816, %v2379
        %v2381 = vpop.f32.mrf.mxu0
        %v2382 = vpop.f32.mrf.mxu0
        %v2383 = vadd.f32 %v1816, %v2382
        %v2384 = vpop.f32.mrf.mxu0
        %2385 = vmatprep.mubr.bf16.mxu0 0
        %2386 = vmatmul.mubr.bf16.gmra.mxu0 %v1873
        %v2387 = vpop.f32.mrf.mxu0
        %v2388 = vadd.f32 %v1816, %v2387
        %v2389 = vpop.f32.mrf.mxu0
        %v2390 = vpop.f32.mrf.mxu0
        %v2391 = vadd.f32 %v1816, %v2390
        %v2392 = vpop.f32.mrf.mxu0
        %2393 = vmatprep.mubr.bf16.mxu0 0
        %2394 = vmatmul.mubr.bf16.gmra.mxu0 %v1876
        %v2395 = vpop.f32.mrf.mxu0
        %v2396 = vadd.f32 %v1816, %v2395
        %v2397 = vpop.f32.mrf.mxu0
        %v2398 = vpop.f32.mrf.mxu0
        %v2399 = vadd.f32 %v1816, %v2398
        %v2400 = vpop.f32.mrf.mxu0
        %2401 = vmatprep.mubr.bf16.mxu0 0
        %2402 = vmatmul.mubr.bf16.gmra.mxu0 %v1879
        %v2403 = vpop.f32.mrf.mxu0
        %v2404 = vadd.f32 %v1816, %v2403
        %v2405 = vpop.f32.mrf.mxu0
        %v2406 = vpop.f32.mrf.mxu0
        %v2407 = vadd.f32 %v1816, %v2406
        %v2408 = vpop.f32.mrf.mxu0
        %2409 = vmatprep.mubr.bf16.mxu0 0
        %2410 = vmatmul.mubr.bf16.gmra.mxu0 %v1882
        %v2411 = vpop.f32.mrf.mxu0
        %v2412 = vadd.f32 %v1816, %v2411
        %v2413 = vpop.f32.mrf.mxu0
        %v2414 = vpop.f32.mrf.mxu0
        %v2415 = vadd.f32 %v1816, %v2414
        %v2416 = vpop.f32.mrf.mxu0
        %2417 = vmatprep.mubr.bf16.mxu0 0
        %2418 = vmatmul.mubr.bf16.gmra.mxu0 %v1885
        %v2419 = vpop.f32.mrf.mxu0
        %v2420 = vadd.f32 %v1816, %v2419
        %v2421 = vpop.f32.mrf.mxu0
        %v2422 = vpop.f32.mrf.mxu0
        %v2423 = vadd.f32 %v1816, %v2422
        %v2424 = vpop.f32.mrf.mxu0
        %2425 = vmatprep.mubr.bf16.mxu0 0
        %2426 = vmatmul.mubr.bf16.gmra.mxu0 %v1888
        %v2427 = vpop.f32.mrf.mxu0
        %v2428 = vadd.f32 %v1816, %v2427
        %v2429 = vpop.f32.mrf.mxu0
        %v2430 = vpop.f32.mrf.mxu0
        %v2431 = vadd.f32 %v1816, %v2430
        %v2432 = vpop.f32.mrf.mxu0
        %2433 = vmatprep.mubr.bf16.mxu0 0
        %2434 = vmatmul.mubr.bf16.gmra.mxu0 %v1891
        %v2435 = vpop.f32.mrf.mxu0
        %v2436 = vadd.f32 %v1816, %v2435
        %v2437 = vpop.f32.mrf.mxu0
        %v2438 = vpop.f32.mrf.mxu0
        %v2439 = vadd.f32 %v1816, %v2438
        %v2440 = vpop.f32.mrf.mxu0
        %2441 = vmatprep.mubr.bf16.mxu0 0
        %2442 = vmatmul.mubr.bf16.gmra.mxu0 %v1894
        %v2443 = vpop.f32.mrf.mxu0
        %v2444 = vadd.f32 %v1816, %v2443
        %v2445 = vpop.f32.mrf.mxu0
        %v2446 = vpop.f32.mrf.mxu0
        %v2447 = vadd.f32 %v1816, %v2446
        %v2448 = vpop.f32.mrf.mxu0
        %2449 = vmatprep.mubr.bf16.mxu0 0
        %2450 = vmatmul.mubr.bf16.gmra.mxu0 %v1897
        %v2451 = vpop.f32.mrf.mxu0
        %v2452 = vadd.f32 %v1816, %v2451
        %v2453 = vpop.f32.mrf.mxu0
        %v2454 = vpop.f32.mrf.mxu0
        %v2455 = vadd.f32 %v1816, %v2454
        %v2456 = vpop.f32.mrf.mxu0
        %2457 = vmatprep.mubr.bf16.mxu0 0
        %2458 = vmatmul.mubr.bf16.gmra.mxu0 %v1900
        %v2459 = vpop.f32.mrf.mxu0
        %v2460 = vadd.f32 %v1816, %v2459
        %v2461 = vpop.f32.mrf.mxu0
        %v2462 = vpop.f32.mrf.mxu0
        %v2463 = vadd.f32 %v1816, %v2462
        %v2464 = vpop.f32.mrf.mxu0
        %2465 = vmatprep.mubr.bf16.mxu0 0
        %2466 = vmatmul.mubr.bf16.gmra.mxu0 %v1903
        %v2467 = vpop.f32.mrf.mxu0
        %v2468 = vadd.f32 %v1816, %v2467
        %v2469 = vpop.f32.mrf.mxu0
        %v2470 = vpop.f32.mrf.mxu0
        %v2471 = vadd.f32 %v1816, %v2470
        %v2472 = vpop.f32.mrf.mxu0
        %2473 = vmatprep.mubr.bf16.mxu0 0
        %2474 = vmatmul.mubr.bf16.gmra.mxu0 %v1906
        %v2475 = vpop.f32.mrf.mxu0
        %v2476 = vadd.f32 %v1816, %v2475
        %v2477 = vpop.f32.mrf.mxu0
        %v2478 = vpop.f32.mrf.mxu0
        %v2479 = vadd.f32 %v1816, %v2478
        %v2480 = vpop.f32.mrf.mxu0
        %2481 = vmatprep.mubr.bf16.mxu0 0
        %2482 = vmatmul.mubr.bf16.gmra.mxu0 %v1909
        %v2483 = vpop.f32.mrf.mxu0
        %v2484 = vadd.f32 %v1816, %v2483
        %v2485 = vpop.f32.mrf.mxu0
        %v2486 = vpop.f32.mrf.mxu0
        %v2487 = vadd.f32 %v1816, %v2486
        %v2488 = vpop.f32.mrf.mxu0
        %2489 = vmatprep.mubr.bf16.mxu0 0
        %2490 = vmatmul.mubr.bf16.gmra.mxu0 %v1912
        %v2491 = vpop.f32.mrf.mxu0
        %v2492 = vadd.f32 %v1816, %v2491
        %v2493 = vpop.f32.mrf.mxu0
        %v2494 = vpop.f32.mrf.mxu0
        %v2495 = vadd.f32 %v1816, %v2494
        %v2496 = vpop.f32.mrf.mxu0
        %2497 = vmatprep.mubr.bf16.mxu0 0
        %2498 = vmatmul.mubr.bf16.gmra.mxu0 %v1915
        %v2499 = vpop.f32.mrf.mxu0
        %v2500 = vadd.f32 %v1816, %v2499
        %v2501 = vpop.f32.mrf.mxu0
        %v2502 = vpop.f32.mrf.mxu0
        %v2503 = vadd.f32 %v1816, %v2502
        %v2504 = vpop.f32.mrf.mxu0
        %2505 = vmatprep.mubr.bf16.mxu0 0
        %2506 = vmatmul.mubr.bf16.gmra.mxu0 %v1918
        %v2507 = vpop.f32.mrf.mxu0
        %v2508 = vadd.f32 %v1816, %v2507
        %v2509 = vpop.f32.mrf.mxu0
        %v2510 = vpop.f32.mrf.mxu0
        %v2511 = vadd.f32 %v1816, %v2510
        %v2512 = vpop.f32.mrf.mxu0
        %2513 = vmatprep.mubr.bf16.mxu0 0
        %2514 = vmatmul.mubr.bf16.gmra.mxu0 %v1921
        %v2515 = vpop.f32.mrf.mxu0
        %v2516 = vadd.f32 %v1816, %v2515
        %v2517 = vpop.f32.mrf.mxu0
        %v2518 = vpop.f32.mrf.mxu0
        %v2519 = vadd.f32 %v1816, %v2518
        %v2520 = vpop.f32.mrf.mxu0
        %2521 = vmatprep.mubr.bf16.mxu0 0
        %2522 = vmatmul.mubr.bf16.gmra.mxu0 %v1924
        %v2523 = vpop.f32.mrf.mxu0
        %v2524 = vadd.f32 %v1816, %v2523
        %v2525 = vpop.f32.mrf.mxu0
        %v2526 = vpop.f32.mrf.mxu0
        %v2527 = vadd.f32 %v1816, %v2526
        %v2528 = vpop.f32.mrf.mxu0
        %2529 = vmatprep.mubr.bf16.mxu0 0
        %2530 = vmatmul.mubr.bf16.gmra.mxu0 %v1927
        %v2531 = vpop.f32.mrf.mxu0
        %v2532 = vadd.f32 %v1816, %v2531
        %v2533 = vpop.f32.mrf.mxu0
        %v2534 = vpop.f32.mrf.mxu0
        %v2535 = vadd.f32 %v1816, %v2534
        %v2536 = vpop.f32.mrf.mxu0
        %2537 = vmatprep.mubr.bf16.mxu0 0
        %2538 = vmatmul.mubr.bf16.gmra.mxu0 %v1930
        %v2539 = vpop.f32.mrf.mxu0
        %v2540 = vadd.f32 %v1816, %v2539
        %v2541 = vpop.f32.mrf.mxu0
        %v2542 = vpop.f32.mrf.mxu0
        %v2543 = vadd.f32 %v1816, %v2542
        %v2544 = vpop.f32.mrf.mxu0
        %2545 = vmatprep.mubr.bf16.mxu0 0
        %2546 = vmatmul.mubr.bf16.gmra.mxu0 %v1933
        %v2547 = vpop.f32.mrf.mxu0
        %v2548 = vadd.f32 %v1816, %v2547
        %v2549 = vpop.f32.mrf.mxu0
        %v2550 = vpop.f32.mrf.mxu0
        %v2551 = vadd.f32 %v1816, %v2550
        %v2552 = vpop.f32.mrf.mxu0
        %2553 = vmatprep.mubr.bf16.mxu0 0
        %2554 = vmatmul.mubr.bf16.gmra.mxu0 %v1936
        %v2555 = vpop.f32.mrf.mxu0
        %v2556 = vadd.f32 %v1816, %v2555
        %v2557 = vpop.f32.mrf.mxu0
        %v2558 = vpop.f32.mrf.mxu0
        %v2559 = vadd.f32 %v1816, %v2558
        %v2560 = vpop.f32.mrf.mxu0
        %2561 = vmatprep.mubr.bf16.mxu0 0
        %2562 = vmatmul.mubr.bf16.gmra.mxu0 %v1939
        %v2563 = vpop.f32.mrf.mxu0
        %v2564 = vadd.f32 %v1816, %v2563
        %v2565 = vpop.f32.mrf.mxu0
        %v2566 = vpop.f32.mrf.mxu0
        %v2567 = vadd.f32 %v1816, %v2566
        %v2568 = vpop.f32.mrf.mxu0
        %2569 = vmatprep.mubr.bf16.mxu0 0
        %2570 = vmatmul.mubr.bf16.gmra.mxu0 %v1942
        %v2571 = vpop.f32.mrf.mxu0
        %v2572 = vadd.f32 %v1816, %v2571
        %v2573 = vpop.f32.mrf.mxu0
        %v2574 = vpop.f32.mrf.mxu0
        %v2575 = vadd.f32 %v1816, %v2574
        %v2576 = vpop.f32.mrf.mxu0
        %2577 = vmatprep.mubr.bf16.mxu0 0
        %2578 = vmatmul.mubr.bf16.gmra.mxu0 %v1945
        %v2579 = vpop.f32.mrf.mxu0
        %v2580 = vadd.f32 %v1816, %v2579
        %v2581 = vpop.f32.mrf.mxu0
        %v2582 = vpop.f32.mrf.mxu0
        %v2583 = vadd.f32 %v1816, %v2582
        %v2584 = vpop.f32.mrf.mxu0
        %2585 = vmatprep.mubr.bf16.mxu0 0
        %2586 = vmatmul.mubr.bf16.gmra.mxu0 %v1948
        %v2587 = vpop.f32.mrf.mxu0
        %v2588 = vadd.f32 %v1816, %v2587
        %v2589 = vpop.f32.mrf.mxu0
        %v2590 = vpop.f32.mrf.mxu0
        %v2591 = vadd.f32 %v1816, %v2590
        %v2592 = vpop.f32.mrf.mxu0
        %2593 = vmatprep.mubr.bf16.mxu0 0
        %2594 = vmatmul.mubr.bf16.gmra.mxu0 %v1951
        %v2595 = vpop.f32.mrf.mxu0
        %v2596 = vadd.f32 %v1816, %v2595
        %v2597 = vpop.f32.mrf.mxu0
        %v2598 = vpop.f32.mrf.mxu0
        %v2599 = vadd.f32 %v1816, %v2598
        %v2600 = vpop.f32.mrf.mxu0
        %2601 = vmatprep.mubr.bf16.mxu0 0
        %2602 = vmatmul.mubr.bf16.gmra.mxu0 %v1954
        %v2603 = vpop.f32.mrf.mxu0
        %v2604 = vadd.f32 %v1816, %v2603
        %v2605 = vpop.f32.mrf.mxu0
        %v2606 = vpop.f32.mrf.mxu0
        %v2607 = vadd.f32 %v1816, %v2606
        %v2608 = vpop.f32.mrf.mxu0
        %2609 = vmatprep.mubr.bf16.mxu0 0
        %2610 = vmatmul.mubr.bf16.gmra.mxu0 %v1957
        %v2611 = vpop.f32.mrf.mxu0
        %v2612 = vadd.f32 %v1816, %v2611
        %v2613 = vpop.f32.mrf.mxu0
        %v2614 = vpop.f32.mrf.mxu0
        %v2615 = vadd.f32 %v1816, %v2614
        %v2616 = vpop.f32.mrf.mxu0
        %2617 = vmatprep.mubr.bf16.mxu0 0
        %2618 = vmatmul.mubr.bf16.gmra.mxu0 %v1960
        %v2619 = vpop.f32.mrf.mxu0
        %v2620 = vadd.f32 %v1816, %v2619
        %v2621 = vpop.f32.mrf.mxu0
        %v2622 = vpop.f32.mrf.mxu0
        %v2623 = vadd.f32 %v1816, %v2622
        %v2624 = vpop.f32.mrf.mxu0
        %2625 = vmatprep.mubr.bf16.mxu0 0
        %2626 = vmatmul.mubr.bf16.gmra.mxu0 %v1963
        %v2627 = vpop.f32.mrf.mxu0
        %v2628 = vadd.f32 %v1816, %v2627
        %v2629 = vpop.f32.mrf.mxu0
        %v2630 = vpop.f32.mrf.mxu0
        %v2631 = vadd.f32 %v1816, %v2630
        %v2632 = vpop.f32.mrf.mxu0
        %2633 = vmatprep.mubr.bf16.mxu0 0
        %2634 = vmatmul.mubr.bf16.gmra.mxu0 %v1966
        %v2635 = vpop.f32.mrf.mxu0
        %v2636 = vadd.f32 %v1816, %v2635
        %v2637 = vpop.f32.mrf.mxu0
        %v2638 = vpop.f32.mrf.mxu0
        %v2639 = vadd.f32 %v1816, %v2638
        %v2640 = vpop.f32.mrf.mxu0
        %2641 = vmatprep.mubr.bf16.mxu0 0
        %2642 = vmatmul.mubr.bf16.gmra.mxu0 %v1969
        %v2643 = vpop.f32.mrf.mxu0
        %v2644 = vadd.f32 %v1816, %v2643
        %v2645 = vpop.f32.mrf.mxu0
        %v2646 = vpop.f32.mrf.mxu0
        %v2647 = vadd.f32 %v1816, %v2646
        %v2648 = vpop.f32.mrf.mxu0
        %2649 = vmatprep.mubr.bf16.mxu0 0
        %2650 = vmatmul.mubr.bf16.gmra.mxu0 %v1972
        %v2651 = vpop.f32.mrf.mxu0
        %v2652 = vadd.f32 %v1816, %v2651
        %v2653 = vpop.f32.mrf.mxu0
        %v2654 = vpop.f32.mrf.mxu0
        %v2655 = vadd.f32 %v1816, %v2654
        %v2656 = vpop.f32.mrf.mxu0
        %2657 = vmatprep.mubr.bf16.mxu0 0
        %2658 = vmatmul.mubr.bf16.gmra.mxu0 %v1975
        %v2659 = vpop.f32.mrf.mxu0
        %v2660 = vadd.f32 %v1816, %v2659
        %v2661 = vpop.f32.mrf.mxu0
        %v2662 = vpop.f32.mrf.mxu0
        %v2663 = vadd.f32 %v1816, %v2662
        %v2664 = vpop.f32.mrf.mxu0
        %2665 = vmatprep.mubr.bf16.mxu0 0
        %2666 = vmatmul.mubr.bf16.gmra.mxu0 %v1978
        %v2667 = vpop.f32.mrf.mxu0
        %v2668 = vadd.f32 %v1816, %v2667
        %v2669 = vpop.f32.mrf.mxu0
        %v2670 = vpop.f32.mrf.mxu0
        %v2671 = vadd.f32 %v1816, %v2670
        %v2672 = vpop.f32.mrf.mxu0
        %2673 = vmatprep.mubr.bf16.mxu0 0
        %2674 = vmatmul.mubr.bf16.gmra.mxu0 %v1981
        %v2675 = vpop.f32.mrf.mxu0
        %v2676 = vadd.f32 %v1816, %v2675
        %v2677 = vpop.f32.mrf.mxu0
        %v2678 = vpop.f32.mrf.mxu0
        %v2679 = vadd.f32 %v1816, %v2678
        %v2680 = vpop.f32.mrf.mxu0
        %2681 = vmatprep.mubr.bf16.mxu0 0
        %2682 = vmatmul.mubr.bf16.gmra.mxu0 %v1984
        %v2683 = vpop.f32.mrf.mxu0
        %v2684 = vadd.f32 %v1816, %v2683
        %v2685 = vpop.f32.mrf.mxu0
        %v2686 = vpop.f32.mrf.mxu0
        %v2687 = vadd.f32 %v1816, %v2686
        %v2688 = vpop.f32.mrf.mxu0
        %2689 = vmatprep.mubr.bf16.mxu0 0
        %2690 = vmatmul.mubr.bf16.gmra.mxu0 %v1987
        %v2691 = vpop.f32.mrf.mxu0
        %v2692 = vadd.f32 %v1816, %v2691
        %v2693 = vpop.f32.mrf.mxu0
        %v2694 = vpop.f32.mrf.mxu0
        %v2695 = vadd.f32 %v1816, %v2694
        %v2696 = vpop.f32.mrf.mxu0
        %2697 = vmatprep.mubr.bf16.mxu0 0
        %2698 = vmatmul.mubr.bf16.gmra.mxu0 %v1990
        %v2699 = vpop.f32.mrf.mxu0
        %v2700 = vadd.f32 %v1816, %v2699
        %v2701 = vpop.f32.mrf.mxu0
        %v2702 = vpop.f32.mrf.mxu0
        %v2703 = vadd.f32 %v1816, %v2702
        %v2704 = vpop.f32.mrf.mxu0
        %2705 = vmatprep.mubr.bf16.mxu0 0
        %2706 = vmatmul.mubr.bf16.gmra.mxu0 %v1993
        %v2707 = vpop.f32.mrf.mxu0
        %v2708 = vadd.f32 %v1816, %v2707
        %v2709 = vpop.f32.mrf.mxu0
        %v2710 = vpop.f32.mrf.mxu0
        %v2711 = vadd.f32 %v1816, %v2710
        %v2712 = vpop.f32.mrf.mxu0
        %2713 = vmatprep.mubr.bf16.mxu0 0
        %2714 = vmatmul.mubr.bf16.gmra.mxu0 %v1996
        %v2715 = vpop.f32.mrf.mxu0
        %v2716 = vadd.f32 %v1816, %v2715
        %v2717 = vpop.f32.mrf.mxu0
        %v2718 = vpop.f32.mrf.mxu0
        %v2719 = vadd.f32 %v1816, %v2718
        %v2720 = vpop.f32.mrf.mxu0
        %2721 = vmatprep.mubr.bf16.mxu0 0
        %2722 = vmatmul.mubr.bf16.gmra.mxu0 %v1999
        %v2723 = vpop.f32.mrf.mxu0
        %v2724 = vadd.f32 %v1816, %v2723
        %v2725 = vpop.f32.mrf.mxu0
        %v2726 = vpop.f32.mrf.mxu0
        %v2727 = vadd.f32 %v1816, %v2726
        %v2728 = vpop.f32.mrf.mxu0
        %2729 = vmatprep.mubr.bf16.mxu0 0
        %2730 = vmatmul.mubr.bf16.gmra.mxu0 %v2002
        %v2731 = vpop.f32.mrf.mxu0
        %v2732 = vadd.f32 %v1816, %v2731
        %v2733 = vpop.f32.mrf.mxu0
        %v2734 = vpop.f32.mrf.mxu0
        %v2735 = vadd.f32 %v1816, %v2734
        %v2736 = vpop.f32.mrf.mxu0
        %2737 = vmatprep.mubr.bf16.mxu0 0
        %2738 = vmatmul.mubr.bf16.gmra.mxu0 %v2005
        %v2739 = vpop.f32.mrf.mxu0
        %v2740 = vadd.f32 %v1816, %v2739
        %v2741 = vpop.f32.mrf.mxu0
        %v2742 = vpop.f32.mrf.mxu0
        %v2743 = vadd.f32 %v1816, %v2742
        %v2744 = vpop.f32.mrf.mxu0
        %2745 = vmatprep.mubr.bf16.mxu0 0
        %2746 = vmatmul.mubr.bf16.gmra.mxu0 %v2008
        %v2747 = vpop.f32.mrf.mxu0
        %v2748 = vadd.f32 %v1816, %v2747
        %v2749 = vpop.f32.mrf.mxu0
        %v2750 = vpop.f32.mrf.mxu0
        %v2751 = vadd.f32 %v1816, %v2750
        %v2752 = vpop.f32.mrf.mxu0
        %2753 = vmatprep.mubr.bf16.mxu0 0
        %2754 = vmatmul.mubr.bf16.gmra.mxu0 %v2011
        %v2755 = vpop.f32.mrf.mxu0
        %v2756 = vadd.f32 %v1816, %v2755
        %v2757 = vpop.f32.mrf.mxu0
        %v2758 = vpop.f32.mrf.mxu0
        %v2759 = vadd.f32 %v1816, %v2758
        %v2760 = vpop.f32.mrf.mxu0
        %2761 = vmatprep.mubr.bf16.mxu0 0
        %2762 = vmatmul.mubr.bf16.gmra.mxu0 %v2014
        %v2763 = vpop.f32.mrf.mxu0
        %v2764 = vadd.f32 %v1816, %v2763
        %v2765 = vpop.f32.mrf.mxu0
        %v2766 = vpop.f32.mrf.mxu0
        %v2767 = vadd.f32 %v1816, %v2766
        %v2768 = vpop.f32.mrf.mxu0
        %2769 = vmatprep.mubr.bf16.mxu0 0
        %2770 = vmatmul.mubr.bf16.gmra.mxu0 %v2017
        %v2771 = vpop.f32.mrf.mxu0
        %v2772 = vadd.f32 %v1816, %v2771
        %v2773 = vpop.f32.mrf.mxu0
        %v2774 = vpop.f32.mrf.mxu0
        %v2775 = vadd.f32 %v1816, %v2774
        %v2776 = vpop.f32.mrf.mxu0
        %2777 = vmatprep.mubr.bf16.mxu0 0
        %2778 = vmatmul.mubr.bf16.gmra.mxu0 %v2020
        %v2779 = vpop.f32.mrf.mxu0
        %v2780 = vadd.f32 %v1816, %v2779
        %v2781 = vpop.f32.mrf.mxu0
        %v2782 = vpop.f32.mrf.mxu0
        %v2783 = vadd.f32 %v1816, %v2782
        %v2784 = vpop.f32.mrf.mxu0
        %2785 = vmatprep.mubr.bf16.mxu0 0
        %2786 = vmatmul.mubr.bf16.gmra.mxu0 %v2023
        %v2787 = vpop.f32.mrf.mxu0
        %v2788 = vadd.f32 %v1816, %v2787
        %v2789 = vpop.f32.mrf.mxu0
        %v2790 = vpop.f32.mrf.mxu0
        %v2791 = vadd.f32 %v1816, %v2790
        %v2792 = vpop.f32.mrf.mxu0
        %2793 = vmatprep.mubr.bf16.mxu0 0
        %2794 = vmatmul.mubr.bf16.gmra.mxu0 %v2026
        %v2795 = vpop.f32.mrf.mxu0
        %v2796 = vadd.f32 %v1816, %v2795
        %v2797 = vpop.f32.mrf.mxu0
        %v2798 = vpop.f32.mrf.mxu0
        %v2799 = vadd.f32 %v1816, %v2798
        %v2800 = vpop.f32.mrf.mxu0
        %2801 = vmatprep.mubr.bf16.mxu0 0
        %2802 = vmatmul.mubr.bf16.gmra.mxu0 %v2029
        %v2803 = vpop.f32.mrf.mxu0
        %v2804 = vadd.f32 %v1816, %v2803
        %v2805 = vpop.f32.mrf.mxu0
        %v2806 = vpop.f32.mrf.mxu0
        %v2807 = vadd.f32 %v1816, %v2806
        %v2808 = vpop.f32.mrf.mxu0
        %2809 = vmatprep.mubr.bf16.mxu0 0
        %2810 = vmatmul.mubr.bf16.gmra.mxu0 %v2032
        %v2811 = vpop.f32.mrf.mxu0
        %v2812 = vadd.f32 %v1816, %v2811
        %v2813 = vpop.f32.mrf.mxu0
        %v2814 = vpop.f32.mrf.mxu0
        %v2815 = vadd.f32 %v1816, %v2814
        %v2816 = vpop.f32.mrf.mxu0
        %2817 = vmatprep.mubr.bf16.mxu0 0
        %2818 = vmatmul.mubr.bf16.gmra.mxu0 %v2035
        %v2819 = vpop.f32.mrf.mxu0
        %v2820 = vadd.f32 %v1816, %v2819
        %v2821 = vpop.f32.mrf.mxu0
        %v2822 = vpop.f32.mrf.mxu0
        %v2823 = vadd.f32 %v1816, %v2822
        %v2824 = vpop.f32.mrf.mxu0
        %2825 = vmatprep.mubr.bf16.mxu0 0
        %2826 = vmatmul.mubr.bf16.gmra.mxu0 %v2038
        %v2827 = vpop.f32.mrf.mxu0
        %v2828 = vadd.f32 %v1816, %v2827
        %v2829 = vpop.f32.mrf.mxu0
        %v2830 = vpop.f32.mrf.mxu0
        %v2831 = vadd.f32 %v1816, %v2830
        %v2832 = vpop.f32.mrf.mxu0
        %2833 = vmatprep.mubr.bf16.mxu0 0
        %2834 = vmatmul.mubr.bf16.gmra.mxu0 %v2041
        %v2835 = vpop.f32.mrf.mxu0
        %v2836 = vadd.f32 %v1816, %v2835
        %v2837 = vpop.f32.mrf.mxu0
        %v2838 = vpop.f32.mrf.mxu0
        %v2839 = vadd.f32 %v1816, %v2838
        %v2840 = vpop.f32.mrf.mxu0
        %2841 = vmatprep.mubr.bf16.mxu0 0
        %2842 = vmatmul.mubr.bf16.gmra.mxu0 %v2044
        %v2843 = vpop.f32.mrf.mxu0
        %v2844 = vadd.f32 %v1816, %v2843
        %v2845 = vpop.f32.mrf.mxu0
        %v2846 = vpop.f32.mrf.mxu0
        %v2847 = vadd.f32 %v1816, %v2846
        %v2848 = vpop.f32.mrf.mxu0
        %2849 = vmatprep.mubr.bf16.mxu0 0
        %2850 = vmatmul.mubr.bf16.gmra.mxu0 %v2047
        %v2851 = vpop.f32.mrf.mxu0
        %v2852 = vadd.f32 %v1816, %v2851
        %v2853 = vpop.f32.mrf.mxu0
        %v2854 = vpop.f32.mrf.mxu0
        %v2855 = vadd.f32 %v1816, %v2854
        %v2856 = vpop.f32.mrf.mxu0
        %2857 = vmatprep.mubr.bf16.mxu0 0
        %2858 = vmatmul.mubr.bf16.gmra.mxu0 %v2050
        %v2859 = vpop.f32.mrf.mxu0
        %v2860 = vadd.f32 %v1816, %v2859
        %v2861 = vpop.f32.mrf.mxu0
        %v2862 = vpop.f32.mrf.mxu0
        %v2863 = vadd.f32 %v1816, %v2862
        %v2864 = vpop.f32.mrf.mxu0
        %2865 = vmatprep.mubr.bf16.mxu0 0
        %2866 = vmatmul.mubr.bf16.gmra.mxu0 %v2053
        %v2867 = vpop.f32.mrf.mxu0
        %v2868 = vadd.f32 %v1816, %v2867
        %v2869 = vpop.f32.mrf.mxu0
        %v2870 = vpop.f32.mrf.mxu0
        %v2871 = vadd.f32 %v1816, %v2870
        %v2872 = vpop.f32.mrf.mxu0
        %2873 = vmatprep.mubr.bf16.mxu0 0
        %2874 = vmatmul.mubr.bf16.gmra.mxu0 %v2056
        %v2875 = vpop.f32.mrf.mxu0
        %v2876 = vadd.f32 %v1816, %v2875
        %v2877 = vpop.f32.mrf.mxu0
        %v2878 = vpop.f32.mrf.mxu0
        %v2879 = vadd.f32 %v1816, %v2878
        %v2880 = vpop.f32.mrf.mxu0
        %2881 = vmatprep.mubr.bf16.mxu0 0
        %2882 = vmatmul.mubr.bf16.gmra.mxu0 %v2059
        %v2883 = vpop.f32.mrf.mxu0
        %v2884 = vadd.f32 %v1816, %v2883
        %v2885 = vpop.f32.mrf.mxu0
        %v2886 = vpop.f32.mrf.mxu0
        %v2887 = vadd.f32 %v1816, %v2886
        %v2888 = vpop.f32.mrf.mxu0
        %2889 = vmatprep.mubr.bf16.mxu0 0
        %2890 = vmatmul.mubr.bf16.gmra.mxu0 %v2062
        %v2891 = vpop.f32.mrf.mxu0
        %v2892 = vadd.f32 %v1816, %v2891
        %v2893 = vpop.f32.mrf.mxu0
        %v2894 = vpop.f32.mrf.mxu0
        %v2895 = vadd.f32 %v1816, %v2894
        %v2896 = vpop.f32.mrf.mxu0
        %2897 = vmatprep.mubr.bf16.mxu0 0
        %2898 = vmatmul.mubr.bf16.gmra.mxu0 %v2065
        %v2899 = vpop.f32.mrf.mxu0
        %v2900 = vadd.f32 %v1816, %v2899
        %v2901 = vpop.f32.mrf.mxu0
        %v2902 = vpop.f32.mrf.mxu0
        %v2903 = vadd.f32 %v1816, %v2902
        %v2904 = vpop.f32.mrf.mxu0
        %2905 = vmatprep.mubr.bf16.mxu0 0
        %2906 = vmatmul.mubr.bf16.gmra.mxu0 %v2068
        %v2907 = vpop.f32.mrf.mxu0
        %v2908 = vadd.f32 %v1816, %v2907
        %v2909 = vpop.f32.mrf.mxu0
        %v2910 = vpop.f32.mrf.mxu0
        %v2911 = vadd.f32 %v1816, %v2910
        %v2912 = vpop.f32.mrf.mxu0
        %2913 = vmatprep.mubr.bf16.mxu0 0
        %2914 = vmatmul.mubr.bf16.gmra.mxu0 %v2071
        %v2915 = vpop.f32.mrf.mxu0
        %v2916 = vadd.f32 %v1816, %v2915
        %v2917 = vpop.f32.mrf.mxu0
        %v2918 = vpop.f32.mrf.mxu0
        %v2919 = vadd.f32 %v1816, %v2918
        %v2920 = vpop.f32.mrf.mxu0
        %2921 = vmatprep.mubr.bf16.mxu0 0
        %2922 = vmatmul.mubr.bf16.gmra.mxu0 %v2074
        %v2923 = vpop.f32.mrf.mxu0
        %v2924 = vadd.f32 %v1816, %v2923
        %v2925 = vpop.f32.mrf.mxu0
        %v2926 = vpop.f32.mrf.mxu0
        %v2927 = vadd.f32 %v1816, %v2926
        %v2928 = vpop.f32.mrf.mxu0
        %2929 = vmatprep.mubr.bf16.mxu0 0
        %2930 = vmatmul.mubr.bf16.gmra.mxu0 %v2077
        %v2931 = vpop.f32.mrf.mxu0
        %v2932 = vadd.f32 %v1816, %v2931
        %v2933 = vpop.f32.mrf.mxu0
        %v2934 = vpop.f32.mrf.mxu0
        %v2935 = vadd.f32 %v1816, %v2934
        %v2936 = vpop.f32.mrf.mxu0
        %2937 = vmatprep.mubr.bf16.mxu0 0
        %2938 = vmatmul.mubr.bf16.gmra.mxu0 %v2080
        %v2939 = vpop.f32.mrf.mxu0
        %v2940 = vadd.f32 %v1816, %v2939
        %v2941 = vpop.f32.mrf.mxu0
        %v2942 = vpop.f32.mrf.mxu0
        %v2943 = vadd.f32 %v1816, %v2942
        %v2944 = vpop.f32.mrf.mxu0
        %2945 = vmatprep.mubr.bf16.mxu0 0
        %2946 = vmatmul.mubr.bf16.gmra.mxu0 %v2083
        %v2947 = vpop.f32.mrf.mxu0
        %v2948 = vadd.f32 %v1816, %v2947
        %v2949 = vpop.f32.mrf.mxu0
        %v2950 = vpop.f32.mrf.mxu0
        %v2951 = vadd.f32 %v1816, %v2950
        %v2952 = vpop.f32.mrf.mxu0
        %2953 = vmatprep.mubr.bf16.mxu0 0
        %2954 = vmatmul.mubr.bf16.gmra.mxu0 %v2086
        %v2955 = vpop.f32.mrf.mxu0
        %v2956 = vadd.f32 %v1816, %v2955
        %v2957 = vpop.f32.mrf.mxu0
        %v2958 = vpop.f32.mrf.mxu0
        %v2959 = vadd.f32 %v1816, %v2958
        %v2960 = vpop.f32.mrf.mxu0
        %2961 = vmatprep.mubr.bf16.mxu0 0
        %2962 = vmatmul.mubr.bf16.gmra.mxu0 %v2089
        %v2963 = vpop.f32.mrf.mxu0
        %v2964 = vadd.f32 %v1816, %v2963
        %v2965 = vpop.f32.mrf.mxu0
        %v2966 = vpop.f32.mrf.mxu0
        %v2967 = vadd.f32 %v1816, %v2966
        %v2968 = vpop.f32.mrf.mxu0
        %2969 = vmatprep.mubr.bf16.mxu0 0
        %2970 = vmatmul.mubr.bf16.gmra.mxu0 %v2092
        %v2971 = vpop.f32.mrf.mxu0
        %v2972 = vadd.f32 %v1816, %v2971
        %v2973 = vpop.f32.mrf.mxu0
        %v2974 = vpop.f32.mrf.mxu0
        %v2975 = vadd.f32 %v1816, %v2974
        %v2976 = vpop.f32.mrf.mxu0
        %2977 = vmatprep.mubr.bf16.mxu0 0
        %2978 = vmatmul.mubr.bf16.gmra.mxu0 %v2095
        %v2979 = vpop.f32.mrf.mxu0
        %v2980 = vadd.f32 %v1816, %v2979
        %v2981 = vpop.f32.mrf.mxu0
        %v2982 = vpop.f32.mrf.mxu0
        %v2983 = vadd.f32 %v1816, %v2982
        %v2984 = vpop.f32.mrf.mxu0
        %2985 = vmatprep.mubr.bf16.mxu0 0
        %2986 = vmatmul.mubr.bf16.gmra.mxu0 %v2098
        %v2987 = vpop.f32.mrf.mxu0
        %v2988 = vadd.f32 %v1816, %v2987
        %v2989 = vpop.f32.mrf.mxu0
        %v2990 = vpop.f32.mrf.mxu0
        %v2991 = vadd.f32 %v1816, %v2990
        %v2992 = vpop.f32.mrf.mxu0
        %2993 = vmatprep.mubr.bf16.mxu0 0
        %2994 = vmatmul.mubr.bf16.gmra.mxu0 %v2101
        %v2995 = vpop.f32.mrf.mxu0
        %v2996 = vadd.f32 %v1816, %v2995
        %v2997 = vpop.f32.mrf.mxu0
        %v2998 = vpop.f32.mrf.mxu0
        %v2999 = vadd.f32 %v1816, %v2998
        %v3000 = vpop.f32.mrf.mxu0
        %3001 = vmatprep.mubr.bf16.mxu0 0
        %3002 = vmatmul.mubr.bf16.gmra.mxu0 %v2104
        %v3003 = vpop.f32.mrf.mxu0
        %v3004 = vadd.f32 %v1816, %v3003
        %v3005 = vpop.f32.mrf.mxu0
        %v3006 = vpop.f32.mrf.mxu0
        %v3007 = vadd.f32 %v1816, %v3006
        %v3008 = vpop.f32.mrf.mxu0
        %3009 = vmatprep.mubr.bf16.mxu0 0
        %3010 = vmatmul.mubr.bf16.gmra.mxu0 %v2107
        %v3011 = vpop.f32.mrf.mxu0
        %v3012 = vadd.f32 %v1816, %v3011
        %v3013 = vpop.f32.mrf.mxu0
        %v3014 = vpop.f32.mrf.mxu0
        %v3015 = vadd.f32 %v1816, %v3014
        %v3016 = vpop.f32.mrf.mxu0
        %3017 = vmatprep.mubr.bf16.mxu0 0
        %3018 = vmatmul.mubr.bf16.gmra.mxu0 %v2110
        %v3019 = vpop.f32.mrf.mxu0
        %v3020 = vadd.f32 %v1816, %v3019
        %v3021 = vpop.f32.mrf.mxu0
        %v3022 = vpop.f32.mrf.mxu0
        %v3023 = vadd.f32 %v1816, %v3022
        %v3024 = vpop.f32.mrf.mxu0
        %3025 = vmatprep.mubr.bf16.mxu0 0
        %3026 = vmatmul.mubr.bf16.gmra.mxu0 %v2113
        %v3027 = vpop.f32.mrf.mxu0
        %v3028 = vadd.f32 %v1816, %v3027
        %v3029 = vpop.f32.mrf.mxu0
        %v3030 = vpop.f32.mrf.mxu0
        %v3031 = vadd.f32 %v1816, %v3030
        %v3032 = vpop.f32.mrf.mxu0
        %3033 = vmatprep.mubr.bf16.mxu0 0
        %3034 = vmatmul.mubr.bf16.gmra.mxu0 %v2116
        %v3035 = vpop.f32.mrf.mxu0
        %v3036 = vadd.f32 %v1816, %v3035
        %v3037 = vpop.f32.mrf.mxu0
        %v3038 = vpop.f32.mrf.mxu0
        %v3039 = vadd.f32 %v1816, %v3038
        %v3040 = vpop.f32.mrf.mxu0
        %3041 = vmatprep.mubr.bf16.mxu0 0
        %3042 = vmatmul.mubr.bf16.gmra.mxu0 %v2119
        %v3043 = vpop.f32.mrf.mxu0
        %v3044 = vadd.f32 %v1816, %v3043
        %v3045 = vpop.f32.mrf.mxu0
        %v3046 = vpop.f32.mrf.mxu0
        %v3047 = vadd.f32 %v1816, %v3046
        %v3048 = vpop.f32.mrf.mxu0
        %3049 = vmatprep.mubr.bf16.mxu0 0
        %3050 = vmatmul.mubr.bf16.gmra.mxu0 %v2122
        %v3051 = vpop.f32.mrf.mxu0
        %v3052 = vadd.f32 %v1816, %v3051
        %v3053 = vpop.f32.mrf.mxu0
        %v3054 = vpop.f32.mrf.mxu0
        %v3055 = vadd.f32 %v1816, %v3054
        %v3056 = vpop.f32.mrf.mxu0
        %3057 = vmatprep.mubr.bf16.mxu0 0
        %3058 = vmatmul.mubr.bf16.gmra.mxu0 %v2125
        %v3059 = vpop.f32.mrf.mxu0
        %v3060 = vadd.f32 %v1816, %v3059
        %v3061 = vpop.f32.mrf.mxu0
        %v3062 = vpop.f32.mrf.mxu0
        %v3063 = vadd.f32 %v1816, %v3062
        %v3064 = vpop.f32.mrf.mxu0
        %3065 = vmatprep.mubr.bf16.mxu0 0
        %3066 = vmatmul.mubr.bf16.gmra.mxu0 %v2128
        %v3067 = vpop.f32.mrf.mxu0
        %v3068 = vadd.f32 %v1816, %v3067
        %v3069 = vpop.f32.mrf.mxu0
        %v3070 = vpop.f32.mrf.mxu0
        %v3071 = vadd.f32 %v1816, %v3070
        %v3072 = vpop.f32.mrf.mxu0
        %3073 = vmatprep.mubr.bf16.mxu0 0
        %3074 = vmatmul.mubr.bf16.gmra.mxu0 %v2131
        %v3075 = vpop.f32.mrf.mxu0
        %v3076 = vadd.f32 %v1816, %v3075
        %v3077 = vpop.f32.mrf.mxu0
        %v3078 = vpop.f32.mrf.mxu0
        %v3079 = vadd.f32 %v1816, %v3078
        %v3080 = vpop.f32.mrf.mxu0
        %3081 = vmatprep.mubr.bf16.mxu0 0
        %3082 = vmatmul.mubr.bf16.gmra.mxu0 %v2134
        %v3083 = vpop.f32.mrf.mxu0
        %v3084 = vadd.f32 %v1816, %v3083
        %v3085 = vpop.f32.mrf.mxu0
        %v3086 = vpop.f32.mrf.mxu0
        %v3087 = vadd.f32 %v1816, %v3086
        %v3088 = vpop.f32.mrf.mxu0
        %3089 = vmatprep.mubr.bf16.mxu0 0
        %3090 = vmatmul.mubr.bf16.gmra.mxu0 %v2137
        %v3091 = vpop.f32.mrf.mxu0
        %v3092 = vadd.f32 %v1816, %v3091
        %v3093 = vpop.f32.mrf.mxu0
        %v3094 = vpop.f32.mrf.mxu0
        %v3095 = vadd.f32 %v1816, %v3094
        %v3096 = vpop.f32.mrf.mxu0
        %3097 = vmatprep.mubr.bf16.mxu0 0
        %3098 = vmatmul.mubr.bf16.gmra.mxu0 %v2140
        %v3099 = vpop.f32.mrf.mxu0
        %v3100 = vadd.f32 %v1816, %v3099
        %v3101 = vpop.f32.mrf.mxu0
        %v3102 = vpop.f32.mrf.mxu0
        %v3103 = vadd.f32 %v1816, %v3102
        %v3104 = vpop.f32.mrf.mxu0
        %3105 = vmatprep.mubr.bf16.mxu0 0
        %3106 = vmatmul.mubr.bf16.gmra.mxu0 %v2143
        %v3107 = vpop.f32.mrf.mxu0
        %v3108 = vadd.f32 %v1816, %v3107
        %v3109 = vpop.f32.mrf.mxu0
        %v3110 = vpop.f32.mrf.mxu0
        %v3111 = vadd.f32 %v1816, %v3110
        %v3112 = vpop.f32.mrf.mxu0
        %3113 = vmatprep.mubr.bf16.mxu0 0
        %3114 = vmatmul.mubr.bf16.gmra.mxu0 %v2146
        %v3115 = vpop.f32.mrf.mxu0
        %v3116 = vadd.f32 %v1816, %v3115
        %v3117 = vpop.f32.mrf.mxu0
        %v3118 = vpop.f32.mrf.mxu0
        %v3119 = vadd.f32 %v1816, %v3118
        %v3120 = vpop.f32.mrf.mxu0
        %3121 = vmatprep.mubr.bf16.mxu0 0
        %3122 = vmatmul.mubr.bf16.gmra.mxu0 %v2149
        %v3123 = vpop.f32.mrf.mxu0
        %v3124 = vadd.f32 %v1816, %v3123
        %v3125 = vpop.f32.mrf.mxu0
        %v3126 = vpop.f32.mrf.mxu0
        %v3127 = vadd.f32 %v1816, %v3126
        %v3128 = vpop.f32.mrf.mxu0
        %3129 = vmatprep.mubr.bf16.mxu0 0
        %3130 = vmatmul.mubr.bf16.gmra.mxu0 %v2152
        %v3131 = vpop.f32.mrf.mxu0
        %v3132 = vadd.f32 %v1816, %v3131
        %v3133 = vpop.f32.mrf.mxu0
        %v3134 = vpop.f32.mrf.mxu0
        %v3135 = vadd.f32 %v1816, %v3134
        %v3136 = vpop.f32.mrf.mxu0
        %3137 = vmatprep.mubr.bf16.mxu0 0
        %3138 = vmatmul.mubr.bf16.gmra.mxu0 %v2155
        %v3139 = vpop.f32.mrf.mxu0
        %v3140 = vadd.f32 %v1816, %v3139
        %v3141 = vpop.f32.mrf.mxu0
        %v3142 = vpop.f32.mrf.mxu0
        %v3143 = vadd.f32 %v1816, %v3142
        %v3144 = vpop.f32.mrf.mxu0
        %3145 = vmatprep.mubr.bf16.mxu0 0
        %3146 = vmatmul.mubr.bf16.gmra.mxu0 %v2158
        %v3147 = vpop.f32.mrf.mxu0
        %v3148 = vadd.f32 %v1816, %v3147
        %v3149 = vpop.f32.mrf.mxu0
        %v3150 = vpop.f32.mrf.mxu0
        %v3151 = vadd.f32 %v1816, %v3150
        %v3152 = vpop.f32.mrf.mxu0
        %3153 = vmatprep.mubr.bf16.mxu0 0
        %3154 = vmatmul.mubr.bf16.gmra.mxu0 %v2161
        %v3155 = vpop.f32.mrf.mxu0
        %v3156 = vadd.f32 %v1816, %v3155
        %v3157 = vpop.f32.mrf.mxu0
        %v3158 = vpop.f32.mrf.mxu0
        %v3159 = vadd.f32 %v1816, %v3158
        %v3160 = vpop.f32.mrf.mxu0
        %3161 = vmatprep.mubr.bf16.mxu0 0
        %3162 = vmatmul.mubr.bf16.gmra.mxu0 %v2164
        %v3163 = vpop.f32.mrf.mxu0
        %v3164 = vadd.f32 %v1816, %v3163
        %v3165 = vpop.f32.mrf.mxu0
        %v3166 = vpop.f32.mrf.mxu0
        %v3167 = vadd.f32 %v1816, %v3166
        %v3168 = vpop.f32.mrf.mxu0
        %3169 = vmatprep.mubr.bf16.mxu0 0
        %3170 = vmatmul.mubr.bf16.gmra.mxu0 %v2167
        %v3171 = vpop.f32.mrf.mxu0
        %v3172 = vadd.f32 %v1816, %v3171
        %v3173 = vpop.f32.mrf.mxu0
        %v3174 = vpop.f32.mrf.mxu0
        %v3175 = vadd.f32 %v1816, %v3174
        %v3176 = vpop.f32.mrf.mxu0
        %3177 = vmatprep.mubr.bf16.mxu0 0
        %3178 = vmatmul.mubr.bf16.gmra.mxu0 %v2170
        %v3179 = vpop.f32.mrf.mxu0
        %v3180 = vadd.f32 %v1816, %v3179
        %v3181 = vpop.f32.mrf.mxu0
        %v3182 = vpop.f32.mrf.mxu0
        %v3183 = vadd.f32 %v1816, %v3182
        %v3184 = vpop.f32.mrf.mxu0
        %3185 = vmatprep.mubr.bf16.mxu0 0
        %3186 = vmatmul.mubr.bf16.gmra.mxu0 %v2173
        %v3187 = vpop.f32.mrf.mxu0
        %v3188 = vadd.f32 %v1816, %v3187
        %v3189 = vpop.f32.mrf.mxu0
        %v3190 = vpop.f32.mrf.mxu0
        %v3191 = vadd.f32 %v1816, %v3190
        %v3192 = vpop.f32.mrf.mxu0
        %3193 = vmatprep.mubr.bf16.mxu0 0
        %3194 = vmatmul.mubr.bf16.gmra.mxu0 %v2176
        %v3195 = vpop.f32.mrf.mxu0
        %v3196 = vadd.f32 %v1816, %v3195
        %v3197 = vpop.f32.mrf.mxu0
        %v3198 = vpop.f32.mrf.mxu0
        %v3199 = vadd.f32 %v1816, %v3198
        %v3200 = vpop.f32.mrf.mxu0
        %3201 = vmatprep.mubr.bf16.mxu0 0
        %3202 = vmatmul.mubr.bf16.gmra.mxu0 %v2179
        %v3203 = vpop.f32.mrf.mxu0
        %v3204 = vadd.f32 %v1816, %v3203
        %v3205 = vpop.f32.mrf.mxu0
        %v3206 = vpop.f32.mrf.mxu0
        %v3207 = vadd.f32 %v1816, %v3206
        %v3208 = vpop.f32.mrf.mxu0
        %3209 = vmatprep.mubr.bf16.mxu0 0
        %3210 = vmatmul.mubr.bf16.gmra.mxu0 %v2182
        %v3211 = vpop.f32.mrf.mxu0
        %v3212 = vadd.f32 %v1816, %v3211
        %v3213 = vpop.f32.mrf.mxu0
        %v3214 = vpop.f32.mrf.mxu0
        %v3215 = vadd.f32 %v1816, %v3214
        %v3216 = vpop.f32.mrf.mxu0
        %3217 = vmatprep.mubr.bf16.mxu0 0
        %3218 = vmatmul.mubr.bf16.gmra.mxu0 %v2185
        %v3219 = vpop.f32.mrf.mxu0
        %v3220 = vadd.f32 %v1816, %v3219
        %v3221 = vpop.f32.mrf.mxu0
        %v3222 = vpop.f32.mrf.mxu0
        %v3223 = vadd.f32 %v1816, %v3222
        %v3224 = vpop.f32.mrf.mxu0
        %3225 = vmatprep.mubr.bf16.mxu0 0
        %3226 = vmatmul.mubr.bf16.gmra.mxu0 %v2188
        %v3227 = vpop.f32.mrf.mxu0
        %v3228 = vadd.f32 %v1816, %v3227
        %v3229 = vpop.f32.mrf.mxu0
        %v3230 = vpop.f32.mrf.mxu0
        %v3231 = vadd.f32 %v1816, %v3230
        %v3232 = vpop.f32.mrf.mxu0
        %3233 = vmatprep.mubr.bf16.mxu0 0
        %3234 = vmatmul.mubr.bf16.gmra.mxu0 %v2191
        %v3235 = vpop.f32.mrf.mxu0
        %v3236 = vadd.f32 %v1816, %v3235
        %v3237 = vpop.f32.mrf.mxu0
        %v3238 = vpop.f32.mrf.mxu0
        %v3239 = vadd.f32 %v1816, %v3238
        %v3240 = vpop.f32.mrf.mxu0
        %3241 = vmatprep.mubr.bf16.mxu0 0
        %3242 = vmatmul.mubr.bf16.gmra.mxu0 %v2194
        %v3243 = vpop.f32.mrf.mxu0
        %v3244 = vadd.f32 %v1816, %v3243
        %v3245 = vpop.f32.mrf.mxu0
        %v3246 = vpop.f32.mrf.mxu0
        %v3247 = vadd.f32 %v1816, %v3246
        %v3248 = vpop.f32.mrf.mxu0
        %3249 = vmatprep.mubr.bf16.mxu0 0
        %3250 = vmatmul.mubr.bf16.gmra.mxu0 %v2197
        %v3251 = vpop.f32.mrf.mxu0
        %v3252 = vadd.f32 %v1816, %v3251
        %v3253 = vpop.f32.mrf.mxu0
        %v3254 = vpop.f32.mrf.mxu0
        %v3255 = vadd.f32 %v1816, %v3254
        %v3256 = vpop.f32.mrf.mxu0
        %3257 = vmatprep.mubr.bf16.mxu0 0
        %3258 = vmatmul.mubr.bf16.gmra.mxu0 %v2200
        %v3259 = vpop.f32.mrf.mxu0
        %v3260 = vadd.f32 %v1816, %v3259
        %v3261 = vpop.f32.mrf.mxu0
        %v3262 = vpop.f32.mrf.mxu0
        %v3263 = vadd.f32 %v1816, %v3262
        %v3264 = vpop.f32.mrf.mxu0
        %3265 = vdwg.mxu0
        %vm3266 = vcmask 130048
        %3267 = vst.msk [vmem:[%s622] sm:$0xff] %vm3266, %v2244
        %3268 = vst.msk [vmem:[%s622 + $0x8] sm:$0xff] %vm3266, %v2247
        %3269 = vst.msk [vmem:[%s622 + $0x10] sm:$0xff] %vm3266, %v2252
        %3270 = vst.msk [vmem:[%s622 + $0x18] sm:$0xff] %vm3266, %v2255
        %3271 = vst.msk [vmem:[%s622 + $0x20] sm:$0xff] %vm3266, %v2260
        %3272 = vst.msk [vmem:[%s622 + $0x28] sm:$0xff] %vm3266, %v2263
        %3273 = vst.msk [vmem:[%s622 + $0x30] sm:$0xff] %vm3266, %v2268
        %3274 = vst.msk [vmem:[%s622 + $0x38] sm:$0xff] %vm3266, %v2271
        %3275 = vst.msk [vmem:[%s622 + $0x40] sm:$0xff] %vm3266, %v2276
        %3276 = vst.msk [vmem:[%s622 + $0x48] sm:$0xff] %vm3266, %v2279
        %3277 = vst.msk [vmem:[%s622 + $0x50] sm:$0xff] %vm3266, %v2284
        %3278 = vst.msk [vmem:[%s622 + $0x58] sm:$0xff] %vm3266, %v2287
        %3279 = vst.msk [vmem:[%s622 + $0x60] sm:$0xff] %vm3266, %v2292
        %3280 = vst.msk [vmem:[%s622 + $0x68] sm:$0xff] %vm3266, %v2295
        %3281 = vst.msk [vmem:[%s622 + $0x70] sm:$0xff] %vm3266, %v2300
        %3282 = vst.msk [vmem:[%s622 + $0x78] sm:$0xff] %vm3266, %v2303
        %3283 = vst.msk [vmem:[%s622 + $0x80] sm:$0xff] %vm3266, %v2308
        %3284 = vst.msk [vmem:[%s622 + $0x88] sm:$0xff] %vm3266, %v2311
        %3285 = vst.msk [vmem:[%s622 + $0x90] sm:$0xff] %vm3266, %v2316
        %3286 = vst.msk [vmem:[%s622 + $0x98] sm:$0xff] %vm3266, %v2319
        %3287 = vst.msk [vmem:[%s622 + $0xa0] sm:$0xff] %vm3266, %v2324
        %3288 = vst.msk [vmem:[%s622 + $0xa8] sm:$0xff] %vm3266, %v2327
        %3289 = vst.msk [vmem:[%s622 + $0xb0] sm:$0xff] %vm3266, %v2332
        %3290 = vst.msk [vmem:[%s622 + $0xb8] sm:$0xff] %vm3266, %v2335
        %3291 = vst.msk [vmem:[%s622 + $0xc0] sm:$0xff] %vm3266, %v2340
        %3292 = vst.msk [vmem:[%s622 + $0xc8] sm:$0xff] %vm3266, %v2343
        %3293 = vst.msk [vmem:[%s622 + $0xd0] sm:$0xff] %vm3266, %v2348
        %3294 = vst.msk [vmem:[%s622 + $0xd8] sm:$0xff] %vm3266, %v2351
        %3295 = vst.msk [vmem:[%s622 + $0xe0] sm:$0xff] %vm3266, %v2356
        %3296 = vst.msk [vmem:[%s622 + $0xe8] sm:$0xff] %vm3266, %v2359
        %3297 = vst.msk [vmem:[%s622 + $0xf0] sm:$0xff] %vm3266, %v2364
        %3298 = vst.msk [vmem:[%s622 + $0xf8] sm:$0xff] %vm3266, %v2367
        %3299 = vst.msk [vmem:[%s622 + $0x100] sm:$0xff] %vm3266, %v2372
        %3300 = vst.msk [vmem:[%s622 + $0x108] sm:$0xff] %vm3266, %v2375
        %3301 = vst.msk [vmem:[%s622 + $0x110] sm:$0xff] %vm3266, %v2380
        %3302 = vst.msk [vmem:[%s622 + $0x118] sm:$0xff] %vm3266, %v2383
        %3303 = vst.msk [vmem:[%s622 + $0x120] sm:$0xff] %vm3266, %v2388
        %3304 = vst.msk [vmem:[%s622 + $0x128] sm:$0xff] %vm3266, %v2391
        %3305 = vst.msk [vmem:[%s622 + $0x130] sm:$0xff] %vm3266, %v2396
        %3306 = vst.msk [vmem:[%s622 + $0x138] sm:$0xff] %vm3266, %v2399
        %3307 = vst.msk [vmem:[%s622 + $0x140] sm:$0xff] %vm3266, %v2404
        %3308 = vst.msk [vmem:[%s622 + $0x148] sm:$0xff] %vm3266, %v2407
        %3309 = vst.msk [vmem:[%s622 + $0x150] sm:$0xff] %vm3266, %v2412
        %3310 = vst.msk [vmem:[%s622 + $0x158] sm:$0xff] %vm3266, %v2415
        %3311 = vst.msk [vmem:[%s622 + $0x160] sm:$0xff] %vm3266, %v2420
        %3312 = vst.msk [vmem:[%s622 + $0x168] sm:$0xff] %vm3266, %v2423
        %3313 = vst.msk [vmem:[%s622 + $0x170] sm:$0xff] %vm3266, %v2428
        %3314 = vst.msk [vmem:[%s622 + $0x178] sm:$0xff] %vm3266, %v2431
        %3315 = vst.msk [vmem:[%s622 + $0x180] sm:$0xff] %vm3266, %v2436
        %3316 = vst.msk [vmem:[%s622 + $0x188] sm:$0xff] %vm3266, %v2439
        %3317 = vst.msk [vmem:[%s622 + $0x190] sm:$0xff] %vm3266, %v2444
        %3318 = vst.msk [vmem:[%s622 + $0x198] sm:$0xff] %vm3266, %v2447
        %3319 = vst.msk [vmem:[%s622 + $0x1a0] sm:$0xff] %vm3266, %v2452
        %3320 = vst.msk [vmem:[%s622 + $0x1a8] sm:$0xff] %vm3266, %v2455
        %3321 = vst.msk [vmem:[%s622 + $0x1b0] sm:$0xff] %vm3266, %v2460
        %3322 = vst.msk [vmem:[%s622 + $0x1b8] sm:$0xff] %vm3266, %v2463
        %3323 = vst.msk [vmem:[%s622 + $0x1c0] sm:$0xff] %vm3266, %v2468
        %3324 = vst.msk [vmem:[%s622 + $0x1c8] sm:$0xff] %vm3266, %v2471
        %3325 = vst.msk [vmem:[%s622 + $0x1d0] sm:$0xff] %vm3266, %v2476
        %3326 = vst.msk [vmem:[%s622 + $0x1d8] sm:$0xff] %vm3266, %v2479
        %3327 = vst.msk [vmem:[%s622 + $0x1e0] sm:$0xff] %vm3266, %v2484
        %3328 = vst.msk [vmem:[%s622 + $0x1e8] sm:$0xff] %vm3266, %v2487
        %3329 = vst.msk [vmem:[%s622 + $0x1f0] sm:$0xff] %vm3266, %v2492
        %3330 = vst.msk [vmem:[%s622 + $0x1f8] sm:$0xff] %vm3266, %v2495
        %3331 = vst.msk [vmem:[%s622 + $0x200] sm:$0xff] %vm3266, %v2500
        %3332 = vst.msk [vmem:[%s622 + $0x208] sm:$0xff] %vm3266, %v2503
        %3333 = vst.msk [vmem:[%s622 + $0x210] sm:$0xff] %vm3266, %v2508
        %3334 = vst.msk [vmem:[%s622 + $0x218] sm:$0xff] %vm3266, %v2511
        %3335 = vst.msk [vmem:[%s622 + $0x220] sm:$0xff] %vm3266, %v2516
        %3336 = vst.msk [vmem:[%s622 + $0x228] sm:$0xff] %vm3266, %v2519
        %3337 = vst.msk [vmem:[%s622 + $0x230] sm:$0xff] %vm3266, %v2524
        %3338 = vst.msk [vmem:[%s622 + $0x238] sm:$0xff] %vm3266, %v2527
        %3339 = vst.msk [vmem:[%s622 + $0x240] sm:$0xff] %vm3266, %v2532
        %3340 = vst.msk [vmem:[%s622 + $0x248] sm:$0xff] %vm3266, %v2535
        %3341 = vst.msk [vmem:[%s622 + $0x250] sm:$0xff] %vm3266, %v2540
        %3342 = vst.msk [vmem:[%s622 + $0x258] sm:$0xff] %vm3266, %v2543
        %3343 = vst.msk [vmem:[%s622 + $0x260] sm:$0xff] %vm3266, %v2548
        %3344 = vst.msk [vmem:[%s622 + $0x268] sm:$0xff] %vm3266, %v2551
        %3345 = vst.msk [vmem:[%s622 + $0x270] sm:$0xff] %vm3266, %v2556
        %3346 = vst.msk [vmem:[%s622 + $0x278] sm:$0xff] %vm3266, %v2559
        %3347 = vst.msk [vmem:[%s622 + $0x280] sm:$0xff] %vm3266, %v2564
        %3348 = vst.msk [vmem:[%s622 + $0x288] sm:$0xff] %vm3266, %v2567
        %3349 = vst.msk [vmem:[%s622 + $0x290] sm:$0xff] %vm3266, %v2572
        %3350 = vst.msk [vmem:[%s622 + $0x298] sm:$0xff] %vm3266, %v2575
        %3351 = vst.msk [vmem:[%s622 + $0x2a0] sm:$0xff] %vm3266, %v2580
        %3352 = vst.msk [vmem:[%s622 + $0x2a8] sm:$0xff] %vm3266, %v2583
        %3353 = vst.msk [vmem:[%s622 + $0x2b0] sm:$0xff] %vm3266, %v2588
        %3354 = vst.msk [vmem:[%s622 + $0x2b8] sm:$0xff] %vm3266, %v2591
        %3355 = vst.msk [vmem:[%s622 + $0x2c0] sm:$0xff] %vm3266, %v2596
        %3356 = vst.msk [vmem:[%s622 + $0x2c8] sm:$0xff] %vm3266, %v2599
        %3357 = vst.msk [vmem:[%s622 + $0x2d0] sm:$0xff] %vm3266, %v2604
        %3358 = vst.msk [vmem:[%s622 + $0x2d8] sm:$0xff] %vm3266, %v2607
        %3359 = vst.msk [vmem:[%s622 + $0x2e0] sm:$0xff] %vm3266, %v2612
        %3360 = vst.msk [vmem:[%s622 + $0x2e8] sm:$0xff] %vm3266, %v2615
        %3361 = vst.msk [vmem:[%s622 + $0x2f0] sm:$0xff] %vm3266, %v2620
        %3362 = vst.msk [vmem:[%s622 + $0x2f8] sm:$0xff] %vm3266, %v2623
        %3363 = vst.msk [vmem:[%s622 + $0x300] sm:$0xff] %vm3266, %v2628
        %3364 = vst.msk [vmem:[%s622 + $0x308] sm:$0xff] %vm3266, %v2631
        %3365 = vst.msk [vmem:[%s622 + $0x310] sm:$0xff] %vm3266, %v2636
        %3366 = vst.msk [vmem:[%s622 + $0x318] sm:$0xff] %vm3266, %v2639
        %3367 = vst.msk [vmem:[%s622 + $0x320] sm:$0xff] %vm3266, %v2644
        %3368 = vst.msk [vmem:[%s622 + $0x328] sm:$0xff] %vm3266, %v2647
        %3369 = vst.msk [vmem:[%s622 + $0x330] sm:$0xff] %vm3266, %v2652
        %3370 = vst.msk [vmem:[%s622 + $0x338] sm:$0xff] %vm3266, %v2655
        %3371 = vst.msk [vmem:[%s622 + $0x340] sm:$0xff] %vm3266, %v2660
        %3372 = vst.msk [vmem:[%s622 + $0x348] sm:$0xff] %vm3266, %v2663
        %3373 = vst.msk [vmem:[%s622 + $0x350] sm:$0xff] %vm3266, %v2668
        %3374 = vst.msk [vmem:[%s622 + $0x358] sm:$0xff] %vm3266, %v2671
        %3375 = vst.msk [vmem:[%s622 + $0x360] sm:$0xff] %vm3266, %v2676
        %3376 = vst.msk [vmem:[%s622 + $0x368] sm:$0xff] %vm3266, %v2679
        %3377 = vst.msk [vmem:[%s622 + $0x370] sm:$0xff] %vm3266, %v2684
        %3378 = vst.msk [vmem:[%s622 + $0x378] sm:$0xff] %vm3266, %v2687
        %3379 = vst.msk [vmem:[%s622 + $0x380] sm:$0xff] %vm3266, %v2692
        %3380 = vst.msk [vmem:[%s622 + $0x388] sm:$0xff] %vm3266, %v2695
        %3381 = vst.msk [vmem:[%s622 + $0x390] sm:$0xff] %vm3266, %v2700
        %3382 = vst.msk [vmem:[%s622 + $0x398] sm:$0xff] %vm3266, %v2703
        %3383 = vst.msk [vmem:[%s622 + $0x3a0] sm:$0xff] %vm3266, %v2708
        %3384 = vst.msk [vmem:[%s622 + $0x3a8] sm:$0xff] %vm3266, %v2711
        %3385 = vst.msk [vmem:[%s622 + $0x3b0] sm:$0xff] %vm3266, %v2716
        %3386 = vst.msk [vmem:[%s622 + $0x3b8] sm:$0xff] %vm3266, %v2719
        %3387 = vst.msk [vmem:[%s622 + $0x3c0] sm:$0xff] %vm3266, %v2724
        %3388 = vst.msk [vmem:[%s622 + $0x3c8] sm:$0xff] %vm3266, %v2727
        %3389 = vst.msk [vmem:[%s622 + $0x3d0] sm:$0xff] %vm3266, %v2732
        %3390 = vst.msk [vmem:[%s622 + $0x3d8] sm:$0xff] %vm3266, %v2735
        %3391 = vst.msk [vmem:[%s622 + $0x3e0] sm:$0xff] %vm3266, %v2740
        %3392 = vst.msk [vmem:[%s622 + $0x3e8] sm:$0xff] %vm3266, %v2743
        %3393 = vst.msk [vmem:[%s622 + $0x3f0] sm:$0xff] %vm3266, %v2748
        %3394 = vst.msk [vmem:[%s622 + $0x3f8] sm:$0xff] %vm3266, %v2751
        %3395 = vst.msk [vmem:[%s622 + $0x400] sm:$0xff] %vm3266, %v2756
        %3396 = vst.msk [vmem:[%s622 + $0x408] sm:$0xff] %vm3266, %v2759
        %3397 = vst.msk [vmem:[%s622 + $0x410] sm:$0xff] %vm3266, %v2764
        %3398 = vst.msk [vmem:[%s622 + $0x418] sm:$0xff] %vm3266, %v2767
        %3399 = vst.msk [vmem:[%s622 + $0x420] sm:$0xff] %vm3266, %v2772
        %3400 = vst.msk [vmem:[%s622 + $0x428] sm:$0xff] %vm3266, %v2775
        %3401 = vst.msk [vmem:[%s622 + $0x430] sm:$0xff] %vm3266, %v2780
        %3402 = vst.msk [vmem:[%s622 + $0x438] sm:$0xff] %vm3266, %v2783
        %3403 = vst.msk [vmem:[%s622 + $0x440] sm:$0xff] %vm3266, %v2788
        %3404 = vst.msk [vmem:[%s622 + $0x448] sm:$0xff] %vm3266, %v2791
        %3405 = vst.msk [vmem:[%s622 + $0x450] sm:$0xff] %vm3266, %v2796
        %3406 = vst.msk [vmem:[%s622 + $0x458] sm:$0xff] %vm3266, %v2799
        %3407 = vst.msk [vmem:[%s622 + $0x460] sm:$0xff] %vm3266, %v2804
        %3408 = vst.msk [vmem:[%s622 + $0x468] sm:$0xff] %vm3266, %v2807
        %3409 = vst.msk [vmem:[%s622 + $0x470] sm:$0xff] %vm3266, %v2812
        %3410 = vst.msk [vmem:[%s622 + $0x478] sm:$0xff] %vm3266, %v2815
        %3411 = vst.msk [vmem:[%s622 + $0x480] sm:$0xff] %vm3266, %v2820
        %3412 = vst.msk [vmem:[%s622 + $0x488] sm:$0xff] %vm3266, %v2823
        %3413 = vst.msk [vmem:[%s622 + $0x490] sm:$0xff] %vm3266, %v2828
        %3414 = vst.msk [vmem:[%s622 + $0x498] sm:$0xff] %vm3266, %v2831
        %3415 = vst.msk [vmem:[%s622 + $0x4a0] sm:$0xff] %vm3266, %v2836
        %3416 = vst.msk [vmem:[%s622 + $0x4a8] sm:$0xff] %vm3266, %v2839
        %3417 = vst.msk [vmem:[%s622 + $0x4b0] sm:$0xff] %vm3266, %v2844
        %3418 = vst.msk [vmem:[%s622 + $0x4b8] sm:$0xff] %vm3266, %v2847
        %3419 = vst.msk [vmem:[%s622 + $0x4c0] sm:$0xff] %vm3266, %v2852
        %3420 = vst.msk [vmem:[%s622 + $0x4c8] sm:$0xff] %vm3266, %v2855
        %3421 = vst.msk [vmem:[%s622 + $0x4d0] sm:$0xff] %vm3266, %v2860
        %3422 = vst.msk [vmem:[%s622 + $0x4d8] sm:$0xff] %vm3266, %v2863
        %3423 = vst.msk [vmem:[%s622 + $0x4e0] sm:$0xff] %vm3266, %v2868
        %3424 = vst.msk [vmem:[%s622 + $0x4e8] sm:$0xff] %vm3266, %v2871
        %3425 = vst.msk [vmem:[%s622 + $0x4f0] sm:$0xff] %vm3266, %v2876
        %3426 = vst.msk [vmem:[%s622 + $0x4f8] sm:$0xff] %vm3266, %v2879
        %3427 = vst.msk [vmem:[%s622 + $0x500] sm:$0xff] %vm3266, %v2884
        %3428 = vst.msk [vmem:[%s622 + $0x508] sm:$0xff] %vm3266, %v2887
        %3429 = vst.msk [vmem:[%s622 + $0x510] sm:$0xff] %vm3266, %v2892
        %3430 = vst.msk [vmem:[%s622 + $0x518] sm:$0xff] %vm3266, %v2895
        %3431 = vst.msk [vmem:[%s622 + $0x520] sm:$0xff] %vm3266, %v2900
        %3432 = vst.msk [vmem:[%s622 + $0x528] sm:$0xff] %vm3266, %v2903
        %3433 = vst.msk [vmem:[%s622 + $0x530] sm:$0xff] %vm3266, %v2908
        %3434 = vst.msk [vmem:[%s622 + $0x538] sm:$0xff] %vm3266, %v2911
        %3435 = vst.msk [vmem:[%s622 + $0x540] sm:$0xff] %vm3266, %v2916
        %3436 = vst.msk [vmem:[%s622 + $0x548] sm:$0xff] %vm3266, %v2919
        %3437 = vst.msk [vmem:[%s622 + $0x550] sm:$0xff] %vm3266, %v2924
        %3438 = vst.msk [vmem:[%s622 + $0x558] sm:$0xff] %vm3266, %v2927
        %3439 = vst.msk [vmem:[%s622 + $0x560] sm:$0xff] %vm3266, %v2932
        %3440 = vst.msk [vmem:[%s622 + $0x568] sm:$0xff] %vm3266, %v2935
        %3441 = vst.msk [vmem:[%s622 + $0x570] sm:$0xff] %vm3266, %v2940
        %3442 = vst.msk [vmem:[%s622 + $0x578] sm:$0xff] %vm3266, %v2943
        %3443 = vst.msk [vmem:[%s622 + $0x580] sm:$0xff] %vm3266, %v2948
        %3444 = vst.msk [vmem:[%s622 + $0x588] sm:$0xff] %vm3266, %v2951
        %3445 = vst.msk [vmem:[%s622 + $0x590] sm:$0xff] %vm3266, %v2956
        %3446 = vst.msk [vmem:[%s622 + $0x598] sm:$0xff] %vm3266, %v2959
        %3447 = vst.msk [vmem:[%s622 + $0x5a0] sm:$0xff] %vm3266, %v2964
        %3448 = vst.msk [vmem:[%s622 + $0x5a8] sm:$0xff] %vm3266, %v2967
        %3449 = vst.msk [vmem:[%s622 + $0x5b0] sm:$0xff] %vm3266, %v2972
        %3450 = vst.msk [vmem:[%s622 + $0x5b8] sm:$0xff] %vm3266, %v2975
        %3451 = vst.msk [vmem:[%s622 + $0x5c0] sm:$0xff] %vm3266, %v2980
        %3452 = vst.msk [vmem:[%s622 + $0x5c8] sm:$0xff] %vm3266, %v2983
        %3453 = vst.msk [vmem:[%s622 + $0x5d0] sm:$0xff] %vm3266, %v2988
        %3454 = vst.msk [vmem:[%s622 + $0x5d8] sm:$0xff] %vm3266, %v2991
        %3455 = vst.msk [vmem:[%s622 + $0x5e0] sm:$0xff] %vm3266, %v2996
        %3456 = vst.msk [vmem:[%s622 + $0x5e8] sm:$0xff] %vm3266, %v2999
        %3457 = vst.msk [vmem:[%s622 + $0x5f0] sm:$0xff] %vm3266, %v3004
        %3458 = vst.msk [vmem:[%s622 + $0x5f8] sm:$0xff] %vm3266, %v3007
        %3459 = vst.msk [vmem:[%s622 + $0x600] sm:$0xff] %vm3266, %v3012
        %3460 = vst.msk [vmem:[%s622 + $0x608] sm:$0xff] %vm3266, %v3015
        %3461 = vst.msk [vmem:[%s622 + $0x610] sm:$0xff] %vm3266, %v3020
        %3462 = vst.msk [vmem:[%s622 + $0x618] sm:$0xff] %vm3266, %v3023
        %3463 = vst.msk [vmem:[%s622 + $0x620] sm:$0xff] %vm3266, %v3028
        %3464 = vst.msk [vmem:[%s622 + $0x628] sm:$0xff] %vm3266, %v3031
        %3465 = vst.msk [vmem:[%s622 + $0x630] sm:$0xff] %vm3266, %v3036
        %3466 = vst.msk [vmem:[%s622 + $0x638] sm:$0xff] %vm3266, %v3039
        %3467 = vst.msk [vmem:[%s622 + $0x640] sm:$0xff] %vm3266, %v3044
        %3468 = vst.msk [vmem:[%s622 + $0x648] sm:$0xff] %vm3266, %v3047
        %3469 = vst.msk [vmem:[%s622 + $0x650] sm:$0xff] %vm3266, %v3052
        %3470 = vst.msk [vmem:[%s622 + $0x658] sm:$0xff] %vm3266, %v3055
        %3471 = vst.msk [vmem:[%s622 + $0x660] sm:$0xff] %vm3266, %v3060
        %3472 = vst.msk [vmem:[%s622 + $0x668] sm:$0xff] %vm3266, %v3063
        %3473 = vst.msk [vmem:[%s622 + $0x670] sm:$0xff] %vm3266, %v3068
        %3474 = vst.msk [vmem:[%s622 + $0x678] sm:$0xff] %vm3266, %v3071
        %3475 = vst.msk [vmem:[%s622 + $0x680] sm:$0xff] %vm3266, %v3076
        %3476 = vst.msk [vmem:[%s622 + $0x688] sm:$0xff] %vm3266, %v3079
        %3477 = vst.msk [vmem:[%s622 + $0x690] sm:$0xff] %vm3266, %v3084
        %3478 = vst.msk [vmem:[%s622 + $0x698] sm:$0xff] %vm3266, %v3087
        %3479 = vst.msk [vmem:[%s622 + $0x6a0] sm:$0xff] %vm3266, %v3092
        %3480 = vst.msk [vmem:[%s622 + $0x6a8] sm:$0xff] %vm3266, %v3095
        %3481 = vst.msk [vmem:[%s622 + $0x6b0] sm:$0xff] %vm3266, %v3100
        %3482 = vst.msk [vmem:[%s622 + $0x6b8] sm:$0xff] %vm3266, %v3103
        %3483 = vst.msk [vmem:[%s622 + $0x6c0] sm:$0xff] %vm3266, %v3108
        %3484 = vst.msk [vmem:[%s622 + $0x6c8] sm:$0xff] %vm3266, %v3111
        %3485 = vst.msk [vmem:[%s622 + $0x6d0] sm:$0xff] %vm3266, %v3116
        %3486 = vst.msk [vmem:[%s622 + $0x6d8] sm:$0xff] %vm3266, %v3119
        %3487 = vst.msk [vmem:[%s622 + $0x6e0] sm:$0xff] %vm3266, %v3124
        %3488 = vst.msk [vmem:[%s622 + $0x6e8] sm:$0xff] %vm3266, %v3127
        %3489 = vst.msk [vmem:[%s622 + $0x6f0] sm:$0xff] %vm3266, %v3132
        %3490 = vst.msk [vmem:[%s622 + $0x6f8] sm:$0xff] %vm3266, %v3135
        %3491 = vst.msk [vmem:[%s622 + $0x700] sm:$0xff] %vm3266, %v3140
        %3492 = vst.msk [vmem:[%s622 + $0x708] sm:$0xff] %vm3266, %v3143
        %3493 = vst.msk [vmem:[%s622 + $0x710] sm:$0xff] %vm3266, %v3148
        %3494 = vst.msk [vmem:[%s622 + $0x718] sm:$0xff] %vm3266, %v3151
        %3495 = vst.msk [vmem:[%s622 + $0x720] sm:$0xff] %vm3266, %v3156
        %3496 = vst.msk [vmem:[%s622 + $0x728] sm:$0xff] %vm3266, %v3159
        %3497 = vst.msk [vmem:[%s622 + $0x730] sm:$0xff] %vm3266, %v3164
        %3498 = vst.msk [vmem:[%s622 + $0x738] sm:$0xff] %vm3266, %v3167
        %3499 = vst.msk [vmem:[%s622 + $0x740] sm:$0xff] %vm3266, %v3172
        %3500 = vst.msk [vmem:[%s622 + $0x748] sm:$0xff] %vm3266, %v3175
        %3501 = vst.msk [vmem:[%s622 + $0x750] sm:$0xff] %vm3266, %v3180
        %3502 = vst.msk [vmem:[%s622 + $0x758] sm:$0xff] %vm3266, %v3183
        %3503 = vst.msk [vmem:[%s622 + $0x760] sm:$0xff] %vm3266, %v3188
        %3504 = vst.msk [vmem:[%s622 + $0x768] sm:$0xff] %vm3266, %v3191
        %3505 = vst.msk [vmem:[%s622 + $0x770] sm:$0xff] %vm3266, %v3196
        %3506 = vst.msk [vmem:[%s622 + $0x778] sm:$0xff] %vm3266, %v3199
        %3507 = vst.msk [vmem:[%s622 + $0x780] sm:$0xff] %vm3266, %v3204
        %3508 = vst.msk [vmem:[%s622 + $0x788] sm:$0xff] %vm3266, %v3207
        %3509 = vst.msk [vmem:[%s622 + $0x790] sm:$0xff] %vm3266, %v3212
        %3510 = vst.msk [vmem:[%s622 + $0x798] sm:$0xff] %vm3266, %v3215
        %3511 = vst.msk [vmem:[%s622 + $0x7a0] sm:$0xff] %vm3266, %v3220
        %3512 = vst.msk [vmem:[%s622 + $0x7a8] sm:$0xff] %vm3266, %v3223
        %3513 = vst.msk [vmem:[%s622 + $0x7b0] sm:$0xff] %vm3266, %v3228
        %3514 = vst.msk [vmem:[%s622 + $0x7b8] sm:$0xff] %vm3266, %v3231
        %3515 = vst.msk [vmem:[%s622 + $0x7c0] sm:$0xff] %vm3266, %v3236
        %3516 = vst.msk [vmem:[%s622 + $0x7c8] sm:$0xff] %vm3266, %v3239
        %3517 = vst.msk [vmem:[%s622 + $0x7d0] sm:$0xff] %vm3266, %v3244
        %3518 = vst.msk [vmem:[%s622 + $0x7d8] sm:$0xff] %vm3266, %v3247
        %3519 = vst.msk [vmem:[%s622 + $0x7e0] sm:$0xff] %vm3266, %v3252
        %3520 = vst.msk [vmem:[%s622 + $0x7e8] sm:$0xff] %vm3266, %v3255
        %3521 = vst.msk [vmem:[%s622 + $0x7f0] sm:$0xff] %vm3266, %v3260
        %3522 = vst.msk [vmem:[%s622 + $0x7f8] sm:$0xff] %vm3266, %v3263
        %v3523 = vpack.c.bf16 %v2247, %v2244
        %v3524 = vpack.c.bf16 %v2255, %v2252
        %v3525 = vpack.c.bf16 %v2263, %v2260
        %v3526 = vpack.c.bf16 %v2271, %v2268
        %v3527 = vpack.c.bf16 %v2279, %v2276
        %v3528 = vpack.c.bf16 %v2287, %v2284
        %v3529 = vpack.c.bf16 %v2295, %v2292
        %v3530 = vpack.c.bf16 %v2303, %v2300
        %v3531 = vpack.c.bf16 %v2311, %v2308
        %v3532 = vpack.c.bf16 %v2319, %v2316
        %v3533 = vpack.c.bf16 %v2327, %v2324
        %v3534 = vpack.c.bf16 %v2335, %v2332
        %v3535 = vpack.c.bf16 %v2343, %v2340
        %v3536 = vpack.c.bf16 %v2351, %v2348
        %v3537 = vpack.c.bf16 %v2359, %v2356
        %v3538 = vpack.c.bf16 %v2367, %v2364
        %v3539 = vpack.c.bf16 %v2375, %v2372
        %v3540 = vpack.c.bf16 %v2383, %v2380
        %v3541 = vpack.c.bf16 %v2391, %v2388
        %v3542 = vpack.c.bf16 %v2399, %v2396
        %v3543 = vpack.c.bf16 %v2407, %v2404
        %v3544 = vpack.c.bf16 %v2415, %v2412
        %v3545 = vpack.c.bf16 %v2423, %v2420
        %v3546 = vpack.c.bf16 %v2431, %v2428
        %v3547 = vpack.c.bf16 %v2439, %v2436
        %v3548 = vpack.c.bf16 %v2447, %v2444
        %v3549 = vpack.c.bf16 %v2455, %v2452
        %v3550 = vpack.c.bf16 %v2463, %v2460
        %v3551 = vpack.c.bf16 %v2471, %v2468
        %v3552 = vpack.c.bf16 %v2479, %v2476
        %v3553 = vpack.c.bf16 %v2487, %v2484
        %v3554 = vpack.c.bf16 %v2495, %v2492
        %v3555 = vpack.c.bf16 %v2503, %v2500
        %v3556 = vpack.c.bf16 %v2511, %v2508
        %v3557 = vpack.c.bf16 %v2519, %v2516
        %v3558 = vpack.c.bf16 %v2527, %v2524
        %v3559 = vpack.c.bf16 %v2535, %v2532
        %v3560 = vpack.c.bf16 %v2543, %v2540
        %v3561 = vpack.c.bf16 %v2551, %v2548
        %v3562 = vpack.c.bf16 %v2559, %v2556
        %v3563 = vpack.c.bf16 %v2567, %v2564
        %v3564 = vpack.c.bf16 %v2575, %v2572
        %v3565 = vpack.c.bf16 %v2583, %v2580
        %v3566 = vpack.c.bf16 %v2591, %v2588
        %v3567 = vpack.c.bf16 %v2599, %v2596
        %v3568 = vpack.c.bf16 %v2607, %v2604
        %v3569 = vpack.c.bf16 %v2615, %v2612
        %v3570 = vpack.c.bf16 %v2623, %v2620
        %v3571 = vpack.c.bf16 %v2631, %v2628
        %v3572 = vpack.c.bf16 %v2639, %v2636
        %v3573 = vpack.c.bf16 %v2647, %v2644
        %v3574 = vpack.c.bf16 %v2655, %v2652
        %v3575 = vpack.c.bf16 %v2663, %v2660
        %v3576 = vpack.c.bf16 %v2671, %v2668
        %v3577 = vpack.c.bf16 %v2679, %v2676
        %v3578 = vpack.c.bf16 %v2687, %v2684
        %v3579 = vpack.c.bf16 %v2695, %v2692
        %v3580 = vpack.c.bf16 %v2703, %v2700
        %v3581 = vpack.c.bf16 %v2711, %v2708
        %v3582 = vpack.c.bf16 %v2719, %v2716
        %v3583 = vpack.c.bf16 %v2727, %v2724
        %v3584 = vpack.c.bf16 %v2735, %v2732
        %v3585 = vpack.c.bf16 %v2743, %v2740
        %v3586 = vpack.c.bf16 %v2751, %v2748
        %v3587 = vpack.c.bf16 %v2759, %v2756
        %v3588 = vpack.c.bf16 %v2767, %v2764
        %v3589 = vpack.c.bf16 %v2775, %v2772
        %v3590 = vpack.c.bf16 %v2783, %v2780
        %v3591 = vpack.c.bf16 %v2791, %v2788
        %v3592 = vpack.c.bf16 %v2799, %v2796
        %v3593 = vpack.c.bf16 %v2807, %v2804
        %v3594 = vpack.c.bf16 %v2815, %v2812
        %v3595 = vpack.c.bf16 %v2823, %v2820
        %v3596 = vpack.c.bf16 %v2831, %v2828
        %v3597 = vpack.c.bf16 %v2839, %v2836
        %v3598 = vpack.c.bf16 %v2847, %v2844
        %v3599 = vpack.c.bf16 %v2855, %v2852
        %v3600 = vpack.c.bf16 %v2863, %v2860
        %v3601 = vpack.c.bf16 %v2871, %v2868
        %v3602 = vpack.c.bf16 %v2879, %v2876
        %v3603 = vpack.c.bf16 %v2887, %v2884
        %v3604 = vpack.c.bf16 %v2895, %v2892
        %v3605 = vpack.c.bf16 %v2903, %v2900
        %v3606 = vpack.c.bf16 %v2911, %v2908
        %v3607 = vpack.c.bf16 %v2919, %v2916
        %v3608 = vpack.c.bf16 %v2927, %v2924
        %v3609 = vpack.c.bf16 %v2935, %v2932
        %v3610 = vpack.c.bf16 %v2943, %v2940
        %v3611 = vpack.c.bf16 %v2951, %v2948
        %v3612 = vpack.c.bf16 %v2959, %v2956
        %v3613 = vpack.c.bf16 %v2967, %v2964
        %v3614 = vpack.c.bf16 %v2975, %v2972
        %v3615 = vpack.c.bf16 %v2983, %v2980
        %v3616 = vpack.c.bf16 %v2991, %v2988
        %v3617 = vpack.c.bf16 %v2999, %v2996
        %v3618 = vpack.c.bf16 %v3007, %v3004
        %v3619 = vpack.c.bf16 %v3015, %v3012
        %v3620 = vpack.c.bf16 %v3023, %v3020
        %v3621 = vpack.c.bf16 %v3031, %v3028
        %v3622 = vpack.c.bf16 %v3039, %v3036
        %v3623 = vpack.c.bf16 %v3047, %v3044
        %v3624 = vpack.c.bf16 %v3055, %v3052
        %v3625 = vpack.c.bf16 %v3063, %v3060
        %v3626 = vpack.c.bf16 %v3071, %v3068
        %v3627 = vpack.c.bf16 %v3079, %v3076
        %v3628 = vpack.c.bf16 %v3087, %v3084
        %v3629 = vpack.c.bf16 %v3095, %v3092
        %v3630 = vpack.c.bf16 %v3103, %v3100
        %v3631 = vpack.c.bf16 %v3111, %v3108
        %v3632 = vpack.c.bf16 %v3119, %v3116
        %v3633 = vpack.c.bf16 %v3127, %v3124
        %v3634 = vpack.c.bf16 %v3135, %v3132
        %v3635 = vpack.c.bf16 %v3143, %v3140
        %v3636 = vpack.c.bf16 %v3151, %v3148
        %v3637 = vpack.c.bf16 %v3159, %v3156
        %v3638 = vpack.c.bf16 %v3167, %v3164
        %v3639 = vpack.c.bf16 %v3175, %v3172
        %v3640 = vpack.c.bf16 %v3183, %v3180
        %v3641 = vpack.c.bf16 %v3191, %v3188
        %v3642 = vpack.c.bf16 %v3199, %v3196
        %v3643 = vpack.c.bf16 %v3207, %v3204
        %v3644 = vpack.c.bf16 %v3215, %v3212
        %v3645 = vpack.c.bf16 %v3223, %v3220
        %v3646 = vpack.c.bf16 %v3231, %v3228
        %v3647 = vpack.c.bf16 %v3239, %v3236
        %v3648 = vpack.c.bf16 %v3247, %v3244
        %v3649 = vpack.c.bf16 %v3255, %v3252
        %v3650 = vpack.c.bf16 %v3263, %v3260
        %3683 = vrot.lane.b32.xlu0 %v3555, 16
        %v3684 = vpop.permute.xlu0 %3683
        %3685 = vrot.lane.b32.xlu0 %v3556, 16
        %v3686 = vpop.permute.xlu0 %3685
        %3687 = vrot.lane.b32.xlu0 %v3557, 16
        %v3688 = vpop.permute.xlu0 %3687
        %3689 = vrot.lane.b32.xlu0 %v3558, 16
        %v3690 = vpop.permute.xlu0 %3689
        %3691 = vrot.lane.b32.xlu0 %v3559, 16
        %v3692 = vpop.permute.xlu0 %3691
        %3693 = vrot.lane.b32.xlu0 %v3560, 16
        %v3694 = vpop.permute.xlu0 %3693
        %3695 = vrot.lane.b32.xlu0 %v3561, 16
        %v3696 = vpop.permute.xlu0 %3695
        %3697 = vrot.lane.b32.xlu0 %v3562, 16
        %v3698 = vpop.permute.xlu0 %3697
        %3699 = vrot.lane.b32.xlu0 %v3563, 16
        %v3700 = vpop.permute.xlu0 %3699
        %3701 = vrot.lane.b32.xlu0 %v3564, 16
        %v3702 = vpop.permute.xlu0 %3701
        %3703 = vrot.lane.b32.xlu0 %v3565, 16
        %v3704 = vpop.permute.xlu0 %3703
        %3705 = vrot.lane.b32.xlu0 %v3566, 16
        %v3706 = vpop.permute.xlu0 %3705
        %3707 = vrot.lane.b32.xlu0 %v3567, 16
        %v3708 = vpop.permute.xlu0 %3707
        %3709 = vrot.lane.b32.xlu0 %v3568, 16
        %v3710 = vpop.permute.xlu0 %3709
        %3711 = vrot.lane.b32.xlu0 %v3569, 16
        %v3712 = vpop.permute.xlu0 %3711
        %3713 = vrot.lane.b32.xlu0 %v3570, 16
        %v3714 = vpop.permute.xlu0 %3713
        %3715 = vrot.lane.b32.xlu0 %v3571, 16
        %v3716 = vpop.permute.xlu0 %3715
        %3717 = vrot.lane.b32.xlu0 %v3572, 16
        %v3718 = vpop.permute.xlu0 %3717
        %3719 = vrot.lane.b32.xlu0 %v3573, 16
        %v3720 = vpop.permute.xlu0 %3719
        %3721 = vrot.lane.b32.xlu0 %v3574, 16
        %v3722 = vpop.permute.xlu0 %3721
        %3723 = vrot.lane.b32.xlu0 %v3575, 16
        %v3724 = vpop.permute.xlu0 %3723
        %3725 = vrot.lane.b32.xlu0 %v3576, 16
        %v3726 = vpop.permute.xlu0 %3725
        %3727 = vrot.lane.b32.xlu0 %v3577, 16
        %v3728 = vpop.permute.xlu0 %3727
        %3729 = vrot.lane.b32.xlu0 %v3578, 16
        %v3730 = vpop.permute.xlu0 %3729
        %3731 = vrot.lane.b32.xlu0 %v3579, 16
        %v3732 = vpop.permute.xlu0 %3731
        %3733 = vrot.lane.b32.xlu0 %v3580, 16
        %v3734 = vpop.permute.xlu0 %3733
        %3735 = vrot.lane.b32.xlu0 %v3581, 16
        %v3736 = vpop.permute.xlu0 %3735
        %3737 = vrot.lane.b32.xlu0 %v3582, 16
        %v3738 = vpop.permute.xlu0 %3737
        %3739 = vrot.lane.b32.xlu0 %v3583, 16
        %v3740 = vpop.permute.xlu0 %3739
        %3741 = vrot.lane.b32.xlu0 %v3584, 16
        %v3742 = vpop.permute.xlu0 %3741
        %3743 = vrot.lane.b32.xlu0 %v3585, 16
        %v3744 = vpop.permute.xlu0 %3743
        %3745 = vrot.lane.b32.xlu0 %v3586, 16
        %v3746 = vpop.permute.xlu0 %3745
        %3779 = vrot.lane.b32.xlu0 %v3587, 32
        %v3780 = vpop.permute.xlu0 %3779
        %3781 = vrot.lane.b32.xlu0 %v3588, 32
        %v3782 = vpop.permute.xlu0 %3781
        %3783 = vrot.lane.b32.xlu0 %v3589, 32
        %v3784 = vpop.permute.xlu0 %3783
        %3785 = vrot.lane.b32.xlu0 %v3590, 32
        %v3786 = vpop.permute.xlu0 %3785
        %3787 = vrot.lane.b32.xlu0 %v3591, 32
        %v3788 = vpop.permute.xlu0 %3787
        %3789 = vrot.lane.b32.xlu0 %v3592, 32
        %v3790 = vpop.permute.xlu0 %3789
        %3791 = vrot.lane.b32.xlu0 %v3593, 32
        %v3792 = vpop.permute.xlu0 %3791
        %3793 = vrot.lane.b32.xlu0 %v3594, 32
        %v3794 = vpop.permute.xlu0 %3793
        %3795 = vrot.lane.b32.xlu0 %v3595, 32
        %v3796 = vpop.permute.xlu0 %3795
        %3797 = vrot.lane.b32.xlu0 %v3596, 32
        %v3798 = vpop.permute.xlu0 %3797
        %3799 = vrot.lane.b32.xlu0 %v3597, 32
        %v3800 = vpop.permute.xlu0 %3799
        %3801 = vrot.lane.b32.xlu0 %v3598, 32
        %v3802 = vpop.permute.xlu0 %3801
        %3803 = vrot.lane.b32.xlu0 %v3599, 32
        %v3804 = vpop.permute.xlu0 %3803
        %3805 = vrot.lane.b32.xlu0 %v3600, 32
        %v3806 = vpop.permute.xlu0 %3805
        %3807 = vrot.lane.b32.xlu0 %v3601, 32
        %v3808 = vpop.permute.xlu0 %3807
        %3809 = vrot.lane.b32.xlu0 %v3602, 32
        %v3810 = vpop.permute.xlu0 %3809
        %3811 = vrot.lane.b32.xlu0 %v3603, 32
        %v3812 = vpop.permute.xlu0 %3811
        %3813 = vrot.lane.b32.xlu0 %v3604, 32
        %v3814 = vpop.permute.xlu0 %3813
        %3815 = vrot.lane.b32.xlu0 %v3605, 32
        %v3816 = vpop.permute.xlu0 %3815
        %3817 = vrot.lane.b32.xlu0 %v3606, 32
        %v3818 = vpop.permute.xlu0 %3817
        %3819 = vrot.lane.b32.xlu0 %v3607, 32
        %v3820 = vpop.permute.xlu0 %3819
        %3821 = vrot.lane.b32.xlu0 %v3608, 32
        %v3822 = vpop.permute.xlu0 %3821
        %3823 = vrot.lane.b32.xlu0 %v3609, 32
        %v3824 = vpop.permute.xlu0 %3823
        %3825 = vrot.lane.b32.xlu0 %v3610, 32
        %v3826 = vpop.permute.xlu0 %3825
        %3827 = vrot.lane.b32.xlu0 %v3611, 32
        %v3828 = vpop.permute.xlu0 %3827
        %3829 = vrot.lane.b32.xlu0 %v3612, 32
        %v3830 = vpop.permute.xlu0 %3829
        %3831 = vrot.lane.b32.xlu0 %v3613, 32
        %v3832 = vpop.permute.xlu0 %3831
        %3833 = vrot.lane.b32.xlu0 %v3614, 32
        %v3834 = vpop.permute.xlu0 %3833
        %3835 = vrot.lane.b32.xlu0 %v3615, 32
        %v3836 = vpop.permute.xlu0 %3835
        %3837 = vrot.lane.b32.xlu0 %v3616, 32
        %v3838 = vpop.permute.xlu0 %3837
        %3839 = vrot.lane.b32.xlu0 %v3617, 32
        %v3840 = vpop.permute.xlu0 %3839
        %3841 = vrot.lane.b32.xlu0 %v3618, 32
        %v3842 = vpop.permute.xlu0 %3841
        %3875 = vrot.lane.b32.xlu0 %v3619, 48
        %v3876 = vpop.permute.xlu0 %3875
        %3877 = vrot.lane.b32.xlu0 %v3620, 48
        %v3878 = vpop.permute.xlu0 %3877
        %3879 = vrot.lane.b32.xlu0 %v3621, 48
        %v3880 = vpop.permute.xlu0 %3879
        %3881 = vrot.lane.b32.xlu0 %v3622, 48
        %v3882 = vpop.permute.xlu0 %3881
        %3883 = vrot.lane.b32.xlu0 %v3623, 48
        %v3884 = vpop.permute.xlu0 %3883
        %3885 = vrot.lane.b32.xlu0 %v3624, 48
        %v3886 = vpop.permute.xlu0 %3885
        %3887 = vrot.lane.b32.xlu0 %v3625, 48
        %v3888 = vpop.permute.xlu0 %3887
        %3889 = vrot.lane.b32.xlu0 %v3626, 48
        %v3890 = vpop.permute.xlu0 %3889
        %3891 = vrot.lane.b32.xlu0 %v3627, 48
        %v3892 = vpop.permute.xlu0 %3891
        %3893 = vrot.lane.b32.xlu0 %v3628, 48
        %v3894 = vpop.permute.xlu0 %3893
        %3895 = vrot.lane.b32.xlu0 %v3629, 48
        %v3896 = vpop.permute.xlu0 %3895
        %3897 = vrot.lane.b32.xlu0 %v3630, 48
        %v3898 = vpop.permute.xlu0 %3897
        %3899 = vrot.lane.b32.xlu0 %v3631, 48
        %v3900 = vpop.permute.xlu0 %3899
        %3901 = vrot.lane.b32.xlu0 %v3632, 48
        %v3902 = vpop.permute.xlu0 %3901
        %3903 = vrot.lane.b32.xlu0 %v3633, 48
        %v3904 = vpop.permute.xlu0 %3903
        %3905 = vrot.lane.b32.xlu0 %v3634, 48
        %v3906 = vpop.permute.xlu0 %3905
        %3907 = vrot.lane.b32.xlu0 %v3635, 48
        %v3908 = vpop.permute.xlu0 %3907
        %3909 = vrot.lane.b32.xlu0 %v3636, 48
        %v3910 = vpop.permute.xlu0 %3909
        %3911 = vrot.lane.b32.xlu0 %v3637, 48
        %v3912 = vpop.permute.xlu0 %3911
        %3913 = vrot.lane.b32.xlu0 %v3638, 48
        %v3914 = vpop.permute.xlu0 %3913
        %3915 = vrot.lane.b32.xlu0 %v3639, 48
        %v3916 = vpop.permute.xlu0 %3915
        %3917 = vrot.lane.b32.xlu0 %v3640, 48
        %v3918 = vpop.permute.xlu0 %3917
        %3919 = vrot.lane.b32.xlu0 %v3641, 48
        %v3920 = vpop.permute.xlu0 %3919
        %3921 = vrot.lane.b32.xlu0 %v3642, 48
        %v3922 = vpop.permute.xlu0 %3921
        %3923 = vrot.lane.b32.xlu0 %v3643, 48
        %v3924 = vpop.permute.xlu0 %3923
        %3925 = vrot.lane.b32.xlu0 %v3644, 48
        %v3926 = vpop.permute.xlu0 %3925
        %3927 = vrot.lane.b32.xlu0 %v3645, 48
        %v3928 = vpop.permute.xlu0 %3927
        %3929 = vrot.lane.b32.xlu0 %v3646, 48
        %v3930 = vpop.permute.xlu0 %3929
        %3931 = vrot.lane.b32.xlu0 %v3647, 48
        %v3932 = vpop.permute.xlu0 %3931
        %3933 = vrot.lane.b32.xlu0 %v3648, 48
        %v3934 = vpop.permute.xlu0 %3933
        %3935 = vrot.lane.b32.xlu0 %v3649, 48
        %v3936 = vpop.permute.xlu0 %3935
        %3937 = vrot.lane.b32.xlu0 %v3650, 48
        %v3938 = vpop.permute.xlu0 %3937
        %v3941 = vsel %vm3266, %v3523, %v3684
        %v3944 = vsel %vm3266, %v3524, %v3686
        %v3947 = vsel %vm3266, %v3525, %v3688
        %v3950 = vsel %vm3266, %v3526, %v3690
        %v3953 = vsel %vm3266, %v3527, %v3692
        %v3956 = vsel %vm3266, %v3528, %v3694
        %v3959 = vsel %vm3266, %v3529, %v3696
        %v3962 = vsel %vm3266, %v3530, %v3698
        %v3965 = vsel %vm3266, %v3531, %v3700
        %v3968 = vsel %vm3266, %v3532, %v3702
        %v3971 = vsel %vm3266, %v3533, %v3704
        %v3974 = vsel %vm3266, %v3534, %v3706
        %v3977 = vsel %vm3266, %v3535, %v3708
        %v3980 = vsel %vm3266, %v3536, %v3710
        %v3983 = vsel %vm3266, %v3537, %v3712
        %v3986 = vsel %vm3266, %v3538, %v3714
        %v3989 = vsel %vm3266, %v3539, %v3716
        %v3992 = vsel %vm3266, %v3540, %v3718
        %v3995 = vsel %vm3266, %v3541, %v3720
        %v3998 = vsel %vm3266, %v3542, %v3722
        %v4001 = vsel %vm3266, %v3543, %v3724
        %v4004 = vsel %vm3266, %v3544, %v3726
        %v4007 = vsel %vm3266, %v3545, %v3728
        %v4010 = vsel %vm3266, %v3546, %v3730
        %v4013 = vsel %vm3266, %v3547, %v3732
        %v4016 = vsel %vm3266, %v3548, %v3734
        %v4019 = vsel %vm3266, %v3549, %v3736
        %v4022 = vsel %vm3266, %v3550, %v3738
        %v4025 = vsel %vm3266, %v3551, %v3740
        %v4028 = vsel %vm3266, %v3552, %v3742
        %v4031 = vsel %vm3266, %v3553, %v3744
        %v4034 = vsel %vm3266, %v3554, %v3746
        %vm4035 = vcmask 261120
        %v4037 = vsel %vm4035, %v3941, %v3780
        %v4039 = vsel %vm4035, %v3944, %v3782
        %v4041 = vsel %vm4035, %v3947, %v3784
        %v4043 = vsel %vm4035, %v3950, %v3786
        %v4045 = vsel %vm4035, %v3953, %v3788
        %v4047 = vsel %vm4035, %v3956, %v3790
        %v4049 = vsel %vm4035, %v3959, %v3792
        %v4051 = vsel %vm4035, %v3962, %v3794
        %v4053 = vsel %vm4035, %v3965, %v3796
        %v4055 = vsel %vm4035, %v3968, %v3798
        %v4057 = vsel %vm4035, %v3971, %v3800
        %v4059 = vsel %vm4035, %v3974, %v3802
        %v4061 = vsel %vm4035, %v3977, %v3804
        %v4063 = vsel %vm4035, %v3980, %v3806
        %v4065 = vsel %vm4035, %v3983, %v3808
        %v4067 = vsel %vm4035, %v3986, %v3810
        %v4069 = vsel %vm4035, %v3989, %v3812
        %v4071 = vsel %vm4035, %v3992, %v3814
        %v4073 = vsel %vm4035, %v3995, %v3816
        %v4075 = vsel %vm4035, %v3998, %v3818
        %v4077 = vsel %vm4035, %v4001, %v3820
        %v4079 = vsel %vm4035, %v4004, %v3822
        %v4081 = vsel %vm4035, %v4007, %v3824
        %v4083 = vsel %vm4035, %v4010, %v3826
        %v4085 = vsel %vm4035, %v4013, %v3828
        %v4087 = vsel %vm4035, %v4016, %v3830
        %v4089 = vsel %vm4035, %v4019, %v3832
        %v4091 = vsel %vm4035, %v4022, %v3834
        %v4093 = vsel %vm4035, %v4025, %v3836
        %v4095 = vsel %vm4035, %v4028, %v3838
        %v4097 = vsel %vm4035, %v4031, %v3840
        %v4099 = vsel %vm4035, %v4034, %v3842
        %vm4100 = vcmask 392192
        %v4102 = vsel %vm4100, %v4037, %v3876
        %v4104 = vsel %vm4100, %v4039, %v3878
        %v4106 = vsel %vm4100, %v4041, %v3880
        %v4108 = vsel %vm4100, %v4043, %v3882
        %v4110 = vsel %vm4100, %v4045, %v3884
        %v4112 = vsel %vm4100, %v4047, %v3886
        %v4114 = vsel %vm4100, %v4049, %v3888
        %v4116 = vsel %vm4100, %v4051, %v3890
        %v4118 = vsel %vm4100, %v4053, %v3892
        %v4120 = vsel %vm4100, %v4055, %v3894
        %v4122 = vsel %vm4100, %v4057, %v3896
        %v4124 = vsel %vm4100, %v4059, %v3898
        %v4126 = vsel %vm4100, %v4061, %v3900
        %v4128 = vsel %vm4100, %v4063, %v3902
        %v4130 = vsel %vm4100, %v4065, %v3904
        %v4132 = vsel %vm4100, %v4067, %v3906
        %v4134 = vsel %vm4100, %v4069, %v3908
        %v4136 = vsel %vm4100, %v4071, %v3910
        %v4138 = vsel %vm4100, %v4073, %v3912
        %v4140 = vsel %vm4100, %v4075, %v3914
        %v4142 = vsel %vm4100, %v4077, %v3916
        %v4144 = vsel %vm4100, %v4079, %v3918
        %v4146 = vsel %vm4100, %v4081, %v3920
        %v4148 = vsel %vm4100, %v4083, %v3922
        %v4150 = vsel %vm4100, %v4085, %v3924
        %v4152 = vsel %vm4100, %v4087, %v3926
        %v4154 = vsel %vm4100, %v4089, %v3928
        %v4156 = vsel %vm4100, %v4091, %v3930
        %v4158 = vsel %vm4100, %v4093, %v3932
        %v4160 = vsel %vm4100, %v4095, %v3934
        %v4162 = vsel %vm4100, %v4097, %v3936
        %v4164 = vsel %vm4100, %v4099, %v3938
        %v4165 = vld [vmem:[%s5] sm:$0xf]
        %v4166 = vld [vmem:[%s5 + $0x4] sm:$0xf]
        %v4167 = vld [vmem:[%s5 + $0x8] sm:$0xf]
        %v4168 = vld [vmem:[%s5 + $0xc] sm:$0xf]
        %v4169 = vld [vmem:[%s5 + $0x10] sm:$0xf]
        %v4170 = vld [vmem:[%s5 + $0x14] sm:$0xf]
        %v4171 = vld [vmem:[%s5 + $0x18] sm:$0xf]
        %v4172 = vld [vmem:[%s5 + $0x1c] sm:$0xf]
        %v4173 = vld [vmem:[%s6] sm:$0x1]
        %v4175 = vlaneseq
        %v4176 = vshrl.u32 %v4175, 7
        %v4177 = vsub.s32 0, %v4176
        %v4178 = vrot.slane %v4173, %v4177
        %v4188 = vunpack.c.l.b16 %v4165
        %v4189 = vunpack.c.l.b16 %v4166
        %v4190 = vunpack.c.l.b16 %v4167
        %v4191 = vunpack.c.l.b16 %v4168
        %v4192 = vunpack.c.l.b16 %v4169
        %v4193 = vunpack.c.l.b16 %v4170
        %v4194 = vunpack.c.l.b16 %v4171
        %v4195 = vunpack.c.l.b16 %v4172
        %v4196 = vpack.c.b16 %v4189, %v4188
        %v4197 = vpack.c.b16 %v4191, %v4190
        %v4198 = vpack.c.b16 %v4193, %v4192
        %v4199 = vpack.c.b16 %v4195, %v4194
        %vm4204 = vcmask 523264
        %v4205 = vsel %vm4204, %v4102, 0
        %v4207 = vsel %vm4204, %v4104, 0
        %v4209 = vsel %vm4204, %v4106, 0
        %v4211 = vsel %vm4204, %v4108, 0
        %v4213 = vsel %vm4204, %v4110, 0
        %v4215 = vsel %vm4204, %v4112, 0
        %v4217 = vsel %vm4204, %v4114, 0
        %v4219 = vsel %vm4204, %v4116, 0
        %v4221 = vsel %vm4204, %v4118, 0
        %v4223 = vsel %vm4204, %v4120, 0
        %v4225 = vsel %vm4204, %v4122, 0
        %v4227 = vsel %vm4204, %v4124, 0
        %v4229 = vsel %vm4204, %v4126, 0
        %v4231 = vsel %vm4204, %v4128, 0
        %v4233 = vsel %vm4204, %v4130, 0
        %v4235 = vsel %vm4204, %v4132, 0
        %v4237 = vsel %vm4204, %v4134, 0
        %v4239 = vsel %vm4204, %v4136, 0
        %v4241 = vsel %vm4204, %v4138, 0
        %v4243 = vsel %vm4204, %v4140, 0
        %v4245 = vsel %vm4204, %v4142, 0
        %v4247 = vsel %vm4204, %v4144, 0
        %v4249 = vsel %vm4204, %v4146, 0
        %v4251 = vsel %vm4204, %v4148, 0
        %v4253 = vsel %vm4204, %v4150, 0
        %v4255 = vsel %vm4204, %v4152, 0
        %v4257 = vsel %vm4204, %v4154, 0
        %v4259 = vsel %vm4204, %v4156, 0
        %v4261 = vsel %vm4204, %v4158, 0
        %v4263 = vsel %vm4204, %v4160, 0
        %v4265 = vsel %vm4204, %v4162, 0
        %v4267 = vsel %vm4204, %v4164, 0
        %4269 = vmatprep.subr.bf16.mxu0 0
        %4270 = vmatpush1.bf16.msra.mxu0 0
        %4271 = vmatprep.subr.bf16.mxu0 0
        %4272 = vmatpush1.bf16.msra.mxu0 0
        %4273 = vmatprep.subr.bf16.mxu0 0
        %4274 = vmatpush1.bf16.msra.mxu0 0
        %4275 = vmatprep.subr.bf16.mxu0 0
        %4276 = vmatpush1.bf16.msra.mxu0 0
        %4277 = vmatprep.subr.bf16.mxu0 0
        %4278 = vmatpush1.bf16.msra.mxu0 %v4199
        %4279 = vmatprep.subr.bf16.mxu0 0
        %4280 = vmatpush1.bf16.msra.mxu0 %v4198
        %4281 = vmatprep.subr.bf16.mxu0 0
        %4282 = vmatpush1.bf16.msra.mxu0 %v4197
        %4283 = vmatprep.subr.bf16.mxu0 0
        %4284 = vmatpush1.bf16.msra.mxu0 %v4196
        %4285 = vmatprep.subr.bf16.mxu0 0
        %4286 = vmatpush2.bf16.msra.mxu0 0
        %4287 = vmatprep.subr.bf16.mxu0 0
        %4288 = vmatpush2.bf16.msra.mxu0 0
        %4289 = vmatprep.subr.bf16.mxu0 0
        %4290 = vmatpush2.bf16.msra.mxu0 0
        %4291 = vmatprep.subr.bf16.mxu0 0
        %4292 = vmatpush2.bf16.msra.mxu0 0
        %4293 = vmatprep.subr.bf16.mxu0 0
        %4294 = vmatpush2.bf16.msra.mxu0 0
        %4295 = vmatprep.subr.bf16.mxu0 0
        %4296 = vmatpush2.bf16.msra.mxu0 0
        %4297 = vmatprep.subr.bf16.mxu0 0
        %4298 = vmatpush2.bf16.msra.mxu0 0
        %4299 = vmatprep.subr.bf16.mxu0 0
        %4300 = vmatpush2.bf16.msra.mxu0 0
        %4301 = vmatprep.mubr.bf16.mxu0 0
        %4302 = vmatmul.mubr.bf16.gmra.mxu0 %v4205
        %v4303 = vpop.f32.mrf.mxu0
        %v4304 = vadd.f32 %v4178, %v4303
        %v4305 = vpop.f32.mrf.mxu0
        %v4306 = vpop.f32.mrf.mxu0
        %v4307 = vadd.f32 %v4178, %v4306
        %v4308 = vpop.f32.mrf.mxu0
        %4309 = vmatprep.mubr.bf16.mxu0 0
        %4310 = vmatmul.mubr.bf16.gmra.mxu0 %v4207
        %v4311 = vpop.f32.mrf.mxu0
        %v4312 = vadd.f32 %v4178, %v4311
        %v4313 = vpop.f32.mrf.mxu0
        %v4314 = vpop.f32.mrf.mxu0
        %v4315 = vadd.f32 %v4178, %v4314
        %v4316 = vpop.f32.mrf.mxu0
        %4317 = vmatprep.mubr.bf16.mxu0 0
        %4318 = vmatmul.mubr.bf16.gmra.mxu0 %v4209
        %v4319 = vpop.f32.mrf.mxu0
        %v4320 = vadd.f32 %v4178, %v4319
        %v4321 = vpop.f32.mrf.mxu0
        %v4322 = vpop.f32.mrf.mxu0
        %v4323 = vadd.f32 %v4178, %v4322
        %v4324 = vpop.f32.mrf.mxu0
        %4325 = vmatprep.mubr.bf16.mxu0 0
        %4326 = vmatmul.mubr.bf16.gmra.mxu0 %v4211
        %v4327 = vpop.f32.mrf.mxu0
        %v4328 = vadd.f32 %v4178, %v4327
        %v4329 = vpop.f32.mrf.mxu0
        %v4330 = vpop.f32.mrf.mxu0
        %v4331 = vadd.f32 %v4178, %v4330
        %v4332 = vpop.f32.mrf.mxu0
        %4333 = vmatprep.mubr.bf16.mxu0 0
        %4334 = vmatmul.mubr.bf16.gmra.mxu0 %v4213
        %v4335 = vpop.f32.mrf.mxu0
        %v4336 = vadd.f32 %v4178, %v4335
        %v4337 = vpop.f32.mrf.mxu0
        %v4338 = vpop.f32.mrf.mxu0
        %v4339 = vadd.f32 %v4178, %v4338
        %v4340 = vpop.f32.mrf.mxu0
        %4341 = vmatprep.mubr.bf16.mxu0 0
        %4342 = vmatmul.mubr.bf16.gmra.mxu0 %v4215
        %v4343 = vpop.f32.mrf.mxu0
        %v4344 = vadd.f32 %v4178, %v4343
        %v4345 = vpop.f32.mrf.mxu0
        %v4346 = vpop.f32.mrf.mxu0
        %v4347 = vadd.f32 %v4178, %v4346
        %v4348 = vpop.f32.mrf.mxu0
        %4349 = vmatprep.mubr.bf16.mxu0 0
        %4350 = vmatmul.mubr.bf16.gmra.mxu0 %v4217
        %v4351 = vpop.f32.mrf.mxu0
        %v4352 = vadd.f32 %v4178, %v4351
        %v4353 = vpop.f32.mrf.mxu0
        %v4354 = vpop.f32.mrf.mxu0
        %v4355 = vadd.f32 %v4178, %v4354
        %v4356 = vpop.f32.mrf.mxu0
        %4357 = vmatprep.mubr.bf16.mxu0 0
        %4358 = vmatmul.mubr.bf16.gmra.mxu0 %v4219
        %v4359 = vpop.f32.mrf.mxu0
        %v4360 = vadd.f32 %v4178, %v4359
        %v4361 = vpop.f32.mrf.mxu0
        %v4362 = vpop.f32.mrf.mxu0
        %v4363 = vadd.f32 %v4178, %v4362
        %v4364 = vpop.f32.mrf.mxu0
        %4365 = vmatprep.mubr.bf16.mxu0 0
        %4366 = vmatmul.mubr.bf16.gmra.mxu0 %v4221
        %v4367 = vpop.f32.mrf.mxu0
        %v4368 = vadd.f32 %v4178, %v4367
        %v4369 = vpop.f32.mrf.mxu0
        %v4370 = vpop.f32.mrf.mxu0
        %v4371 = vadd.f32 %v4178, %v4370
        %v4372 = vpop.f32.mrf.mxu0
        %4373 = vmatprep.mubr.bf16.mxu0 0
        %4374 = vmatmul.mubr.bf16.gmra.mxu0 %v4223
        %v4375 = vpop.f32.mrf.mxu0
        %v4376 = vadd.f32 %v4178, %v4375
        %v4377 = vpop.f32.mrf.mxu0
        %v4378 = vpop.f32.mrf.mxu0
        %v4379 = vadd.f32 %v4178, %v4378
        %v4380 = vpop.f32.mrf.mxu0
        %4381 = vmatprep.mubr.bf16.mxu0 0
        %4382 = vmatmul.mubr.bf16.gmra.mxu0 %v4225
        %v4383 = vpop.f32.mrf.mxu0
        %v4384 = vadd.f32 %v4178, %v4383
        %v4385 = vpop.f32.mrf.mxu0
        %v4386 = vpop.f32.mrf.mxu0
        %v4387 = vadd.f32 %v4178, %v4386
        %v4388 = vpop.f32.mrf.mxu0
        %4389 = vmatprep.mubr.bf16.mxu0 0
        %4390 = vmatmul.mubr.bf16.gmra.mxu0 %v4227
        %v4391 = vpop.f32.mrf.mxu0
        %v4392 = vadd.f32 %v4178, %v4391
        %v4393 = vpop.f32.mrf.mxu0
        %v4394 = vpop.f32.mrf.mxu0
        %v4395 = vadd.f32 %v4178, %v4394
        %v4396 = vpop.f32.mrf.mxu0
        %4397 = vmatprep.mubr.bf16.mxu0 0
        %4398 = vmatmul.mubr.bf16.gmra.mxu0 %v4229
        %v4399 = vpop.f32.mrf.mxu0
        %v4400 = vadd.f32 %v4178, %v4399
        %v4401 = vpop.f32.mrf.mxu0
        %v4402 = vpop.f32.mrf.mxu0
        %v4403 = vadd.f32 %v4178, %v4402
        %v4404 = vpop.f32.mrf.mxu0
        %4405 = vmatprep.mubr.bf16.mxu0 0
        %4406 = vmatmul.mubr.bf16.gmra.mxu0 %v4231
        %v4407 = vpop.f32.mrf.mxu0
        %v4408 = vadd.f32 %v4178, %v4407
        %v4409 = vpop.f32.mrf.mxu0
        %v4410 = vpop.f32.mrf.mxu0
        %v4411 = vadd.f32 %v4178, %v4410
        %v4412 = vpop.f32.mrf.mxu0
        %4413 = vmatprep.mubr.bf16.mxu0 0
        %4414 = vmatmul.mubr.bf16.gmra.mxu0 %v4233
        %v4415 = vpop.f32.mrf.mxu0
        %v4416 = vadd.f32 %v4178, %v4415
        %v4417 = vpop.f32.mrf.mxu0
        %v4418 = vpop.f32.mrf.mxu0
        %v4419 = vadd.f32 %v4178, %v4418
        %v4420 = vpop.f32.mrf.mxu0
        %4421 = vmatprep.mubr.bf16.mxu0 0
        %4422 = vmatmul.mubr.bf16.gmra.mxu0 %v4235
        %v4423 = vpop.f32.mrf.mxu0
        %v4424 = vadd.f32 %v4178, %v4423
        %v4425 = vpop.f32.mrf.mxu0
        %v4426 = vpop.f32.mrf.mxu0
        %v4427 = vadd.f32 %v4178, %v4426
        %v4428 = vpop.f32.mrf.mxu0
        %4429 = vmatprep.mubr.bf16.mxu0 0
        %4430 = vmatmul.mubr.bf16.gmra.mxu0 %v4237
        %v4431 = vpop.f32.mrf.mxu0
        %v4432 = vadd.f32 %v4178, %v4431
        %v4433 = vpop.f32.mrf.mxu0
        %v4434 = vpop.f32.mrf.mxu0
        %v4435 = vadd.f32 %v4178, %v4434
        %v4436 = vpop.f32.mrf.mxu0
        %4437 = vmatprep.mubr.bf16.mxu0 0
        %4438 = vmatmul.mubr.bf16.gmra.mxu0 %v4239
        %v4439 = vpop.f32.mrf.mxu0
        %v4440 = vadd.f32 %v4178, %v4439
        %v4441 = vpop.f32.mrf.mxu0
        %v4442 = vpop.f32.mrf.mxu0
        %v4443 = vadd.f32 %v4178, %v4442
        %v4444 = vpop.f32.mrf.mxu0
        %4445 = vmatprep.mubr.bf16.mxu0 0
        %4446 = vmatmul.mubr.bf16.gmra.mxu0 %v4241
        %v4447 = vpop.f32.mrf.mxu0
        %v4448 = vadd.f32 %v4178, %v4447
        %v4449 = vpop.f32.mrf.mxu0
        %v4450 = vpop.f32.mrf.mxu0
        %v4451 = vadd.f32 %v4178, %v4450
        %v4452 = vpop.f32.mrf.mxu0
        %4453 = vmatprep.mubr.bf16.mxu0 0
        %4454 = vmatmul.mubr.bf16.gmra.mxu0 %v4243
        %v4455 = vpop.f32.mrf.mxu0
        %v4456 = vadd.f32 %v4178, %v4455
        %v4457 = vpop.f32.mrf.mxu0
        %v4458 = vpop.f32.mrf.mxu0
        %v4459 = vadd.f32 %v4178, %v4458
        %v4460 = vpop.f32.mrf.mxu0
        %4461 = vmatprep.mubr.bf16.mxu0 0
        %4462 = vmatmul.mubr.bf16.gmra.mxu0 %v4245
        %v4463 = vpop.f32.mrf.mxu0
        %v4464 = vadd.f32 %v4178, %v4463
        %v4465 = vpop.f32.mrf.mxu0
        %v4466 = vpop.f32.mrf.mxu0
        %v4467 = vadd.f32 %v4178, %v4466
        %v4468 = vpop.f32.mrf.mxu0
        %4469 = vmatprep.mubr.bf16.mxu0 0
        %4470 = vmatmul.mubr.bf16.gmra.mxu0 %v4247
        %v4471 = vpop.f32.mrf.mxu0
        %v4472 = vadd.f32 %v4178, %v4471
        %v4473 = vpop.f32.mrf.mxu0
        %v4474 = vpop.f32.mrf.mxu0
        %v4475 = vadd.f32 %v4178, %v4474
        %v4476 = vpop.f32.mrf.mxu0
        %4477 = vmatprep.mubr.bf16.mxu0 0
        %4478 = vmatmul.mubr.bf16.gmra.mxu0 %v4249
        %v4479 = vpop.f32.mrf.mxu0
        %v4480 = vadd.f32 %v4178, %v4479
        %v4481 = vpop.f32.mrf.mxu0
        %v4482 = vpop.f32.mrf.mxu0
        %v4483 = vadd.f32 %v4178, %v4482
        %v4484 = vpop.f32.mrf.mxu0
        %4485 = vmatprep.mubr.bf16.mxu0 0
        %4486 = vmatmul.mubr.bf16.gmra.mxu0 %v4251
        %v4487 = vpop.f32.mrf.mxu0
        %v4488 = vadd.f32 %v4178, %v4487
        %v4489 = vpop.f32.mrf.mxu0
        %v4490 = vpop.f32.mrf.mxu0
        %v4491 = vadd.f32 %v4178, %v4490
        %v4492 = vpop.f32.mrf.mxu0
        %4493 = vmatprep.mubr.bf16.mxu0 0
        %4494 = vmatmul.mubr.bf16.gmra.mxu0 %v4253
        %v4495 = vpop.f32.mrf.mxu0
        %v4496 = vadd.f32 %v4178, %v4495
        %v4497 = vpop.f32.mrf.mxu0
        %v4498 = vpop.f32.mrf.mxu0
        %v4499 = vadd.f32 %v4178, %v4498
        %v4500 = vpop.f32.mrf.mxu0
        %4501 = vmatprep.mubr.bf16.mxu0 0
        %4502 = vmatmul.mubr.bf16.gmra.mxu0 %v4255
        %v4503 = vpop.f32.mrf.mxu0
        %v4504 = vadd.f32 %v4178, %v4503
        %v4505 = vpop.f32.mrf.mxu0
        %v4506 = vpop.f32.mrf.mxu0
        %v4507 = vadd.f32 %v4178, %v4506
        %v4508 = vpop.f32.mrf.mxu0
        %4509 = vmatprep.mubr.bf16.mxu0 0
        %4510 = vmatmul.mubr.bf16.gmra.mxu0 %v4257
        %v4511 = vpop.f32.mrf.mxu0
        %v4512 = vadd.f32 %v4178, %v4511
        %v4513 = vpop.f32.mrf.mxu0
        %v4514 = vpop.f32.mrf.mxu0
        %v4515 = vadd.f32 %v4178, %v4514
        %v4516 = vpop.f32.mrf.mxu0
        %4517 = vmatprep.mubr.bf16.mxu0 0
        %4518 = vmatmul.mubr.bf16.gmra.mxu0 %v4259
        %v4519 = vpop.f32.mrf.mxu0
        %v4520 = vadd.f32 %v4178, %v4519
        %v4521 = vpop.f32.mrf.mxu0
        %v4522 = vpop.f32.mrf.mxu0
        %v4523 = vadd.f32 %v4178, %v4522
        %v4524 = vpop.f32.mrf.mxu0
        %4525 = vmatprep.mubr.bf16.mxu0 0
        %4526 = vmatmul.mubr.bf16.gmra.mxu0 %v4261
        %v4527 = vpop.f32.mrf.mxu0
        %v4528 = vadd.f32 %v4178, %v4527
        %v4529 = vpop.f32.mrf.mxu0
        %v4530 = vpop.f32.mrf.mxu0
        %v4531 = vadd.f32 %v4178, %v4530
        %v4532 = vpop.f32.mrf.mxu0
        %4533 = vmatprep.mubr.bf16.mxu0 0
        %4534 = vmatmul.mubr.bf16.gmra.mxu0 %v4263
        %v4535 = vpop.f32.mrf.mxu0
        %v4536 = vadd.f32 %v4178, %v4535
        %v4537 = vpop.f32.mrf.mxu0
        %v4538 = vpop.f32.mrf.mxu0
        %v4539 = vadd.f32 %v4178, %v4538
        %v4540 = vpop.f32.mrf.mxu0
        %4541 = vmatprep.mubr.bf16.mxu0 0
        %4542 = vmatmul.mubr.bf16.gmra.mxu0 %v4265
        %v4543 = vpop.f32.mrf.mxu0
        %v4544 = vadd.f32 %v4178, %v4543
        %v4545 = vpop.f32.mrf.mxu0
        %v4546 = vpop.f32.mrf.mxu0
        %v4547 = vadd.f32 %v4178, %v4546
        %v4548 = vpop.f32.mrf.mxu0
        %4549 = vmatprep.mubr.bf16.mxu0 0
        %4550 = vmatmul.mubr.bf16.gmra.mxu0 %v4267
        %v4551 = vpop.f32.mrf.mxu0
        %v4552 = vadd.f32 %v4178, %v4551
        %v4553 = vpop.f32.mrf.mxu0
        %v4554 = vpop.f32.mrf.mxu0
        %v4555 = vadd.f32 %v4178, %v4554
        %v4556 = vpop.f32.mrf.mxu0
        %4557 = vdwg.mxu0
        %4558 = vst.msk [vmem:[%s628] sm:$0xff] %vm3266, %v4304
        %4559 = vst.msk [vmem:[%s628 + $0x8] sm:$0xff] %vm3266, %v4307
        %4560 = vst.msk [vmem:[%s628 + $0x10] sm:$0xff] %vm3266, %v4312
        %4561 = vst.msk [vmem:[%s628 + $0x18] sm:$0xff] %vm3266, %v4315
        %4562 = vst.msk [vmem:[%s628 + $0x20] sm:$0xff] %vm3266, %v4320
        %4563 = vst.msk [vmem:[%s628 + $0x28] sm:$0xff] %vm3266, %v4323
        %4564 = vst.msk [vmem:[%s628 + $0x30] sm:$0xff] %vm3266, %v4328
        %4565 = vst.msk [vmem:[%s628 + $0x38] sm:$0xff] %vm3266, %v4331
        %4566 = vst.msk [vmem:[%s628 + $0x40] sm:$0xff] %vm3266, %v4336
        %4567 = vst.msk [vmem:[%s628 + $0x48] sm:$0xff] %vm3266, %v4339
        %4568 = vst.msk [vmem:[%s628 + $0x50] sm:$0xff] %vm3266, %v4344
        %4569 = vst.msk [vmem:[%s628 + $0x58] sm:$0xff] %vm3266, %v4347
        %4570 = vst.msk [vmem:[%s628 + $0x60] sm:$0xff] %vm3266, %v4352
        %4571 = vst.msk [vmem:[%s628 + $0x68] sm:$0xff] %vm3266, %v4355
        %4572 = vst.msk [vmem:[%s628 + $0x70] sm:$0xff] %vm3266, %v4360
        %4573 = vst.msk [vmem:[%s628 + $0x78] sm:$0xff] %vm3266, %v4363
        %4574 = vst.msk [vmem:[%s628 + $0x80] sm:$0xff] %vm3266, %v4368
        %4575 = vst.msk [vmem:[%s628 + $0x88] sm:$0xff] %vm3266, %v4371
        %4576 = vst.msk [vmem:[%s628 + $0x90] sm:$0xff] %vm3266, %v4376
        %4577 = vst.msk [vmem:[%s628 + $0x98] sm:$0xff] %vm3266, %v4379
        %4578 = vst.msk [vmem:[%s628 + $0xa0] sm:$0xff] %vm3266, %v4384
        %4579 = vst.msk [vmem:[%s628 + $0xa8] sm:$0xff] %vm3266, %v4387
        %4580 = vst.msk [vmem:[%s628 + $0xb0] sm:$0xff] %vm3266, %v4392
        %4581 = vst.msk [vmem:[%s628 + $0xb8] sm:$0xff] %vm3266, %v4395
        %4582 = vst.msk [vmem:[%s628 + $0xc0] sm:$0xff] %vm3266, %v4400
        %4583 = vst.msk [vmem:[%s628 + $0xc8] sm:$0xff] %vm3266, %v4403
        %4584 = vst.msk [vmem:[%s628 + $0xd0] sm:$0xff] %vm3266, %v4408
        %4585 = vst.msk [vmem:[%s628 + $0xd8] sm:$0xff] %vm3266, %v4411
        %4586 = vst.msk [vmem:[%s628 + $0xe0] sm:$0xff] %vm3266, %v4416
        %4587 = vst.msk [vmem:[%s628 + $0xe8] sm:$0xff] %vm3266, %v4419
        %4588 = vst.msk [vmem:[%s628 + $0xf0] sm:$0xff] %vm3266, %v4424
        %4589 = vst.msk [vmem:[%s628 + $0xf8] sm:$0xff] %vm3266, %v4427
        %4590 = vst.msk [vmem:[%s628 + $0x100] sm:$0xff] %vm3266, %v4432
        %4591 = vst.msk [vmem:[%s628 + $0x108] sm:$0xff] %vm3266, %v4435
        %4592 = vst.msk [vmem:[%s628 + $0x110] sm:$0xff] %vm3266, %v4440
        %4593 = vst.msk [vmem:[%s628 + $0x118] sm:$0xff] %vm3266, %v4443
        %4594 = vst.msk [vmem:[%s628 + $0x120] sm:$0xff] %vm3266, %v4448
        %4595 = vst.msk [vmem:[%s628 + $0x128] sm:$0xff] %vm3266, %v4451
        %4596 = vst.msk [vmem:[%s628 + $0x130] sm:$0xff] %vm3266, %v4456
        %4597 = vst.msk [vmem:[%s628 + $0x138] sm:$0xff] %vm3266, %v4459
        %4598 = vst.msk [vmem:[%s628 + $0x140] sm:$0xff] %vm3266, %v4464
        %4599 = vst.msk [vmem:[%s628 + $0x148] sm:$0xff] %vm3266, %v4467
        %4600 = vst.msk [vmem:[%s628 + $0x150] sm:$0xff] %vm3266, %v4472
        %4601 = vst.msk [vmem:[%s628 + $0x158] sm:$0xff] %vm3266, %v4475
        %4602 = vst.msk [vmem:[%s628 + $0x160] sm:$0xff] %vm3266, %v4480
        %4603 = vst.msk [vmem:[%s628 + $0x168] sm:$0xff] %vm3266, %v4483
        %4604 = vst.msk [vmem:[%s628 + $0x170] sm:$0xff] %vm3266, %v4488
        %4605 = vst.msk [vmem:[%s628 + $0x178] sm:$0xff] %vm3266, %v4491
        %4606 = vst.msk [vmem:[%s628 + $0x180] sm:$0xff] %vm3266, %v4496
        %4607 = vst.msk [vmem:[%s628 + $0x188] sm:$0xff] %vm3266, %v4499
        %4608 = vst.msk [vmem:[%s628 + $0x190] sm:$0xff] %vm3266, %v4504
        %4609 = vst.msk [vmem:[%s628 + $0x198] sm:$0xff] %vm3266, %v4507
        %4610 = vst.msk [vmem:[%s628 + $0x1a0] sm:$0xff] %vm3266, %v4512
        %4611 = vst.msk [vmem:[%s628 + $0x1a8] sm:$0xff] %vm3266, %v4515
        %4612 = vst.msk [vmem:[%s628 + $0x1b0] sm:$0xff] %vm3266, %v4520
        %4613 = vst.msk [vmem:[%s628 + $0x1b8] sm:$0xff] %vm3266, %v4523
        %4614 = vst.msk [vmem:[%s628 + $0x1c0] sm:$0xff] %vm3266, %v4528
        %4615 = vst.msk [vmem:[%s628 + $0x1c8] sm:$0xff] %vm3266, %v4531
        %4616 = vst.msk [vmem:[%s628 + $0x1d0] sm:$0xff] %vm3266, %v4536
        %4617 = vst.msk [vmem:[%s628 + $0x1d8] sm:$0xff] %vm3266, %v4539
        %4618 = vst.msk [vmem:[%s628 + $0x1e0] sm:$0xff] %vm3266, %v4544
        %4619 = vst.msk [vmem:[%s628 + $0x1e8] sm:$0xff] %vm3266, %v4547
        %4620 = vst.msk [vmem:[%s628 + $0x1f0] sm:$0xff] %vm3266, %v4552
        %4621 = vst.msk [vmem:[%s628 + $0x1f8] sm:$0xff] %vm3266, %v4555
        %v4622 = vpack.c.bf16 %v4307, %v4304
        %v4623 = vpack.c.bf16 %v4315, %v4312
        %v4624 = vpack.c.bf16 %v4323, %v4320
        %v4625 = vpack.c.bf16 %v4331, %v4328
        %v4626 = vpack.c.bf16 %v4339, %v4336
        %v4627 = vpack.c.bf16 %v4347, %v4344
        %v4628 = vpack.c.bf16 %v4355, %v4352
        %v4629 = vpack.c.bf16 %v4363, %v4360
        %v4630 = vpack.c.bf16 %v4371, %v4368
        %v4631 = vpack.c.bf16 %v4379, %v4376
        %v4632 = vpack.c.bf16 %v4387, %v4384
        %v4633 = vpack.c.bf16 %v4395, %v4392
        %v4634 = vpack.c.bf16 %v4403, %v4400
        %v4635 = vpack.c.bf16 %v4411, %v4408
        %v4636 = vpack.c.bf16 %v4419, %v4416
        %v4637 = vpack.c.bf16 %v4427, %v4424
        %v4638 = vpack.c.bf16 %v4435, %v4432
        %v4639 = vpack.c.bf16 %v4443, %v4440
        %v4640 = vpack.c.bf16 %v4451, %v4448
        %v4641 = vpack.c.bf16 %v4459, %v4456
        %v4642 = vpack.c.bf16 %v4467, %v4464
        %v4643 = vpack.c.bf16 %v4475, %v4472
        %v4644 = vpack.c.bf16 %v4483, %v4480
        %v4645 = vpack.c.bf16 %v4491, %v4488
        %v4646 = vpack.c.bf16 %v4499, %v4496
        %v4647 = vpack.c.bf16 %v4507, %v4504
        %v4648 = vpack.c.bf16 %v4515, %v4512
        %v4649 = vpack.c.bf16 %v4523, %v4520
        %v4650 = vpack.c.bf16 %v4531, %v4528
        %v4651 = vpack.c.bf16 %v4539, %v4536
        %v4652 = vpack.c.bf16 %v4547, %v4544
        %v4653 = vpack.c.bf16 %v4555, %v4552
        %4662 = vrot.lane.b32.xlu0 %v4630, 16
        %v4663 = vpop.permute.xlu0 %4662
        %4664 = vrot.lane.b32.xlu0 %v4631, 16
        %v4665 = vpop.permute.xlu0 %4664
        %4666 = vrot.lane.b32.xlu0 %v4632, 16
        %v4667 = vpop.permute.xlu0 %4666
        %4668 = vrot.lane.b32.xlu0 %v4633, 16
        %v4669 = vpop.permute.xlu0 %4668
        %4670 = vrot.lane.b32.xlu0 %v4634, 16
        %v4671 = vpop.permute.xlu0 %4670
        %4672 = vrot.lane.b32.xlu0 %v4635, 16
        %v4673 = vpop.permute.xlu0 %4672
        %4674 = vrot.lane.b32.xlu0 %v4636, 16
        %v4675 = vpop.permute.xlu0 %4674
        %4676 = vrot.lane.b32.xlu0 %v4637, 16
        %v4677 = vpop.permute.xlu0 %4676
        %4686 = vrot.lane.b32.xlu0 %v4638, 32
        %v4687 = vpop.permute.xlu0 %4686
        %4688 = vrot.lane.b32.xlu0 %v4639, 32
        %v4689 = vpop.permute.xlu0 %4688
        %4690 = vrot.lane.b32.xlu0 %v4640, 32
        %v4691 = vpop.permute.xlu0 %4690
        %4692 = vrot.lane.b32.xlu0 %v4641, 32
        %v4693 = vpop.permute.xlu0 %4692
        %4694 = vrot.lane.b32.xlu0 %v4642, 32
        %v4695 = vpop.permute.xlu0 %4694
        %4696 = vrot.lane.b32.xlu0 %v4643, 32
        %v4697 = vpop.permute.xlu0 %4696
        %4698 = vrot.lane.b32.xlu0 %v4644, 32
        %v4699 = vpop.permute.xlu0 %4698
        %4700 = vrot.lane.b32.xlu0 %v4645, 32
        %v4701 = vpop.permute.xlu0 %4700
        %4710 = vrot.lane.b32.xlu0 %v4646, 48
        %v4711 = vpop.permute.xlu0 %4710
        %4712 = vrot.lane.b32.xlu0 %v4647, 48
        %v4713 = vpop.permute.xlu0 %4712
        %4714 = vrot.lane.b32.xlu0 %v4648, 48
        %v4715 = vpop.permute.xlu0 %4714
        %4716 = vrot.lane.b32.xlu0 %v4649, 48
        %v4717 = vpop.permute.xlu0 %4716
        %4718 = vrot.lane.b32.xlu0 %v4650, 48
        %v4719 = vpop.permute.xlu0 %4718
        %4720 = vrot.lane.b32.xlu0 %v4651, 48
        %v4721 = vpop.permute.xlu0 %4720
        %4722 = vrot.lane.b32.xlu0 %v4652, 48
        %v4723 = vpop.permute.xlu0 %4722
        %4724 = vrot.lane.b32.xlu0 %v4653, 48
        %v4725 = vpop.permute.xlu0 %4724
        %v4728 = vsel %vm3266, %v4622, %v4663
        %v4731 = vsel %vm3266, %v4623, %v4665
        %v4734 = vsel %vm3266, %v4624, %v4667
        %v4737 = vsel %vm3266, %v4625, %v4669
        %v4740 = vsel %vm3266, %v4626, %v4671
        %v4743 = vsel %vm3266, %v4627, %v4673
        %v4746 = vsel %vm3266, %v4628, %v4675
        %v4749 = vsel %vm3266, %v4629, %v4677
        %v4751 = vsel %vm4035, %v4728, %v4687
        %v4753 = vsel %vm4035, %v4731, %v4689
        %v4755 = vsel %vm4035, %v4734, %v4691
        %v4757 = vsel %vm4035, %v4737, %v4693
        %v4759 = vsel %vm4035, %v4740, %v4695
        %v4761 = vsel %vm4035, %v4743, %v4697
        %v4763 = vsel %vm4035, %v4746, %v4699
        %v4765 = vsel %vm4035, %v4749, %v4701
        %v4767 = vsel %vm4100, %v4751, %v4711
        %v4769 = vsel %vm4100, %v4753, %v4713
        %v4771 = vsel %vm4100, %v4755, %v4715
        %v4773 = vsel %vm4100, %v4757, %v4717
        %v4775 = vsel %vm4100, %v4759, %v4719
        %v4777 = vsel %vm4100, %v4761, %v4721
        %v4779 = vsel %vm4100, %v4763, %v4723
        %v4781 = vsel %vm4100, %v4765, %v4725
        %v4782 = vld [vmem:[%s7] sm:$0xf]
        %v4783 = vld [vmem:[%s7 + $0x4] sm:$0xf]
        %v4784 = vld [vmem:[%s7 + $0x8] sm:$0xf]
        %v4785 = vld [vmem:[%s7 + $0xc] sm:$0xf]
        %v4786 = vld [vmem:[%s7 + $0x10] sm:$0xf]
        %v4787 = vld [vmem:[%s7 + $0x14] sm:$0xf]
        %v4788 = vld [vmem:[%s7 + $0x18] sm:$0xf]
        %v4789 = vld [vmem:[%s7 + $0x1c] sm:$0xf]
        %v4790 = vld [vmem:[%s8] sm:$0x1]
        %v4792 = vlaneseq
        %v4793 = vshrl.u32 %v4792, 7
        %v4794 = vsub.s32 0, %v4793
        %v4795 = vrot.slane %v4790, %v4794
        %v4805 = vunpack.c.l.b16 %v4782
        %v4806 = vunpack.c.l.b16 %v4783
        %v4807 = vunpack.c.l.b16 %v4784
        %v4808 = vunpack.c.l.b16 %v4785
        %v4809 = vunpack.c.l.b16 %v4786
        %v4810 = vunpack.c.l.b16 %v4787
        %v4811 = vunpack.c.l.b16 %v4788
        %v4812 = vunpack.c.l.b16 %v4789
        %v4813 = vpack.c.b16 %v4806, %v4805
        %v4814 = vpack.c.b16 %v4808, %v4807
        %v4815 = vpack.c.b16 %v4810, %v4809
        %v4816 = vpack.c.b16 %v4812, %v4811
        %v4821 = vsel %vm4204, %v4767, 0
        %v4823 = vsel %vm4204, %v4769, 0
        %v4825 = vsel %vm4204, %v4771, 0
        %v4827 = vsel %vm4204, %v4773, 0
        %v4829 = vsel %vm4204, %v4775, 0
        %v4831 = vsel %vm4204, %v4777, 0
        %v4833 = vsel %vm4204, %v4779, 0
        %v4835 = vsel %vm4204, %v4781, 0
        %4837 = vmatprep.subr.bf16.mxu0 0
        %4838 = vmatpush1.bf16.msra.mxu0 0
        %4839 = vmatprep.subr.bf16.mxu0 0
        %4840 = vmatpush1.bf16.msra.mxu0 0
        %4841 = vmatprep.subr.bf16.mxu0 0
        %4842 = vmatpush1.bf16.msra.mxu0 0
        %4843 = vmatprep.subr.bf16.mxu0 0
        %4844 = vmatpush1.bf16.msra.mxu0 0
        %4845 = vmatprep.subr.bf16.mxu0 0
        %4846 = vmatpush1.bf16.msra.mxu0 %v4816
        %4847 = vmatprep.subr.bf16.mxu0 0
        %4848 = vmatpush1.bf16.msra.mxu0 %v4815
        %4849 = vmatprep.subr.bf16.mxu0 0
        %4850 = vmatpush1.bf16.msra.mxu0 %v4814
        %4851 = vmatprep.subr.bf16.mxu0 0
        %4852 = vmatpush1.bf16.msra.mxu0 %v4813
        %4853 = vmatprep.subr.bf16.mxu0 0
        %4854 = vmatpush2.bf16.msra.mxu0 0
        %4855 = vmatprep.subr.bf16.mxu0 0
        %4856 = vmatpush2.bf16.msra.mxu0 0
        %4857 = vmatprep.subr.bf16.mxu0 0
        %4858 = vmatpush2.bf16.msra.mxu0 0
        %4859 = vmatprep.subr.bf16.mxu0 0
        %4860 = vmatpush2.bf16.msra.mxu0 0
        %4861 = vmatprep.subr.bf16.mxu0 0
        %4862 = vmatpush2.bf16.msra.mxu0 0
        %4863 = vmatprep.subr.bf16.mxu0 0
        %4864 = vmatpush2.bf16.msra.mxu0 0
        %4865 = vmatprep.subr.bf16.mxu0 0
        %4866 = vmatpush2.bf16.msra.mxu0 0
        %4867 = vmatprep.subr.bf16.mxu0 0
        %4868 = vmatpush2.bf16.msra.mxu0 0
        %4869 = vmatprep.mubr.bf16.mxu0 0
        %4870 = vmatmul.mubr.bf16.gmra.mxu0 %v4821
        %v4871 = vpop.f32.mrf.mxu0
        %v4872 = vadd.f32 %v4795, %v4871
        %v4873 = vpop.f32.mrf.mxu0
        %v4874 = vpop.f32.mrf.mxu0
        %v4875 = vadd.f32 %v4795, %v4874
        %v4876 = vpop.f32.mrf.mxu0
        %4877 = vmatprep.mubr.bf16.mxu0 0
        %4878 = vmatmul.mubr.bf16.gmra.mxu0 %v4823
        %v4879 = vpop.f32.mrf.mxu0
        %v4880 = vadd.f32 %v4795, %v4879
        %v4881 = vpop.f32.mrf.mxu0
        %v4882 = vpop.f32.mrf.mxu0
        %v4883 = vadd.f32 %v4795, %v4882
        %v4884 = vpop.f32.mrf.mxu0
        %4885 = vmatprep.mubr.bf16.mxu0 0
        %4886 = vmatmul.mubr.bf16.gmra.mxu0 %v4825
        %v4887 = vpop.f32.mrf.mxu0
        %v4888 = vadd.f32 %v4795, %v4887
        %v4889 = vpop.f32.mrf.mxu0
        %v4890 = vpop.f32.mrf.mxu0
        %v4891 = vadd.f32 %v4795, %v4890
        %v4892 = vpop.f32.mrf.mxu0
        %4893 = vmatprep.mubr.bf16.mxu0 0
        %4894 = vmatmul.mubr.bf16.gmra.mxu0 %v4827
        %v4895 = vpop.f32.mrf.mxu0
        %v4896 = vadd.f32 %v4795, %v4895
        %v4897 = vpop.f32.mrf.mxu0
        %v4898 = vpop.f32.mrf.mxu0
        %v4899 = vadd.f32 %v4795, %v4898
        %v4900 = vpop.f32.mrf.mxu0
        %4901 = vmatprep.mubr.bf16.mxu0 0
        %4902 = vmatmul.mubr.bf16.gmra.mxu0 %v4829
        %v4903 = vpop.f32.mrf.mxu0
        %v4904 = vadd.f32 %v4795, %v4903
        %v4905 = vpop.f32.mrf.mxu0
        %v4906 = vpop.f32.mrf.mxu0
        %v4907 = vadd.f32 %v4795, %v4906
        %v4908 = vpop.f32.mrf.mxu0
        %4909 = vmatprep.mubr.bf16.mxu0 0
        %4910 = vmatmul.mubr.bf16.gmra.mxu0 %v4831
        %v4911 = vpop.f32.mrf.mxu0
        %v4912 = vadd.f32 %v4795, %v4911
        %v4913 = vpop.f32.mrf.mxu0
        %v4914 = vpop.f32.mrf.mxu0
        %v4915 = vadd.f32 %v4795, %v4914
        %v4916 = vpop.f32.mrf.mxu0
        %4917 = vmatprep.mubr.bf16.mxu0 0
        %4918 = vmatmul.mubr.bf16.gmra.mxu0 %v4833
        %v4919 = vpop.f32.mrf.mxu0
        %v4920 = vadd.f32 %v4795, %v4919
        %v4921 = vpop.f32.mrf.mxu0
        %v4922 = vpop.f32.mrf.mxu0
        %v4923 = vadd.f32 %v4795, %v4922
        %v4924 = vpop.f32.mrf.mxu0
        %4925 = vmatprep.mubr.bf16.mxu0 0
        %4926 = vmatmul.mubr.bf16.gmra.mxu0 %v4835
        %v4927 = vpop.f32.mrf.mxu0
        %v4928 = vadd.f32 %v4795, %v4927
        %v4929 = vpop.f32.mrf.mxu0
        %v4930 = vpop.f32.mrf.mxu0
        %v4931 = vadd.f32 %v4795, %v4930
        %v4932 = vpop.f32.mrf.mxu0
        %4933 = vdwg.mxu0
        %4934 = vst.msk [vmem:[%s634] sm:$0xff] %vm3266, %v4872
        %4935 = vst.msk [vmem:[%s634 + $0x8] sm:$0xff] %vm3266, %v4875
        %4936 = vst.msk [vmem:[%s634 + $0x10] sm:$0xff] %vm3266, %v4880
        %4937 = vst.msk [vmem:[%s634 + $0x18] sm:$0xff] %vm3266, %v4883
        %4938 = vst.msk [vmem:[%s634 + $0x20] sm:$0xff] %vm3266, %v4888
        %4939 = vst.msk [vmem:[%s634 + $0x28] sm:$0xff] %vm3266, %v4891
        %4940 = vst.msk [vmem:[%s634 + $0x30] sm:$0xff] %vm3266, %v4896
        %4941 = vst.msk [vmem:[%s634 + $0x38] sm:$0xff] %vm3266, %v4899
        %4942 = vst.msk [vmem:[%s634 + $0x40] sm:$0xff] %vm3266, %v4904
        %4943 = vst.msk [vmem:[%s634 + $0x48] sm:$0xff] %vm3266, %v4907
        %4944 = vst.msk [vmem:[%s634 + $0x50] sm:$0xff] %vm3266, %v4912
        %4945 = vst.msk [vmem:[%s634 + $0x58] sm:$0xff] %vm3266, %v4915
        %4946 = vst.msk [vmem:[%s634 + $0x60] sm:$0xff] %vm3266, %v4920
        %4947 = vst.msk [vmem:[%s634 + $0x68] sm:$0xff] %vm3266, %v4923
        %4948 = vst.msk [vmem:[%s634 + $0x70] sm:$0xff] %vm3266, %v4928
        %4949 = vst.msk [vmem:[%s634 + $0x78] sm:$0xff] %vm3266, %v4931
        %v4950 = vpack.c.bf16 %v4875, %v4872
        %v4951 = vpack.c.bf16 %v4883, %v4880
        %v4952 = vpack.c.bf16 %v4891, %v4888
        %v4953 = vpack.c.bf16 %v4899, %v4896
        %v4954 = vpack.c.bf16 %v4907, %v4904
        %v4955 = vpack.c.bf16 %v4915, %v4912
        %v4956 = vpack.c.bf16 %v4923, %v4920
        %v4957 = vpack.c.bf16 %v4931, %v4928
        %4960 = vrot.lane.b32.xlu0 %v4952, 16
        %v4961 = vpop.permute.xlu0 %4960
        %4962 = vrot.lane.b32.xlu0 %v4953, 16
        %v4963 = vpop.permute.xlu0 %4962
        %4966 = vrot.lane.b32.xlu0 %v4954, 32
        %v4967 = vpop.permute.xlu0 %4966
        %4968 = vrot.lane.b32.xlu0 %v4955, 32
        %v4969 = vpop.permute.xlu0 %4968
        %4972 = vrot.lane.b32.xlu0 %v4956, 48
        %v4973 = vpop.permute.xlu0 %4972
        %4974 = vrot.lane.b32.xlu0 %v4957, 48
        %v4975 = vpop.permute.xlu0 %4974
        %v4978 = vsel %vm3266, %v4950, %v4961
        %v4981 = vsel %vm3266, %v4951, %v4963
        %v4983 = vsel %vm4035, %v4978, %v4967
        %v4985 = vsel %vm4035, %v4981, %v4969
        %v4987 = vsel %vm4100, %v4983, %v4973
        %v4989 = vsel %vm4100, %v4985, %v4975
        %v4990 = vld [vmem:[%s9] sm:$0xf]
        %v4991 = vld [vmem:[%s9 + $0x4] sm:$0xf]
        %v4992 = vld [vmem:[%s9 + $0x8] sm:$0xf]
        %v4993 = vld [vmem:[%s9 + $0xc] sm:$0xf]
        %v4994 = vld [vmem:[%s9 + $0x10] sm:$0xf]
        %v4995 = vld [vmem:[%s9 + $0x14] sm:$0xf]
        %v4996 = vld [vmem:[%s9 + $0x18] sm:$0xf]
        %v4997 = vld [vmem:[%s9 + $0x1c] sm:$0xf]
        %v4998 = vld [vmem:[%s10] sm:$0x1]
        %v5000 = vlaneseq
        %v5001 = vshrl.u32 %v5000, 7
        %v5002 = vsub.s32 0, %v5001
        %v5003 = vrot.slane %v4998, %v5002
        %v5013 = vunpack.c.l.b16 %v4990
        %v5014 = vunpack.c.l.b16 %v4991
        %v5015 = vunpack.c.l.b16 %v4992
        %v5016 = vunpack.c.l.b16 %v4993
        %v5017 = vunpack.c.l.b16 %v4994
        %v5018 = vunpack.c.l.b16 %v4995
        %v5019 = vunpack.c.l.b16 %v4996
        %v5020 = vunpack.c.l.b16 %v4997
        %v5021 = vpack.c.b16 %v5014, %v5013
        %v5022 = vpack.c.b16 %v5016, %v5015
        %v5023 = vpack.c.b16 %v5018, %v5017
        %v5024 = vpack.c.b16 %v5020, %v5019
        %v5029 = vsel %vm4204, %v4987, 0
        %v5031 = vsel %vm4204, %v4989, 0
        %5033 = vmatprep.subr.bf16.mxu0 0
        %5034 = vmatpush1.bf16.msra.mxu0 0
        %5035 = vmatprep.subr.bf16.mxu0 0
        %5036 = vmatpush1.bf16.msra.mxu0 0
        %5037 = vmatprep.subr.bf16.mxu0 0
        %5038 = vmatpush1.bf16.msra.mxu0 0
        %5039 = vmatprep.subr.bf16.mxu0 0
        %5040 = vmatpush1.bf16.msra.mxu0 0
        %5041 = vmatprep.subr.bf16.mxu0 0
        %5042 = vmatpush1.bf16.msra.mxu0 %v5024
        %5043 = vmatprep.subr.bf16.mxu0 0
        %5044 = vmatpush1.bf16.msra.mxu0 %v5023
        %5045 = vmatprep.subr.bf16.mxu0 0
        %5046 = vmatpush1.bf16.msra.mxu0 %v5022
        %5047 = vmatprep.subr.bf16.mxu0 0
        %5048 = vmatpush1.bf16.msra.mxu0 %v5021
        %5049 = vmatprep.subr.bf16.mxu0 0
        %5050 = vmatpush2.bf16.msra.mxu0 0
        %5051 = vmatprep.subr.bf16.mxu0 0
        %5052 = vmatpush2.bf16.msra.mxu0 0
        %5053 = vmatprep.subr.bf16.mxu0 0
        %5054 = vmatpush2.bf16.msra.mxu0 0
        %5055 = vmatprep.subr.bf16.mxu0 0
        %5056 = vmatpush2.bf16.msra.mxu0 0
        %5057 = vmatprep.subr.bf16.mxu0 0
        %5058 = vmatpush2.bf16.msra.mxu0 0
        %5059 = vmatprep.subr.bf16.mxu0 0
        %5060 = vmatpush2.bf16.msra.mxu0 0
        %5061 = vmatprep.subr.bf16.mxu0 0
        %5062 = vmatpush2.bf16.msra.mxu0 0
        %5063 = vmatprep.subr.bf16.mxu0 0
        %5064 = vmatpush2.bf16.msra.mxu0 0
        %5065 = vmatprep.mubr.bf16.mxu0 0
        %5066 = vmatmul.mubr.bf16.gmra.mxu0 %v5029
        %v5067 = vpop.f32.mrf.mxu0
        %v5068 = vadd.f32 %v5003, %v5067
        %v5069 = vpop.f32.mrf.mxu0
        %v5070 = vpop.f32.mrf.mxu0
        %v5071 = vadd.f32 %v5003, %v5070
        %v5072 = vpop.f32.mrf.mxu0
        %5073 = vmatprep.mubr.bf16.mxu0 0
        %5074 = vmatmul.mubr.bf16.gmra.mxu0 %v5031
        %v5075 = vpop.f32.mrf.mxu0
        %v5076 = vadd.f32 %v5003, %v5075
        %v5077 = vpop.f32.mrf.mxu0
        %v5078 = vpop.f32.mrf.mxu0
        %v5079 = vadd.f32 %v5003, %v5078
        %v5080 = vpop.f32.mrf.mxu0
        %5081 = vdwg.mxu0
        %5082 = vst.msk [vmem:[%s640] sm:$0xff] %vm3266, %v5068
        %5083 = vst.msk [vmem:[%s640 + $0x8] sm:$0xff] %vm3266, %v5071
        %5084 = vst.msk [vmem:[%s640 + $0x10] sm:$0xff] %vm3266, %v5076
        %5085 = vst.msk [vmem:[%s640 + $0x18] sm:$0xff] %vm3266, %v5079
        %v5086 = vpack.c.bf16 %v5071, %v5068
        %v5087 = vpack.c.bf16 %v5079, %v5076
        %v5089 = vrot.slane %v5086, 4
        %5090 = vrot.lane.b32.xlu0 %v5089, 16
        %v5091 = vpop.permute.xlu0 %5090
        %5093 = vrot.lane.b32.xlu0 %v5087, 32
        %v5094 = vpop.permute.xlu0 %5093
        %v5095 = vrot.slane %v5087, 4
        %5096 = vrot.lane.b32.xlu0 %v5095, 48
        %v5097 = vpop.permute.xlu0 %5096
        %v5100 = vsel %vm3266, %v5086, %v5091
        %v5102 = vsel %vm4035, %v5100, %v5094
        %v5104 = vsel %vm4100, %v5102, %v5097
        %v5105 = vld [vmem:[%s11] sm:$0xf]
        %v5106 = vld [vmem:[%s11 + $0x4] sm:$0xf]
        %v5107 = vld [vmem:[%s11 + $0x8] sm:$0xf]
        %v5108 = vld [vmem:[%s11 + $0xc] sm:$0xf]
        %v5109 = vld [vmem:[%s11 + $0x10] sm:$0xf]
        %v5110 = vld [vmem:[%s11 + $0x14] sm:$0xf]
        %v5111 = vld [vmem:[%s11 + $0x18] sm:$0xf]
        %v5112 = vld [vmem:[%s11 + $0x1c] sm:$0xf]
        %v5113 = vld [vmem:[%s12] sm:$0x1]
        %v5115 = vlaneseq
        %v5116 = vshrl.u32 %v5115, 7
        %v5117 = vsub.s32 0, %v5116
        %v5118 = vrot.slane %v5113, %v5117
        %v5128 = vunpack.c.l.b16 %v5105
        %v5129 = vunpack.c.l.b16 %v5106
        %v5130 = vunpack.c.l.b16 %v5107
        %v5131 = vunpack.c.l.b16 %v5108
        %v5132 = vunpack.c.l.b16 %v5109
        %v5133 = vunpack.c.l.b16 %v5110
        %v5134 = vunpack.c.l.b16 %v5111
        %v5135 = vunpack.c.l.b16 %v5112
        %v5136 = vpack.c.b16 %v5129, %v5128
        %v5137 = vpack.c.b16 %v5131, %v5130
        %v5138 = vpack.c.b16 %v5133, %v5132
        %v5139 = vpack.c.b16 %v5135, %v5134
        %v5144 = vsel %vm4204, %v5104, 0
        %5146 = vmatprep.subr.bf16.mxu0 0
        %5147 = vmatpush1.bf16.msra.mxu0 0
        %5148 = vmatprep.subr.bf16.mxu0 0
        %5149 = vmatpush1.bf16.msra.mxu0 0
        %5150 = vmatprep.subr.bf16.mxu0 0
        %5151 = vmatpush1.bf16.msra.mxu0 0
        %5152 = vmatprep.subr.bf16.mxu0 0
        %5153 = vmatpush1.bf16.msra.mxu0 0
        %5154 = vmatprep.subr.bf16.mxu0 0
        %5155 = vmatpush1.bf16.msra.mxu0 %v5139
        %5156 = vmatprep.subr.bf16.mxu0 0
        %5157 = vmatpush1.bf16.msra.mxu0 %v5138
        %5158 = vmatprep.subr.bf16.mxu0 0
        %5159 = vmatpush1.bf16.msra.mxu0 %v5137
        %5160 = vmatprep.subr.bf16.mxu0 0
        %5161 = vmatpush1.bf16.msra.mxu0 %v5136
        %5162 = vmatprep.subr.bf16.mxu0 0
        %5163 = vmatpush2.bf16.msra.mxu0 0
        %5164 = vmatprep.subr.bf16.mxu0 0
        %5165 = vmatpush2.bf16.msra.mxu0 0
        %5166 = vmatprep.subr.bf16.mxu0 0
        %5167 = vmatpush2.bf16.msra.mxu0 0
        %5168 = vmatprep.subr.bf16.mxu0 0
        %5169 = vmatpush2.bf16.msra.mxu0 0
        %5170 = vmatprep.subr.bf16.mxu0 0
        %5171 = vmatpush2.bf16.msra.mxu0 0
        %5172 = vmatprep.subr.bf16.mxu0 0
        %5173 = vmatpush2.bf16.msra.mxu0 0
        %5174 = vmatprep.subr.bf16.mxu0 0
        %5175 = vmatpush2.bf16.msra.mxu0 0
        %5176 = vmatprep.subr.bf16.mxu0 0
        %5177 = vmatpush2.bf16.msra.mxu0 0
        %5178 = vmatprep.mubr.bf16.mxu0 0
        %5179 = vmatmul.mubr.bf16.gmra.mxu0 %v5144
        %v5180 = vpop.f32.mrf.mxu0
        %v5181 = vadd.f32 %v5118, %v5180
        %v5182 = vpop.f32.mrf.mxu0
        %v5183 = vpop.f32.mrf.mxu0
        %v5184 = vpop.f32.mrf.mxu0
        %5185 = vdwg.mxu0
        %5186 = vst.msk [vmem:[%s605] sm:$0xff] %vm3266, %v5181
        %s5187 = smul.u32 256, %s33
        %p5188 = scmp.lt.s32.totalorder %s5187, 1023
        %s5189 = scalar_select %p5188, %s5187, 1023
        %s5190 = smul.addr %s5189, 8
        %s5191 = scalar_lea.vmem %s13, %s5190
        %s5192 = smul.u32 256, %s33
        %p5193 = scmp.lt.s32.totalorder %s5192, 1023
        %s5194 = scalar_select %p5193, %s5192, 1023
        %s5195 = smul.addr %s5194, 8
        %s5196 = scalar_lea.vmem %s14, %s5195
        %s5197 = smul.u32 64, %s33
        %p5198 = scmp.lt.s32.totalorder %s5197, 255
        %s5199 = scalar_select %p5198, %s5197, 255
        %s5200 = smul.addr %s5199, 8
        %s5201 = scalar_lea.vmem %s15, %s5200
        %s5202 = smul.u32 16, %s33
        %p5203 = scmp.lt.s32.totalorder %s5202, 63
        %s5204 = scalar_select %p5203, %s5202, 63
        %s5205 = smul.addr %s5204, 8
        %s5206 = scalar_lea.vmem %s16, %s5205
        %s5207 = smul.u32 4, %s33
        %p5208 = scmp.lt.s32.totalorder %s5207, 15
        %s5209 = scalar_select %p5208, %s5207, 15
        %s5210 = smul.addr %s5209, 8
        %s5211 = scalar_lea.vmem %s17, %s5210
        %s5212 = sand.u32 %s449, 1
        %s5213 = scalar_lea.sflag [#allocation3], %s5212
        %s5214 = sand.u32 %s449, 1
        %s5215 = smul.addr %s5214, 8
        %s5216 = scalar_lea.vmem [#allocation2], %s5215
        // Predicated region
        $region73: #{_forward_impl.1} parent=71 // pred_check
          %p5217 = pneg %p329
        $region74: #{_forward_impl.1} parent=71 // pred_check_branch
          %5219 = sbr.rel (%p5217) target = $region76
        $region75: #{_forward_impl.1} parent=71 // pred_region
          %s5220 = smul.u32 256, %s33
        $region76: #{_forward_impl.1} parent=71 // pred_fallthru
          _
        // Predicated region
        $region77: #{_forward_impl.1} parent=71 // pred_check
          %p5221 = pneg %p355
        $region78: #{_forward_impl.1} parent=71 // pred_check_branch
          %5223 = sbr.rel (%p5221) target = $region80
        $region79: #{_forward_impl.1} parent=71 // pred_region
          %s5224 = smul.u32 256, %s33
        $region80: #{_forward_impl.1} parent=71 // pred_fallthru
          _
        // Predicated region
        $region81: #{_forward_impl.1} parent=71 // pred_check
          %p5225 = pneg %p381
        $region82: #{_forward_impl.1} parent=71 // pred_check_branch
          %5227 = sbr.rel (%p5225) target = $region84
        $region83: #{_forward_impl.1} parent=71 // pred_region
          %s5228 = smul.u32 64, %s33
        $region84: #{_forward_impl.1} parent=71 // pred_fallthru
          _
        // Predicated region
        $region85: #{_forward_impl.1} parent=71 // pred_check
          %p5229 = pneg %p407
        $region86: #{_forward_impl.1} parent=71 // pred_check_branch
          %5231 = sbr.rel (%p5229) target = $region88
        $region87: #{_forward_impl.1} parent=71 // pred_region
          %s5232 = smul.u32 16, %s33
        $region88: #{_forward_impl.1} parent=71 // pred_fallthru
          _
        // Predicated region
        $region89: #{_forward_impl.1} parent=71 // pred_check
          %p5233 = pneg %p433
        $region90: #{_forward_impl.1} parent=71 // pred_check_branch
          %5235 = sbr.rel (%p5233) target = $region92
        $region91: #{_forward_impl.1} parent=71 // pred_region
          %s5236 = smul.u32 4, %s33
        $region92: #{_forward_impl.1} parent=71 // pred_fallthru
          _
        // Predicated region
        $region93: #{_forward_impl.1} parent=71 // pred_check
          %p5237 = pneg %p459
        $region94: #{_forward_impl.1} parent=71 // pred_check_branch
          %5239 = sbr.rel (%p5237) target = $region96
        $region95: #{_forward_impl.1} parent=71 // pred_region
          %s5241 = ssub.s32 128, 128
          %5242 = vsyncadd %s5213, %s5241
          %s5243 = smul.addr %s33, 128
          %s5244 = scalar_lea.hbm %s18, %s5243
          %s5246 = sshll.u32 %s5216, 4
          %s5247 = int_to_ptr.vmem [resolvable:$true] %s5246
          %5249 = dma.vmem_to_hbm [thread:$0]  %s5247, 128, %s5244, %s5213
        $region96: #{_forward_impl.1} parent=71 // pred_fallthru
          _
      $region72: #{_forward_impl.1} parent=5 // pred_fallthru
        _
      %p5250 = scmp.le.s32.totalorder 2, %s28
      // Predicated region
      $region97: #{_forward_impl.1} parent=5 // pred_check
        %p5251 = pneg %p5250
      $region98: #{_forward_impl.1} parent=5 // pred_check_branch
        %5253 = sbr.rel (%p5251) target = $region100
      $region99: #{_forward_impl.1} parent=5 // pred_region
        %s5254 = ssub.s32 %s28, 2
        // Predicated region
        $region101: #{_forward_impl.1} parent=99 // pred_check
          %p5255 = pneg %p335
        $region102: #{_forward_impl.1} parent=99 // pred_check_branch
          %5257 = sbr.rel (%p5255) target = $region104
        $region103: #{_forward_impl.1} parent=99 // pred_region
          %s5258 = smul.u32 256, %s34
          %p5259 = scmp.lt.s32.totalorder %s5258, 1023
          %s5260 = scalar_select %p5259, %s5258, 1023
          %s5261 = smul.addr %s5260, 8
          %s5262 = scalar_lea.vmem %s13, %s5261
        $region104: #{_forward_impl.1} parent=99 // pred_fallthru
          _
        // Predicated region
        $region105: #{_forward_impl.1} parent=99 // pred_check
          %p5263 = pneg %p361
        $region106: #{_forward_impl.1} parent=99 // pred_check_branch
          %5265 = sbr.rel (%p5263) target = $region108
        $region107: #{_forward_impl.1} parent=99 // pred_region
          %s5266 = smul.u32 256, %s34
          %p5267 = scmp.lt.s32.totalorder %s5266, 1023
          %s5268 = scalar_select %p5267, %s5266, 1023
          %s5269 = smul.addr %s5268, 8
          %s5270 = scalar_lea.vmem %s14, %s5269
        $region108: #{_forward_impl.1} parent=99 // pred_fallthru
          _
        // Predicated region
        $region109: #{_forward_impl.1} parent=99 // pred_check
          %p5271 = pneg %p387
        $region110: #{_forward_impl.1} parent=99 // pred_check_branch
          %5273 = sbr.rel (%p5271) target = $region112
        $region111: #{_forward_impl.1} parent=99 // pred_region
          %s5274 = smul.u32 64, %s34
          %p5275 = scmp.lt.s32.totalorder %s5274, 255
          %s5276 = scalar_select %p5275, %s5274, 255
          %s5277 = smul.addr %s5276, 8
          %s5278 = scalar_lea.vmem %s15, %s5277
        $region112: #{_forward_impl.1} parent=99 // pred_fallthru
          _
        // Predicated region
        $region113: #{_forward_impl.1} parent=99 // pred_check
          %p5279 = pneg %p413
        $region114: #{_forward_impl.1} parent=99 // pred_check_branch
          %5281 = sbr.rel (%p5279) target = $region116
        $region115: #{_forward_impl.1} parent=99 // pred_region
          %s5282 = smul.u32 16, %s34
          %p5283 = scmp.lt.s32.totalorder %s5282, 63
          %s5284 = scalar_select %p5283, %s5282, 63
          %s5285 = smul.addr %s5284, 8
          %s5286 = scalar_lea.vmem %s16, %s5285
        $region116: #{_forward_impl.1} parent=99 // pred_fallthru
          _
        // Predicated region
        $region117: #{_forward_impl.1} parent=99 // pred_check
          %p5287 = pneg %p439
        $region118: #{_forward_impl.1} parent=99 // pred_check_branch
          %5289 = sbr.rel (%p5287) target = $region120
        $region119: #{_forward_impl.1} parent=99 // pred_region
          %s5290 = smul.u32 4, %s34
          %p5291 = scmp.lt.s32.totalorder %s5290, 15
          %s5292 = scalar_select %p5291, %s5290, 15
          %s5293 = smul.addr %s5292, 8
          %s5294 = scalar_lea.vmem %s17, %s5293
        $region120: #{_forward_impl.1} parent=99 // pred_fallthru
          _
        // Predicated region
        $region121: #{_forward_impl.1} parent=99 // pred_check
          %p5295 = pneg %p465
        $region122: #{_forward_impl.1} parent=99 // pred_check_branch
          %5297 = sbr.rel (%p5295) target = $region124
        $region123: #{_forward_impl.1} parent=99 // pred_region
          %s5298 = sand.u32 %s450, 1
          %s5299 = scalar_lea.sflag [#allocation3], %s5298
          %s5300 = sand.u32 %s450, 1
          %s5301 = smul.addr %s5300, 8
          %s5302 = scalar_lea.vmem [#allocation2], %s5301
          %5303 = dma.done %s5299, 128
        $region124: #{_forward_impl.1} parent=99 // pred_fallthru
          _
      $region100: #{_forward_impl.1} parent=5 // pred_fallthru
        _
    $region6: #{_forward_impl.1} parent=1 // loop_footer
      %s32 = sadd.s32 1, %s28
    $region7: #{_forward_impl.1} parent=1 // loop_footer_branch
      %27 = sbr.rel target = $region3
    $region8: #{_forward_impl.1} parent=1 // loop_exit
      _
    %5304 = vsyncpa [#allocation3], 1
    %s5305 = scalar_lea.sflag [#allocation3], 1
    %5306 = vsyncpa %s5305, 1

</llo_original>
